<compile_context>
chip_gen: v7x
topology: tpu7x:2x2x1
jax: 0.10.0
libtpu: 0.0.40
codegen_flags: <defaults>
</compile_context>

<pallas_src>
import functools

import jax
import jax.numpy as jnp
from jax.experimental import pallas as pl
from jax.experimental.pallas import tpu as pltpu


def _layer_norm(y, g, b, eps):
    mu = jnp.mean(y, axis=-1, keepdims=True)
    var = jnp.mean((y - mu) ** 2, axis=-1, keepdims=True)
    return (y - mu) * jax.lax.rsqrt(var + eps) * g + b


def transformer_kernel(
    x_ref,                      # (Bt, S, F_in) f32
    w_emb_ref, b_emb_ref,       # (F_in, H) bf16, (1, H) f32
    w_qkv_ref, b_qkv_ref,       # (H, 3H) bf16, (1, 3H) f32
    w_o_ref, b_o_ref,           # (H, H) bf16, (1, H) f32
    ln1_g_ref, ln1_b_ref,       # (1, H) f32
    w_ff1_ref, b_ff1_ref,       # (H, FF) bf16, (1, FF) f32
    w_ff2_ref, b_ff2_ref,       # (FF, H) bf16, (1, H) f32
    ln2_g_ref, ln2_b_ref,       # (1, H) f32
    w_fc_ref, b_fc_ref,         # (H, O) bf16, (1, O) f32
    out_ref,                    # (Bt, 1, O) f32
    *, num_heads, eps):
    bt, seq, f_in = x_ref.shape
    h_dim = w_emb_ref.shape[1]
    hd = h_dim // num_heads
    bf16, f32 = jnp.bfloat16, jnp.float32

    # ---- embedding: one (Bt*S, F_in) x (F_in, H) matmul ----
    x = x_ref[...].reshape(bt * seq, f_in).astype(bf16)
    h = jnp.dot(x, w_emb_ref[...], preferred_element_type=f32) + b_emb_ref[...]
    h3 = h.reshape(bt, seq, h_dim)

    # ---- key-padding mask (True == padded); position 0 forced unmasked ----
    # NOTE: exact float equality sum(h)==0 mirrors the PyTorch module; it is
    # numerically fragile but faithful to the reference semantics.
    # (a) key-oriented additive bias, broadcast into the attention scores.
    rs_k = jnp.sum(h3, axis=-1)                                    # (Bt, S)
    col_k = jax.lax.broadcasted_iota(jnp.int32, (bt, seq), 1)
    bias = jnp.where(jnp.logical_and(rs_k == 0.0, col_k != 0), -1e30, 0.0)
    bias3 = bias[:, None, :].astype(f32)                           # (Bt, 1, S)
    # (b) row-oriented validity for the last-valid-token gather.
    rs_q = jnp.sum(h3, axis=-1, keepdims=True)                     # (Bt, S, 1)
    row_q = jax.lax.broadcasted_iota(jnp.int32, (bt, seq, 1), 1)
    valid_q = jnp.logical_not(jnp.logical_and(rs_q == 0.0, row_q != 0))

    # ---- multi-head self-attention ----
    qkv = jnp.dot(h.astype(bf16), w_qkv_ref[...],
                  preferred_element_type=f32) + b_qkv_ref[...]     # (Bt*S, 3H)
    qkv3 = qkv.reshape(bt, seq, 3 * h_dim)
    scale = 1.0 / float(hd) ** 0.5
    qb = (qkv3[:, :, :h_dim] * scale).astype(bf16)                 # scale folded in
    kb = qkv3[:, :, h_dim:2 * h_dim].astype(bf16)
    vb = qkv3[:, :, 2 * h_dim:].astype(bf16)

    ctx_parts = []
    for hh in range(num_heads):
        sl = slice(hh * hd, (hh + 1) * hd)
        s = jnp.einsum("bqd,bkd->bqk", qb[:, :, sl], kb[:, :, sl],
                       preferred_element_type=f32) + bias3          # (Bt, S, S)
        m = jnp.max(s, axis=-1, keepdims=True)
        e = jnp.exp(s - m)
        p = e * pl.reciprocal(jnp.sum(e, axis=-1, keepdims=True), approx=True)
        ctx_parts.append(
            jnp.einsum("bqk,bkd->bqd", p.astype(bf16), vb[:, :, sl],
                       preferred_element_type=f32))                 # (Bt, S, hd)
    ctx = jnp.concatenate(ctx_parts, axis=-1).reshape(bt * seq, h_dim)
    # single full out-projection (K = H = 128) instead of 8 K=16 matmuls
    attn = jnp.dot(ctx.astype(bf16), w_o_ref[...],
                   preferred_element_type=f32) + b_o_ref[...]

    # ---- post-norm residual blocks ----
    h1 = _layer_norm(h + attn, ln1_g_ref[...], ln1_b_ref[...], eps)

    ff = jnp.dot(h1.astype(bf16), w_ff1_ref[...],
                 preferred_element_type=f32) + b_ff1_ref[...]
    ff = jnp.maximum(ff, 0.0)
    ff = jnp.dot(ff.astype(bf16), w_ff2_ref[...],
                 preferred_element_type=f32) + b_ff2_ref[...]
    h2 = _layer_norm(h1 + ff, ln2_g_ref[...], ln2_b_ref[...], eps)

    # ---- select last non-padded timestep per batch element ----
    last_idx = jnp.max(jnp.where(valid_q, row_q, -1), axis=1, keepdims=True)  # (Bt,1,1)
    onehot = (row_q == last_idx).astype(f32)                                  # (Bt,S,1)
    last = jnp.sum(h2.reshape(bt, seq, h_dim) * onehot, axis=1)               # (Bt, H)

    # ---- final projection ----
    out = jnp.dot(last.astype(bf16), w_fc_ref[...],
                  preferred_element_type=f32) + b_fc_ref[...]                 # (Bt, O)
    out_ref[...] = out.reshape(bt, 1, -1)


def transformer_forward(x, params, *, num_heads=8, eps=1e-5, block_b=None):
    B, S, F_in = x.shape
    H = params["w_emb"].shape[1]
    FF = params["w_ff1"].shape[1]
    O = params["w_fc"].shape[1]
    bf16 = jnp.bfloat16

    if block_b is None:
        block_b = min(B, 16)
    nb = pl.cdiv(B, block_b)
    Bp = nb * block_b
    if Bp != B:                       # pad batch to a multiple of the block
        x = jnp.pad(x, ((0, Bp - B), (0, 0), (0, 0)))

    kernel = functools.partial(transformer_kernel, num_heads=num_heads, eps=eps)
    full2 = lambda b: (0, 0)          # whole-array weight blocks (stay resident)

    out3 = pl.pallas_call(
        kernel,
        out_shape=jax.ShapeDtypeStruct((Bp, 1, O), jnp.float32),
        grid_spec=pltpu.PrefetchScalarGridSpec(
            num_scalar_prefetch=0,
            grid=(nb,),
            in_specs=[
                pl.BlockSpec((block_b, S, F_in), lambda b: (b, 0, 0)),
                pl.BlockSpec((F_in, H), full2), pl.BlockSpec((1, H), full2),
                pl.BlockSpec((H, 3 * H), full2), pl.BlockSpec((1, 3 * H), full2),
                pl.BlockSpec((H, H), full2), pl.BlockSpec((1, H), full2),
                pl.BlockSpec((1, H), full2), pl.BlockSpec((1, H), full2),
                pl.BlockSpec((H, FF), full2), pl.BlockSpec((1, FF), full2),
                pl.BlockSpec((FF, H), full2), pl.BlockSpec((1, H), full2),
                pl.BlockSpec((1, H), full2), pl.BlockSpec((1, H), full2),
                pl.BlockSpec((H, O), full2), pl.BlockSpec((1, O), full2),
            ],
            out_specs=pl.BlockSpec((block_b, 1, O), lambda b: (b, 0, 0)),
        ),
        compiler_params=pltpu.CompilerParams(
            dimension_semantics=("parallel",)),
    )(x,
      params["w_emb"].astype(bf16), params["b_emb"],
      params["w_qkv"].astype(bf16), params["b_qkv"],
      params["w_o"].astype(bf16), params["b_o"],
      params["ln1_g"], params["ln1_b"],
      params["w_ff1"].astype(bf16), params["b_ff1"],
      params["w_ff2"].astype(bf16), params["b_ff2"],
      params["ln2_g"], params["ln2_b"],
      params["w_fc"].astype(bf16), params["b_fc"])
    return out3.reshape(Bp, O)[:B]


def reference_forward(x, params, *, num_heads=8, eps=1e-5):
    """Pure-JAX reference mirroring the PyTorch forward (eval mode), using the
    same bf16-operand / f32-accumulate matmul precision as the kernel."""
    bf16, f32 = jnp.bfloat16, jnp.float32
    mm = lambda a, w: jnp.dot(a.astype(bf16), w.astype(bf16),
                              preferred_element_type=f32)
    h = mm(x, params["w_emb"]) + params["b_emb"][0]
    B, S, H = h.shape
    hd = H // num_heads
    mask = (h.sum(-1) == 0)
    mask = mask.at[:, 0].set(False)

    qkv = mm(h, params["w_qkv"]) + params["b_qkv"][0]
    q, k, v = jnp.split(qkv, 3, axis=-1)
    scale = 1.0 / float(hd) ** 0.5
    split = lambda t: t.reshape(B, S, num_heads, hd).transpose(0, 2, 1, 3)
    qh = split((q * scale).astype(bf16))
    kh, vh = split(k.astype(bf16)), split(v.astype(bf16))
    scores = jnp.einsum("bhqd,bhkd->bhqk", qh, kh, preferred_element_type=f32)
    scores = scores + jnp.where(mask, -1e30, 0.0)[:, None, None, :]
    m = scores.max(-1, keepdims=True)
    e = jnp.exp(scores - m)
    p = e / e.sum(-1, keepdims=True)
    ctx = jnp.einsum("bhqk,bhkd->bhqd", p.astype(bf16), vh,
                     preferred_element_type=f32)
    ctx = ctx.transpose(0, 2, 1, 3).reshape(B, S, H)
    attn = mm(ctx, params["w_o"]) + params["b_o"][0]

    def ln(y, g, b):
        mu = y.mean(-1, keepdims=True)
        var = ((y - mu) ** 2).mean(-1, keepdims=True)
        return (y - mu) * jax.lax.rsqrt(var + eps) * g[0] + b[0]

    h1 = ln(h + attn, params["ln1_g"], params["ln1_b"])
    ff = jnp.maximum(mm(h1, params["w_ff1"]) + params["b_ff1"][0], 0.0)
    ff = mm(ff, params["w_ff2"]) + params["b_ff2"][0]
    h2 = ln(h1 + ff, params["ln2_g"], params["ln2_b"])

    valid = ~mask
    idxs = jnp.arange(S)[None, :]
    last_idx = jnp.max(jnp.where(valid, idxs, -1), axis=1)
    last = h2[jnp.arange(B), last_idx]
    return mm(last, params["w_fc"]) + params["b_fc"][0]


def make_params(key, input_size, hidden_size, output_size, dim_ff=2048):
    ks = jax.random.split(key, 10)
    n = lambda k, shape, s=0.02: (s * jax.random.normal(k, shape)).astype(jnp.float32)
    H = hidden_size
    return {
        "w_emb": n(ks[0], (input_size, H)), "b_emb": n(ks[1], (1, H)),
        "w_qkv": n(ks[2], (H, 3 * H)),      "b_qkv": n(ks[3], (1, 3 * H)),
        "w_o":   n(ks[4], (H, H)),          "b_o":   n(ks[5], (1, H)),
        "ln1_g": jnp.ones((1, H), jnp.float32), "ln1_b": jnp.zeros((1, H), jnp.float32),
        "w_ff1": n(ks[6], (H, dim_ff)),     "b_ff1": n(ks[7], (1, dim_ff)),
        "w_ff2": n(ks[8], (dim_ff, H)),     "b_ff2": jnp.zeros((1, H), jnp.float32),
        "ln2_g": jnp.ones((1, H), jnp.float32), "ln2_b": jnp.zeros((1, H), jnp.float32),
        "w_fc":  n(ks[9], (H, output_size)), "b_fc": jnp.zeros((1, output_size), jnp.float32),
    }


if __name__ == "__main__":
    # Small shapes consistent with the module:
    #   batch=4, seq=8, input_size=16, hidden_size=128 (divisible by 8 heads),
    #   output_size=8, dim_feedforward=2048 (PyTorch default), num_layers=1.
    # block_b=2 -> grid=(2,), so both v7x TensorCores get a step while the
    # matmuls still see M = block_b * S rows.
    B, S, F_IN, HIDDEN, OUT = 4, 8, 16, 128, 8
    NUM_HEADS = 8

    key = jax.random.PRNGKey(0)
    k_x, k_p = jax.random.split(key)
    x = jax.random.normal(k_x, (B, S, F_IN), dtype=jnp.float32)
    params = make_params(k_p, F_IN, HIDDEN, OUT)

    out = transformer_forward(x, params, num_heads=NUM_HEADS, block_b=2)
    out = jax.block_until_ready(out)

    ref = reference_forward(x, params, num_heads=NUM_HEADS)
    assert out.shape == (B, OUT)
    assert jnp.allclose(out, ref, rtol=2e-2, atol=2e-2), (out, ref)

    # TODO(synk): dropout layers are identity here (eval-mode semantics); training-mode
    # dropout is not implemented.
    print("KERNEL_OK")
</pallas_src>

<mosaic_0001>
module attributes {stable_mosaic.version = 11 : i64} {
  func.func @transformer_kernel(%arg0: i32, %arg1: memref<2x8x16xf32, #tpu.memory_space<vmem>>, %arg2: memref<16x128xbf16, #tpu.memory_space<vmem>>, %arg3: memref<1x128xf32, #tpu.memory_space<vmem>>, %arg4: memref<128x384xbf16, #tpu.memory_space<vmem>>, %arg5: memref<1x384xf32, #tpu.memory_space<vmem>>, %arg6: memref<128x128xbf16, #tpu.memory_space<vmem>>, %arg7: memref<1x128xf32, #tpu.memory_space<vmem>>, %arg8: memref<1x128xf32, #tpu.memory_space<vmem>>, %arg9: memref<1x128xf32, #tpu.memory_space<vmem>>, %arg10: memref<128x2048xbf16, #tpu.memory_space<vmem>>, %arg11: memref<1x2048xf32, #tpu.memory_space<vmem>>, %arg12: memref<2048x128xbf16, #tpu.memory_space<vmem>>, %arg13: memref<1x128xf32, #tpu.memory_space<vmem>>, %arg14: memref<1x128xf32, #tpu.memory_space<vmem>>, %arg15: memref<1x128xf32, #tpu.memory_space<vmem>>, %arg16: memref<128x8xbf16, #tpu.memory_space<vmem>>, %arg17: memref<1x8xf32, #tpu.memory_space<vmem>>, %arg18: memref<2x1x8xf32, #tpu.memory_space<vmem>>) attributes {dimension_semantics = [#tpu.dimension_semantics<parallel>], iteration_bounds = array<i64: 2>, scalar_prefetch = 0 : i64, scratch_operands = 0 : i64, tpu.core_type = #tpu.core_type<tc>, window_params = [{transform_indices = @transform_0, window_bounds = array<i64: 2, 8, 16>}, {pipeline_mode = #tpu.pipeline_mode<synchronous>, transform_indices = @transform_1, window_bounds = array<i64: 16, 128>}, {pipeline_mode = #tpu.pipeline_mode<synchronous>, transform_indices = @transform_2, window_bounds = array<i64: 1, 128>}, {pipeline_mode = #tpu.pipeline_mode<synchronous>, transform_indices = @transform_3, window_bounds = array<i64: 128, 384>}, {pipeline_mode = #tpu.pipeline_mode<synchronous>, transform_indices = @transform_4, window_bounds = array<i64: 1, 384>}, {pipeline_mode = #tpu.pipeline_mode<synchronous>, transform_indices = @transform_5, window_bounds = array<i64: 128, 128>}, {pipeline_mode = #tpu.pipeline_mode<synchronous>, transform_indices = @transform_6, window_bounds = array<i64: 1, 128>}, {pipeline_mode = #tpu.pipeline_mode<synchronous>, transform_indices = @transform_7, window_bounds = array<i64: 1, 128>}, {pipeline_mode = #tpu.pipeline_mode<synchronous>, transform_indices = @transform_8, window_bounds = array<i64: 1, 128>}, {pipeline_mode = #tpu.pipeline_mode<synchronous>, transform_indices = @transform_9, window_bounds = array<i64: 128, 2048>}, {pipeline_mode = #tpu.pipeline_mode<synchronous>, transform_indices = @transform_10, window_bounds = array<i64: 1, 2048>}, {pipeline_mode = #tpu.pipeline_mode<synchronous>, transform_indices = @transform_11, window_bounds = array<i64: 2048, 128>}, {pipeline_mode = #tpu.pipeline_mode<synchronous>, transform_indices = @transform_12, window_bounds = array<i64: 1, 128>}, {pipeline_mode = #tpu.pipeline_mode<synchronous>, transform_indices = @transform_13, window_bounds = array<i64: 1, 128>}, {pipeline_mode = #tpu.pipeline_mode<synchronous>, transform_indices = @transform_14, window_bounds = array<i64: 1, 128>}, {pipeline_mode = #tpu.pipeline_mode<synchronous>, transform_indices = @transform_15, window_bounds = array<i64: 128, 8>}, {pipeline_mode = #tpu.pipeline_mode<synchronous>, transform_indices = @transform_16, window_bounds = array<i64: 1, 8>}, {transform_indices = @transform_17, window_bounds = array<i64: 2, 1, 8>}]} {
    %c0 = arith.constant 0 : index
    %c0_0 = arith.constant 0 : index
    %c0_1 = arith.constant 0 : index
    %0 = vector.load %arg1[%c0, %c0_0, %c0_1] : memref<2x8x16xf32, #tpu.memory_space<vmem>>, vector<2x8x16xf32>
    %1 = vector.shape_cast %0 : vector<2x8x16xf32> to vector<16x16xf32>
    %2 = arith.truncf %1 : vector<16x16xf32> to vector<16x16xbf16>
    %c0_2 = arith.constant 0 : index
    %c0_3 = arith.constant 0 : index
    %3 = vector.load %arg2[%c0_2, %c0_3] : memref<16x128xbf16, #tpu.memory_space<vmem>>, vector<16x128xbf16>
    %cst = arith.constant dense<0.000000e+00> : vector<16x128xf32>
    %4 = tpu.matmul %2, %3, %cst {dimension_numbers = #tpu.dot_dimension_numbers<[1], [0], [0], [1], [0, 0, 1, 1], [], []>} : vector<16x16xbf16>, vector<16x128xbf16>, vector<16x128xf32> -> vector<16x128xf32>
    %c0_4 = arith.constant 0 : index
    %c0_5 = arith.constant 0 : index
    %5 = vector.load %arg3[%c0_4, %c0_5] : memref<1x128xf32, #tpu.memory_space<vmem>>, vector<1x128xf32>
    %6 = vector.broadcast %5 : vector<1x128xf32> to vector<16x128xf32>
    %7 = arith.addf %4, %6 : vector<16x128xf32>
    %8 = vector.shape_cast %7 : vector<16x128xf32> to vector<2x8x128xf32>
    %cst_6 = arith.constant dense<0.000000e+00> : vector<2x8xf32>
    %9 = vector.multi_reduction <add>, %8, %cst_6 [2] : vector<2x8x128xf32> to vector<2x8xf32>
    %10 = tpu.iota {dimensions = array<i32: 1>} : vector<2x8xi32>
    %cst_7 = arith.constant 0.000000e+00 : f32
    %11 = vector.broadcast %cst_7 : f32 to vector<2x8xf32>
    %12 = arith.cmpf oeq, %9, %11 : vector<2x8xf32>
    %c0_i32 = arith.constant 0 : i32
    %13 = vector.broadcast %c0_i32 : i32 to vector<2x8xi32>
    %14 = arith.cmpi ne, %10, %13 : vector<2x8xi32>
    %15 = arith.andi %12, %14 : vector<2x8xi1>
    %cst_8 = arith.constant -1.000000e+30 : f32
    %cst_9 = arith.constant 0.000000e+00 : f32
    %16 = vector.broadcast %cst_8 : f32 to vector<2x8xf32>
    %17 = vector.broadcast %cst_9 : f32 to vector<2x8xf32>
    %18 = arith.select %15, %16, %17 : vector<2x8xi1>, vector<2x8xf32>
    %19 = vector.shape_cast %18 : vector<2x8xf32> to vector<2x1x8xf32>
    %cst_10 = arith.constant dense<0.000000e+00> : vector<2x8xf32>
    %20 = vector.multi_reduction <add>, %8, %cst_10 [2] : vector<2x8x128xf32> to vector<2x8xf32>
    %21 = vector.shape_cast %20 : vector<2x8xf32> to vector<2x8x1xf32>
    %22 = tpu.iota {dimensions = array<i32: 1>} : vector<2x8x1xi32>
    %cst_11 = arith.constant 0.000000e+00 : f32
    %23 = vector.broadcast %cst_11 : f32 to vector<2x8x1xf32>
    %24 = arith.cmpf oeq, %21, %23 : vector<2x8x1xf32>
    %c0_i32_12 = arith.constant 0 : i32
    %25 = vector.broadcast %c0_i32_12 : i32 to vector<2x8x1xi32>
    %26 = arith.cmpi ne, %22, %25 : vector<2x8x1xi32>
    %27 = arith.andi %24, %26 : vector<2x8x1xi1>
    %cst_13 = arith.constant dense<true> : vector<2x8x1xi1>
    %28 = arith.xori %27, %cst_13 : vector<2x8x1xi1>
    %29 = arith.truncf %7 : vector<16x128xf32> to vector<16x128xbf16>
    %c0_14 = arith.constant 0 : index
    %c0_15 = arith.constant 0 : index
    %30 = vector.load %arg4[%c0_14, %c0_15] : memref<128x384xbf16, #tpu.memory_space<vmem>>, vector<128x384xbf16>
    %cst_16 = arith.constant dense<0.000000e+00> : vector<16x384xf32>
    %31 = tpu.matmul %29, %30, %cst_16 {dimension_numbers = #tpu.dot_dimension_numbers<[1], [0], [0], [1], [0, 0, 1, 1], [], []>} : vector<16x128xbf16>, vector<128x384xbf16>, vector<16x384xf32> -> vector<16x384xf32>
    %c0_17 = arith.constant 0 : index
    %c0_18 = arith.constant 0 : index
    %32 = vector.load %arg5[%c0_17, %c0_18] : memref<1x384xf32, #tpu.memory_space<vmem>>, vector<1x384xf32>
    %33 = vector.broadcast %32 : vector<1x384xf32> to vector<16x384xf32>
    %34 = arith.addf %31, %33 : vector<16x384xf32>
    %35 = vector.shape_cast %34 : vector<16x384xf32> to vector<2x8x384xf32>
    %36 = vector.extract_strided_slice %35 {offsets = [0, 0, 0], sizes = [2, 8, 128], strides = [1, 1, 1]} : vector<2x8x384xf32> to vector<2x8x128xf32>
    %cst_19 = arith.constant 2.500000e-01 : f32
    %37 = vector.broadcast %cst_19 : f32 to vector<2x8x128xf32>
    %38 = arith.mulf %36, %37 : vector<2x8x128xf32>
    %39 = arith.truncf %38 : vector<2x8x128xf32> to vector<2x8x128xbf16>
    %40 = vector.extract_strided_slice %35 {offsets = [0, 0, 128], sizes = [2, 8, 128], strides = [1, 1, 1]} : vector<2x8x384xf32> to vector<2x8x128xf32>
    %41 = arith.truncf %40 : vector<2x8x128xf32> to vector<2x8x128xbf16>
    %42 = vector.extract_strided_slice %35 {offsets = [0, 0, 256], sizes = [2, 8, 128], strides = [1, 1, 1]} : vector<2x8x384xf32> to vector<2x8x128xf32>
    %43 = arith.truncf %42 : vector<2x8x128xf32> to vector<2x8x128xbf16>
    %44 = vector.extract_strided_slice %39 {offsets = [0, 0, 0], sizes = [2, 8, 16], strides = [1, 1, 1]} : vector<2x8x128xbf16> to vector<2x8x16xbf16>
    %45 = vector.extract_strided_slice %41 {offsets = [0, 0, 0], sizes = [2, 8, 16], strides = [1, 1, 1]} : vector<2x8x128xbf16> to vector<2x8x16xbf16>
    "tpu.trace_start"() <{level = 10 : i32, message = "bqd,bkd->bqk"}> : () -> ()
    %cst_20 = arith.constant dense<0.000000e+00> : vector<2x8x8xf32>
    %46 = tpu.matmul %44, %45, %cst_20 {dimension_numbers = #tpu.dot_dimension_numbers<[2], [2], [1], [1], [0, 0, 0, 1, 1, 1], [0], [0]>} : vector<2x8x16xbf16>, vector<2x8x16xbf16>, vector<2x8x8xf32> -> vector<2x8x8xf32>
    "tpu.trace_stop"() : () -> ()
    %47 = vector.broadcast %19 : vector<2x1x8xf32> to vector<2x8x8xf32>
    %48 = arith.addf %46, %47 : vector<2x8x8xf32>
    %cst_21 = arith.constant dense<0xFF800000> : vector<2x8xf32>
    %49 = vector.multi_reduction <maximumf>, %48, %cst_21 [2] : vector<2x8x8xf32> to vector<2x8xf32>
    %50 = vector.shape_cast %49 : vector<2x8xf32> to vector<2x8x1xf32>
    %51 = vector.broadcast %50 : vector<2x8x1xf32> to vector<2x8x8xf32>
    %52 = arith.subf %48, %51 : vector<2x8x8xf32>
    %53 = math.exp %52 : vector<2x8x8xf32>
    %cst_22 = arith.constant dense<0.000000e+00> : vector<2x8xf32>
    %54 = vector.multi_reduction <add>, %53, %cst_22 [2] : vector<2x8x8xf32> to vector<2x8xf32>
    %55 = vector.shape_cast %54 : vector<2x8xf32> to vector<2x8x1xf32>
    %56 = tpu.reciprocal %55 {approx = true} : vector<2x8x1xf32> -> vector<2x8x1xf32>
    %57 = vector.broadcast %56 : vector<2x8x1xf32> to vector<2x8x8xf32>
    %58 = arith.mulf %53, %57 : vector<2x8x8xf32>
    %59 = arith.truncf %58 : vector<2x8x8xf32> to vector<2x8x8xbf16>
    %60 = vector.extract_strided_slice %43 {offsets = [0, 0, 0], sizes = [2, 8, 16], strides = [1, 1, 1]} : vector<2x8x128xbf16> to vector<2x8x16xbf16>
    "tpu.trace_start"() <{level = 10 : i32, message = "bqk,bkd->bqd"}> : () -> ()
    %cst_23 = arith.constant dense<0.000000e+00> : vector<2x8x16xf32>
    %61 = tpu.matmul %59, %60, %cst_23 {dimension_numbers = #tpu.dot_dimension_numbers<[2], [1], [1], [2], [0, 0, 0, 1, 1, 2], [0], [0]>} : vector<2x8x8xbf16>, vector<2x8x16xbf16>, vector<2x8x16xf32> -> vector<2x8x16xf32>
    "tpu.trace_stop"() : () -> ()
    %62 = vector.extract_strided_slice %39 {offsets = [0, 0, 16], sizes = [2, 8, 16], strides = [1, 1, 1]} : vector<2x8x128xbf16> to vector<2x8x16xbf16>
    %63 = vector.extract_strided_slice %41 {offsets = [0, 0, 16], sizes = [2, 8, 16], strides = [1, 1, 1]} : vector<2x8x128xbf16> to vector<2x8x16xbf16>
    "tpu.trace_start"() <{level = 10 : i32, message = "bqd,bkd->bqk"}> : () -> ()
    %cst_24 = arith.constant dense<0.000000e+00> : vector<2x8x8xf32>
    %64 = tpu.matmul %62, %63, %cst_24 {dimension_numbers = #tpu.dot_dimension_numbers<[2], [2], [1], [1], [0, 0, 0, 1, 1, 1], [0], [0]>} : vector<2x8x16xbf16>, vector<2x8x16xbf16>, vector<2x8x8xf32> -> vector<2x8x8xf32>
    "tpu.trace_stop"() : () -> ()
    %65 = vector.broadcast %19 : vector<2x1x8xf32> to vector<2x8x8xf32>
    %66 = arith.addf %64, %65 : vector<2x8x8xf32>
    %cst_25 = arith.constant dense<0xFF800000> : vector<2x8xf32>
    %67 = vector.multi_reduction <maximumf>, %66, %cst_25 [2] : vector<2x8x8xf32> to vector<2x8xf32>
    %68 = vector.shape_cast %67 : vector<2x8xf32> to vector<2x8x1xf32>
    %69 = vector.broadcast %68 : vector<2x8x1xf32> to vector<2x8x8xf32>
    %70 = arith.subf %66, %69 : vector<2x8x8xf32>
    %71 = math.exp %70 : vector<2x8x8xf32>
    %cst_26 = arith.constant dense<0.000000e+00> : vector<2x8xf32>
    %72 = vector.multi_reduction <add>, %71, %cst_26 [2] : vector<2x8x8xf32> to vector<2x8xf32>
    %73 = vector.shape_cast %72 : vector<2x8xf32> to vector<2x8x1xf32>
    %74 = tpu.reciprocal %73 {approx = true} : vector<2x8x1xf32> -> vector<2x8x1xf32>
    %75 = vector.broadcast %74 : vector<2x8x1xf32> to vector<2x8x8xf32>
    %76 = arith.mulf %71, %75 : vector<2x8x8xf32>
    %77 = arith.truncf %76 : vector<2x8x8xf32> to vector<2x8x8xbf16>
    %78 = vector.extract_strided_slice %43 {offsets = [0, 0, 16], sizes = [2, 8, 16], strides = [1, 1, 1]} : vector<2x8x128xbf16> to vector<2x8x16xbf16>
    "tpu.trace_start"() <{level = 10 : i32, message = "bqk,bkd->bqd"}> : () -> ()
    %cst_27 = arith.constant dense<0.000000e+00> : vector<2x8x16xf32>
    %79 = tpu.matmul %77, %78, %cst_27 {dimension_numbers = #tpu.dot_dimension_numbers<[2], [1], [1], [2], [0, 0, 0, 1, 1, 2], [0], [0]>} : vector<2x8x8xbf16>, vector<2x8x16xbf16>, vector<2x8x16xf32> -> vector<2x8x16xf32>
    "tpu.trace_stop"() : () -> ()
    %80 = vector.extract_strided_slice %39 {offsets = [0, 0, 32], sizes = [2, 8, 16], strides = [1, 1, 1]} : vector<2x8x128xbf16> to vector<2x8x16xbf16>
    %81 = vector.extract_strided_slice %41 {offsets = [0, 0, 32], sizes = [2, 8, 16], strides = [1, 1, 1]} : vector<2x8x128xbf16> to vector<2x8x16xbf16>
    "tpu.trace_start"() <{level = 10 : i32, message = "bqd,bkd->bqk"}> : () -> ()
    %cst_28 = arith.constant dense<0.000000e+00> : vector<2x8x8xf32>
    %82 = tpu.matmul %80, %81, %cst_28 {dimension_numbers = #tpu.dot_dimension_numbers<[2], [2], [1], [1], [0, 0, 0, 1, 1, 1], [0], [0]>} : vector<2x8x16xbf16>, vector<2x8x16xbf16>, vector<2x8x8xf32> -> vector<2x8x8xf32>
    "tpu.trace_stop"() : () -> ()
    %83 = vector.broadcast %19 : vector<2x1x8xf32> to vector<2x8x8xf32>
    %84 = arith.addf %82, %83 : vector<2x8x8xf32>
    %cst_29 = arith.constant dense<0xFF800000> : vector<2x8xf32>
    %85 = vector.multi_reduction <maximumf>, %84, %cst_29 [2] : vector<2x8x8xf32> to vector<2x8xf32>
    %86 = vector.shape_cast %85 : vector<2x8xf32> to vector<2x8x1xf32>
    %87 = vector.broadcast %86 : vector<2x8x1xf32> to vector<2x8x8xf32>
    %88 = arith.subf %84, %87 : vector<2x8x8xf32>
    %89 = math.exp %88 : vector<2x8x8xf32>
    %cst_30 = arith.constant dense<0.000000e+00> : vector<2x8xf32>
    %90 = vector.multi_reduction <add>, %89, %cst_30 [2] : vector<2x8x8xf32> to vector<2x8xf32>
    %91 = vector.shape_cast %90 : vector<2x8xf32> to vector<2x8x1xf32>
    %92 = tpu.reciprocal %91 {approx = true} : vector<2x8x1xf32> -> vector<2x8x1xf32>
    %93 = vector.broadcast %92 : vector<2x8x1xf32> to vector<2x8x8xf32>
    %94 = arith.mulf %89, %93 : vector<2x8x8xf32>
    %95 = arith.truncf %94 : vector<2x8x8xf32> to vector<2x8x8xbf16>
    %96 = vector.extract_strided_slice %43 {offsets = [0, 0, 32], sizes = [2, 8, 16], strides = [1, 1, 1]} : vector<2x8x128xbf16> to vector<2x8x16xbf16>
    "tpu.trace_start"() <{level = 10 : i32, message = "bqk,bkd->bqd"}> : () -> ()
    %cst_31 = arith.constant dense<0.000000e+00> : vector<2x8x16xf32>
    %97 = tpu.matmul %95, %96, %cst_31 {dimension_numbers = #tpu.dot_dimension_numbers<[2], [1], [1], [2], [0, 0, 0, 1, 1, 2], [0], [0]>} : vector<2x8x8xbf16>, vector<2x8x16xbf16>, vector<2x8x16xf32> -> vector<2x8x16xf32>
    "tpu.trace_stop"() : () -> ()
    %98 = vector.extract_strided_slice %39 {offsets = [0, 0, 48], sizes = [2, 8, 16], strides = [1, 1, 1]} : vector<2x8x128xbf16> to vector<2x8x16xbf16>
    %99 = vector.extract_strided_slice %41 {offsets = [0, 0, 48], sizes = [2, 8, 16], strides = [1, 1, 1]} : vector<2x8x128xbf16> to vector<2x8x16xbf16>
    "tpu.trace_start"() <{level = 10 : i32, message = "bqd,bkd->bqk"}> : () -> ()
    %cst_32 = arith.constant dense<0.000000e+00> : vector<2x8x8xf32>
    %100 = tpu.matmul %98, %99, %cst_32 {dimension_numbers = #tpu.dot_dimension_numbers<[2], [2], [1], [1], [0, 0, 0, 1, 1, 1], [0], [0]>} : vector<2x8x16xbf16>, vector<2x8x16xbf16>, vector<2x8x8xf32> -> vector<2x8x8xf32>
    "tpu.trace_stop"() : () -> ()
    %101 = vector.broadcast %19 : vector<2x1x8xf32> to vector<2x8x8xf32>
    %102 = arith.addf %100, %101 : vector<2x8x8xf32>
    %cst_33 = arith.constant dense<0xFF800000> : vector<2x8xf32>
    %103 = vector.multi_reduction <maximumf>, %102, %cst_33 [2] : vector<2x8x8xf32> to vector<2x8xf32>
    %104 = vector.shape_cast %103 : vector<2x8xf32> to vector<2x8x1xf32>
    %105 = vector.broadcast %104 : vector<2x8x1xf32> to vector<2x8x8xf32>
    %106 = arith.subf %102, %105 : vector<2x8x8xf32>
    %107 = math.exp %106 : vector<2x8x8xf32>
    %cst_34 = arith.constant dense<0.000000e+00> : vector<2x8xf32>
    %108 = vector.multi_reduction <add>, %107, %cst_34 [2] : vector<2x8x8xf32> to vector<2x8xf32>
    %109 = vector.shape_cast %108 : vector<2x8xf32> to vector<2x8x1xf32>
    %110 = tpu.reciprocal %109 {approx = true} : vector<2x8x1xf32> -> vector<2x8x1xf32>
    %111 = vector.broadcast %110 : vector<2x8x1xf32> to vector<2x8x8xf32>
    %112 = arith.mulf %107, %111 : vector<2x8x8xf32>
    %113 = arith.truncf %112 : vector<2x8x8xf32> to vector<2x8x8xbf16>
    %114 = vector.extract_strided_slice %43 {offsets = [0, 0, 48], sizes = [2, 8, 16], strides = [1, 1, 1]} : vector<2x8x128xbf16> to vector<2x8x16xbf16>
    "tpu.trace_start"() <{level = 10 : i32, message = "bqk,bkd->bqd"}> : () -> ()
    %cst_35 = arith.constant dense<0.000000e+00> : vector<2x8x16xf32>
    %115 = tpu.matmul %113, %114, %cst_35 {dimension_numbers = #tpu.dot_dimension_numbers<[2], [1], [1], [2], [0, 0, 0, 1, 1, 2], [0], [0]>} : vector<2x8x8xbf16>, vector<2x8x16xbf16>, vector<2x8x16xf32> -> vector<2x8x16xf32>
    "tpu.trace_stop"() : () -> ()
    %116 = vector.extract_strided_slice %39 {offsets = [0, 0, 64], sizes = [2, 8, 16], strides = [1, 1, 1]} : vector<2x8x128xbf16> to vector<2x8x16xbf16>
    %117 = vector.extract_strided_slice %41 {offsets = [0, 0, 64], sizes = [2, 8, 16], strides = [1, 1, 1]} : vector<2x8x128xbf16> to vector<2x8x16xbf16>
    "tpu.trace_start"() <{level = 10 : i32, message = "bqd,bkd->bqk"}> : () -> ()
    %cst_36 = arith.constant dense<0.000000e+00> : vector<2x8x8xf32>
    %118 = tpu.matmul %116, %117, %cst_36 {dimension_numbers = #tpu.dot_dimension_numbers<[2], [2], [1], [1], [0, 0, 0, 1, 1, 1], [0], [0]>} : vector<2x8x16xbf16>, vector<2x8x16xbf16>, vector<2x8x8xf32> -> vector<2x8x8xf32>
    "tpu.trace_stop"() : () -> ()
    %119 = vector.broadcast %19 : vector<2x1x8xf32> to vector<2x8x8xf32>
    %120 = arith.addf %118, %119 : vector<2x8x8xf32>
    %cst_37 = arith.constant dense<0xFF800000> : vector<2x8xf32>
    %121 = vector.multi_reduction <maximumf>, %120, %cst_37 [2] : vector<2x8x8xf32> to vector<2x8xf32>
    %122 = vector.shape_cast %121 : vector<2x8xf32> to vector<2x8x1xf32>
    %123 = vector.broadcast %122 : vector<2x8x1xf32> to vector<2x8x8xf32>
    %124 = arith.subf %120, %123 : vector<2x8x8xf32>
    %125 = math.exp %124 : vector<2x8x8xf32>
    %cst_38 = arith.constant dense<0.000000e+00> : vector<2x8xf32>
    %126 = vector.multi_reduction <add>, %125, %cst_38 [2] : vector<2x8x8xf32> to vector<2x8xf32>
    %127 = vector.shape_cast %126 : vector<2x8xf32> to vector<2x8x1xf32>
    %128 = tpu.reciprocal %127 {approx = true} : vector<2x8x1xf32> -> vector<2x8x1xf32>
    %129 = vector.broadcast %128 : vector<2x8x1xf32> to vector<2x8x8xf32>
    %130 = arith.mulf %125, %129 : vector<2x8x8xf32>
    %131 = arith.truncf %130 : vector<2x8x8xf32> to vector<2x8x8xbf16>
    %132 = vector.extract_strided_slice %43 {offsets = [0, 0, 64], sizes = [2, 8, 16], strides = [1, 1, 1]} : vector<2x8x128xbf16> to vector<2x8x16xbf16>
    "tpu.trace_start"() <{level = 10 : i32, message = "bqk,bkd->bqd"}> : () -> ()
    %cst_39 = arith.constant dense<0.000000e+00> : vector<2x8x16xf32>
    %133 = tpu.matmul %131, %132, %cst_39 {dimension_numbers = #tpu.dot_dimension_numbers<[2], [1], [1], [2], [0, 0, 0, 1, 1, 2], [0], [0]>} : vector<2x8x8xbf16>, vector<2x8x16xbf16>, vector<2x8x16xf32> -> vector<2x8x16xf32>
    "tpu.trace_stop"() : () -> ()
    %134 = vector.extract_strided_slice %39 {offsets = [0, 0, 80], sizes = [2, 8, 16], strides = [1, 1, 1]} : vector<2x8x128xbf16> to vector<2x8x16xbf16>
    %135 = vector.extract_strided_slice %41 {offsets = [0, 0, 80], sizes = [2, 8, 16], strides = [1, 1, 1]} : vector<2x8x128xbf16> to vector<2x8x16xbf16>
    "tpu.trace_start"() <{level = 10 : i32, message = "bqd,bkd->bqk"}> : () -> ()
    %cst_40 = arith.constant dense<0.000000e+00> : vector<2x8x8xf32>
    %136 = tpu.matmul %134, %135, %cst_40 {dimension_numbers = #tpu.dot_dimension_numbers<[2], [2], [1], [1], [0, 0, 0, 1, 1, 1], [0], [0]>} : vector<2x8x16xbf16>, vector<2x8x16xbf16>, vector<2x8x8xf32> -> vector<2x8x8xf32>
    "tpu.trace_stop"() : () -> ()
    %137 = vector.broadcast %19 : vector<2x1x8xf32> to vector<2x8x8xf32>
    %138 = arith.addf %136, %137 : vector<2x8x8xf32>
    %cst_41 = arith.constant dense<0xFF800000> : vector<2x8xf32>
    %139 = vector.multi_reduction <maximumf>, %138, %cst_41 [2] : vector<2x8x8xf32> to vector<2x8xf32>
    %140 = vector.shape_cast %139 : vector<2x8xf32> to vector<2x8x1xf32>
    %141 = vector.broadcast %140 : vector<2x8x1xf32> to vector<2x8x8xf32>
    %142 = arith.subf %138, %141 : vector<2x8x8xf32>
    %143 = math.exp %142 : vector<2x8x8xf32>
    %cst_42 = arith.constant dense<0.000000e+00> : vector<2x8xf32>
    %144 = vector.multi_reduction <add>, %143, %cst_42 [2] : vector<2x8x8xf32> to vector<2x8xf32>
    %145 = vector.shape_cast %144 : vector<2x8xf32> to vector<2x8x1xf32>
    %146 = tpu.reciprocal %145 {approx = true} : vector<2x8x1xf32> -> vector<2x8x1xf32>
    %147 = vector.broadcast %146 : vector<2x8x1xf32> to vector<2x8x8xf32>
    %148 = arith.mulf %143, %147 : vector<2x8x8xf32>
    %149 = arith.truncf %148 : vector<2x8x8xf32> to vector<2x8x8xbf16>
    %150 = vector.extract_strided_slice %43 {offsets = [0, 0, 80], sizes = [2, 8, 16], strides = [1, 1, 1]} : vector<2x8x128xbf16> to vector<2x8x16xbf16>
    "tpu.trace_start"() <{level = 10 : i32, message = "bqk,bkd->bqd"}> : () -> ()
    %cst_43 = arith.constant dense<0.000000e+00> : vector<2x8x16xf32>
    %151 = tpu.matmul %149, %150, %cst_43 {dimension_numbers = #tpu.dot_dimension_numbers<[2], [1], [1], [2], [0, 0, 0, 1, 1, 2], [0], [0]>} : vector<2x8x8xbf16>, vector<2x8x16xbf16>, vector<2x8x16xf32> -> vector<2x8x16xf32>
    "tpu.trace_stop"() : () -> ()
    %152 = vector.extract_strided_slice %39 {offsets = [0, 0, 96], sizes = [2, 8, 16], strides = [1, 1, 1]} : vector<2x8x128xbf16> to vector<2x8x16xbf16>
    %153 = vector.extract_strided_slice %41 {offsets = [0, 0, 96], sizes = [2, 8, 16], strides = [1, 1, 1]} : vector<2x8x128xbf16> to vector<2x8x16xbf16>
    "tpu.trace_start"() <{level = 10 : i32, message = "bqd,bkd->bqk"}> : () -> ()
    %cst_44 = arith.constant dense<0.000000e+00> : vector<2x8x8xf32>
    %154 = tpu.matmul %152, %153, %cst_44 {dimension_numbers = #tpu.dot_dimension_numbers<[2], [2], [1], [1], [0, 0, 0, 1, 1, 1], [0], [0]>} : vector<2x8x16xbf16>, vector<2x8x16xbf16>, vector<2x8x8xf32> -> vector<2x8x8xf32>
    "tpu.trace_stop"() : () -> ()
    %155 = vector.broadcast %19 : vector<2x1x8xf32> to vector<2x8x8xf32>
    %156 = arith.addf %154, %155 : vector<2x8x8xf32>
    %cst_45 = arith.constant dense<0xFF800000> : vector<2x8xf32>
    %157 = vector.multi_reduction <maximumf>, %156, %cst_45 [2] : vector<2x8x8xf32> to vector<2x8xf32>
    %158 = vector.shape_cast %157 : vector<2x8xf32> to vector<2x8x1xf32>
    %159 = vector.broadcast %158 : vector<2x8x1xf32> to vector<2x8x8xf32>
    %160 = arith.subf %156, %159 : vector<2x8x8xf32>
    %161 = math.exp %160 : vector<2x8x8xf32>
    %cst_46 = arith.constant dense<0.000000e+00> : vector<2x8xf32>
    %162 = vector.multi_reduction <add>, %161, %cst_46 [2] : vector<2x8x8xf32> to vector<2x8xf32>
    %163 = vector.shape_cast %162 : vector<2x8xf32> to vector<2x8x1xf32>
    %164 = tpu.reciprocal %163 {approx = true} : vector<2x8x1xf32> -> vector<2x8x1xf32>
    %165 = vector.broadcast %164 : vector<2x8x1xf32> to vector<2x8x8xf32>
    %166 = arith.mulf %161, %165 : vector<2x8x8xf32>
    %167 = arith.truncf %166 : vector<2x8x8xf32> to vector<2x8x8xbf16>
    %168 = vector.extract_strided_slice %43 {offsets = [0, 0, 96], sizes = [2, 8, 16], strides = [1, 1, 1]} : vector<2x8x128xbf16> to vector<2x8x16xbf16>
    "tpu.trace_start"() <{level = 10 : i32, message = "bqk,bkd->bqd"}> : () -> ()
    %cst_47 = arith.constant dense<0.000000e+00> : vector<2x8x16xf32>
    %169 = tpu.matmul %167, %168, %cst_47 {dimension_numbers = #tpu.dot_dimension_numbers<[2], [1], [1], [2], [0, 0, 0, 1, 1, 2], [0], [0]>} : vector<2x8x8xbf16>, vector<2x8x16xbf16>, vector<2x8x16xf32> -> vector<2x8x16xf32>
    "tpu.trace_stop"() : () -> ()
    %170 = vector.extract_strided_slice %39 {offsets = [0, 0, 112], sizes = [2, 8, 16], strides = [1, 1, 1]} : vector<2x8x128xbf16> to vector<2x8x16xbf16>
    %171 = vector.extract_strided_slice %41 {offsets = [0, 0, 112], sizes = [2, 8, 16], strides = [1, 1, 1]} : vector<2x8x128xbf16> to vector<2x8x16xbf16>
    "tpu.trace_start"() <{level = 10 : i32, message = "bqd,bkd->bqk"}> : () -> ()
    %cst_48 = arith.constant dense<0.000000e+00> : vector<2x8x8xf32>
    %172 = tpu.matmul %170, %171, %cst_48 {dimension_numbers = #tpu.dot_dimension_numbers<[2], [2], [1], [1], [0, 0, 0, 1, 1, 1], [0], [0]>} : vector<2x8x16xbf16>, vector<2x8x16xbf16>, vector<2x8x8xf32> -> vector<2x8x8xf32>
    "tpu.trace_stop"() : () -> ()
    %173 = vector.broadcast %19 : vector<2x1x8xf32> to vector<2x8x8xf32>
    %174 = arith.addf %172, %173 : vector<2x8x8xf32>
    %cst_49 = arith.constant dense<0xFF800000> : vector<2x8xf32>
    %175 = vector.multi_reduction <maximumf>, %174, %cst_49 [2] : vector<2x8x8xf32> to vector<2x8xf32>
    %176 = vector.shape_cast %175 : vector<2x8xf32> to vector<2x8x1xf32>
    %177 = vector.broadcast %176 : vector<2x8x1xf32> to vector<2x8x8xf32>
    %178 = arith.subf %174, %177 : vector<2x8x8xf32>
    %179 = math.exp %178 : vector<2x8x8xf32>
    %cst_50 = arith.constant dense<0.000000e+00> : vector<2x8xf32>
    %180 = vector.multi_reduction <add>, %179, %cst_50 [2] : vector<2x8x8xf32> to vector<2x8xf32>
    %181 = vector.shape_cast %180 : vector<2x8xf32> to vector<2x8x1xf32>
    %182 = tpu.reciprocal %181 {approx = true} : vector<2x8x1xf32> -> vector<2x8x1xf32>
    %183 = vector.broadcast %182 : vector<2x8x1xf32> to vector<2x8x8xf32>
    %184 = arith.mulf %179, %183 : vector<2x8x8xf32>
    %185 = arith.truncf %184 : vector<2x8x8xf32> to vector<2x8x8xbf16>
    %186 = vector.extract_strided_slice %43 {offsets = [0, 0, 112], sizes = [2, 8, 16], strides = [1, 1, 1]} : vector<2x8x128xbf16> to vector<2x8x16xbf16>
    "tpu.trace_start"() <{level = 10 : i32, message = "bqk,bkd->bqd"}> : () -> ()
    %cst_51 = arith.constant dense<0.000000e+00> : vector<2x8x16xf32>
    %187 = tpu.matmul %185, %186, %cst_51 {dimension_numbers = #tpu.dot_dimension_numbers<[2], [1], [1], [2], [0, 0, 0, 1, 1, 2], [0], [0]>} : vector<2x8x8xbf16>, vector<2x8x16xbf16>, vector<2x8x16xf32> -> vector<2x8x16xf32>
    "tpu.trace_stop"() : () -> ()
    %188 = tpu.concatenate %61, %79, %97, %115, %133, %151, %169, %187 in 2 : vector<2x8x16xf32>, vector<2x8x16xf32>, vector<2x8x16xf32>, vector<2x8x16xf32>, vector<2x8x16xf32>, vector<2x8x16xf32>, vector<2x8x16xf32>, vector<2x8x16xf32> -> vector<2x8x128xf32>
    %189 = vector.shape_cast %188 : vector<2x8x128xf32> to vector<16x128xf32>
    %190 = arith.truncf %189 : vector<16x128xf32> to vector<16x128xbf16>
    %c0_52 = arith.constant 0 : index
    %c0_53 = arith.constant 0 : index
    %191 = vector.load %arg6[%c0_52, %c0_53] : memref<128x128xbf16, #tpu.memory_space<vmem>>, vector<128x128xbf16>
    %cst_54 = arith.constant dense<0.000000e+00> : vector<16x128xf32>
    %192 = tpu.matmul %190, %191, %cst_54 {dimension_numbers = #tpu.dot_dimension_numbers<[1], [0], [0], [1], [0, 0, 1, 1], [], []>} : vector<16x128xbf16>, vector<128x128xbf16>, vector<16x128xf32> -> vector<16x128xf32>
    %c0_55 = arith.constant 0 : index
    %c0_56 = arith.constant 0 : index
    %193 = vector.load %arg7[%c0_55, %c0_56] : memref<1x128xf32, #tpu.memory_space<vmem>>, vector<1x128xf32>
    %194 = vector.broadcast %193 : vector<1x128xf32> to vector<16x128xf32>
    %195 = arith.addf %192, %194 : vector<16x128xf32>
    %196 = arith.addf %7, %195 : vector<16x128xf32>
    %c0_57 = arith.constant 0 : index
    %c0_58 = arith.constant 0 : index
    %197 = vector.load %arg8[%c0_57, %c0_58] : memref<1x128xf32, #tpu.memory_space<vmem>>, vector<1x128xf32>
    %c0_59 = arith.constant 0 : index
    %c0_60 = arith.constant 0 : index
    %198 = vector.load %arg9[%c0_59, %c0_60] : memref<1x128xf32, #tpu.memory_space<vmem>>, vector<1x128xf32>
    %cst_61 = arith.constant dense<0.000000e+00> : vector<16xf32>
    %199 = vector.multi_reduction <add>, %196, %cst_61 [1] : vector<16x128xf32> to vector<16xf32>
    %200 = vector.shape_cast %199 : vector<16xf32> to vector<16x1xf32>
    %cst_62 = arith.constant 1.280000e+02 : f32
    %201 = vector.broadcast %cst_62 : f32 to vector<16x1xf32>
    %202 = arith.divf %200, %201 : vector<16x1xf32>
    %203 = vector.broadcast %202 : vector<16x1xf32> to vector<16x128xf32>
    %204 = arith.subf %196, %203 : vector<16x128xf32>
    %205 = arith.mulf %204, %204 : vector<16x128xf32>
    %cst_63 = arith.constant dense<0.000000e+00> : vector<16xf32>
    %206 = vector.multi_reduction <add>, %205, %cst_63 [1] : vector<16x128xf32> to vector<16xf32>
    %207 = vector.shape_cast %206 : vector<16xf32> to vector<16x1xf32>
    %cst_64 = arith.constant 1.280000e+02 : f32
    %208 = vector.broadcast %cst_64 : f32 to vector<16x1xf32>
    %209 = arith.divf %207, %208 : vector<16x1xf32>
    %210 = vector.broadcast %202 : vector<16x1xf32> to vector<16x128xf32>
    %211 = arith.subf %196, %210 : vector<16x128xf32>
    %cst_65 = arith.constant 9.99999974E-6 : f32
    %212 = vector.broadcast %cst_65 : f32 to vector<16x1xf32>
    %213 = arith.addf %209, %212 : vector<16x1xf32>
    %214 = math.rsqrt %213 : vector<16x1xf32>
    %215 = vector.broadcast %214 : vector<16x1xf32> to vector<16x128xf32>
    %216 = arith.mulf %211, %215 : vector<16x128xf32>
    %217 = vector.broadcast %197 : vector<1x128xf32> to vector<16x128xf32>
    %218 = arith.mulf %216, %217 : vector<16x128xf32>
    %219 = vector.broadcast %198 : vector<1x128xf32> to vector<16x128xf32>
    %220 = arith.addf %218, %219 : vector<16x128xf32>
    %221 = arith.truncf %220 : vector<16x128xf32> to vector<16x128xbf16>
    %c0_66 = arith.constant 0 : index
    %c0_67 = arith.constant 0 : index
    %222 = vector.load %arg10[%c0_66, %c0_67] : memref<128x2048xbf16, #tpu.memory_space<vmem>>, vector<128x2048xbf16>
    %cst_68 = arith.constant dense<0.000000e+00> : vector<16x2048xf32>
    %223 = tpu.matmul %221, %222, %cst_68 {dimension_numbers = #tpu.dot_dimension_numbers<[1], [0], [0], [1], [0, 0, 1, 1], [], []>} : vector<16x128xbf16>, vector<128x2048xbf16>, vector<16x2048xf32> -> vector<16x2048xf32>
    %c0_69 = arith.constant 0 : index
    %c0_70 = arith.constant 0 : index
    %224 = vector.load %arg11[%c0_69, %c0_70] : memref<1x2048xf32, #tpu.memory_space<vmem>>, vector<1x2048xf32>
    %225 = vector.broadcast %224 : vector<1x2048xf32> to vector<16x2048xf32>
    %226 = arith.addf %223, %225 : vector<16x2048xf32>
    %cst_71 = arith.constant 0.000000e+00 : f32
    %227 = vector.broadcast %cst_71 : f32 to vector<16x2048xf32>
    %228 = arith.maximumf %226, %227 : vector<16x2048xf32>
    %229 = arith.truncf %228 : vector<16x2048xf32> to vector<16x2048xbf16>
    %c0_72 = arith.constant 0 : index
    %c0_73 = arith.constant 0 : index
    %230 = vector.load %arg12[%c0_72, %c0_73] : memref<2048x128xbf16, #tpu.memory_space<vmem>>, vector<2048x128xbf16>
    %cst_74 = arith.constant dense<0.000000e+00> : vector<16x128xf32>
    %231 = tpu.matmul %229, %230, %cst_74 {dimension_numbers = #tpu.dot_dimension_numbers<[1], [0], [0], [1], [0, 0, 1, 1], [], []>} : vector<16x2048xbf16>, vector<2048x128xbf16>, vector<16x128xf32> -> vector<16x128xf32>
    %c0_75 = arith.constant 0 : index
    %c0_76 = arith.constant 0 : index
    %232 = vector.load %arg13[%c0_75, %c0_76] : memref<1x128xf32, #tpu.memory_space<vmem>>, vector<1x128xf32>
    %233 = vector.broadcast %232 : vector<1x128xf32> to vector<16x128xf32>
    %234 = arith.addf %231, %233 : vector<16x128xf32>
    %235 = arith.addf %220, %234 : vector<16x128xf32>
    %c0_77 = arith.constant 0 : index
    %c0_78 = arith.constant 0 : index
    %236 = vector.load %arg14[%c0_77, %c0_78] : memref<1x128xf32, #tpu.memory_space<vmem>>, vector<1x128xf32>
    %c0_79 = arith.constant 0 : index
    %c0_80 = arith.constant 0 : index
    %237 = vector.load %arg15[%c0_79, %c0_80] : memref<1x128xf32, #tpu.memory_space<vmem>>, vector<1x128xf32>
    %cst_81 = arith.constant dense<0.000000e+00> : vector<16xf32>
    %238 = vector.multi_reduction <add>, %235, %cst_81 [1] : vector<16x128xf32> to vector<16xf32>
    %239 = vector.shape_cast %238 : vector<16xf32> to vector<16x1xf32>
    %cst_82 = arith.constant 1.280000e+02 : f32
    %240 = vector.broadcast %cst_82 : f32 to vector<16x1xf32>
    %241 = arith.divf %239, %240 : vector<16x1xf32>
    %242 = vector.broadcast %241 : vector<16x1xf32> to vector<16x128xf32>
    %243 = arith.subf %235, %242 : vector<16x128xf32>
    %244 = arith.mulf %243, %243 : vector<16x128xf32>
    %cst_83 = arith.constant dense<0.000000e+00> : vector<16xf32>
    %245 = vector.multi_reduction <add>, %244, %cst_83 [1] : vector<16x128xf32> to vector<16xf32>
    %246 = vector.shape_cast %245 : vector<16xf32> to vector<16x1xf32>
    %cst_84 = arith.constant 1.280000e+02 : f32
    %247 = vector.broadcast %cst_84 : f32 to vector<16x1xf32>
    %248 = arith.divf %246, %247 : vector<16x1xf32>
    %249 = vector.broadcast %241 : vector<16x1xf32> to vector<16x128xf32>
    %250 = arith.subf %235, %249 : vector<16x128xf32>
    %cst_85 = arith.constant 9.99999974E-6 : f32
    %251 = vector.broadcast %cst_85 : f32 to vector<16x1xf32>
    %252 = arith.addf %248, %251 : vector<16x1xf32>
    %253 = math.rsqrt %252 : vector<16x1xf32>
    %254 = vector.broadcast %253 : vector<16x1xf32> to vector<16x128xf32>
    %255 = arith.mulf %250, %254 : vector<16x128xf32>
    %256 = vector.broadcast %236 : vector<1x128xf32> to vector<16x128xf32>
    %257 = arith.mulf %255, %256 : vector<16x128xf32>
    %258 = vector.broadcast %237 : vector<1x128xf32> to vector<16x128xf32>
    %259 = arith.addf %257, %258 : vector<16x128xf32>
    %c-1_i32 = arith.constant -1 : i32
    %260 = vector.broadcast %c-1_i32 : i32 to vector<2x8x1xi32>
    %261 = arith.select %28, %22, %260 : vector<2x8x1xi1>, vector<2x8x1xi32>
    %cst_86 = arith.constant dense<-2147483648> : vector<2x1xi32>
    %262 = vector.multi_reduction <maxsi>, %261, %cst_86 [1] : vector<2x8x1xi32> to vector<2x1xi32>
    %263 = vector.shape_cast %262 : vector<2x1xi32> to vector<2x1x1xi32>
    %264 = vector.broadcast %263 : vector<2x1x1xi32> to vector<2x8x1xi32>
    %265 = arith.cmpi eq, %22, %264 : vector<2x8x1xi32>
    %266 = arith.extui %265 : vector<2x8x1xi1> to vector<2x8x1xi32>
    %267 = arith.sitofp %266 : vector<2x8x1xi32> to vector<2x8x1xf32>
    %268 = vector.shape_cast %259 : vector<16x128xf32> to vector<2x8x128xf32>
    %269 = vector.broadcast %267 : vector<2x8x1xf32> to vector<2x8x128xf32>
    %270 = arith.mulf %268, %269 : vector<2x8x128xf32>
    %cst_87 = arith.constant dense<0.000000e+00> : vector<2x128xf32>
    %271 = vector.multi_reduction <add>, %270, %cst_87 [1] : vector<2x8x128xf32> to vector<2x128xf32>
    %272 = arith.truncf %271 : vector<2x128xf32> to vector<2x128xbf16>
    %c0_88 = arith.constant 0 : index
    %c0_89 = arith.constant 0 : index
    %273 = vector.load %arg16[%c0_88, %c0_89] : memref<128x8xbf16, #tpu.memory_space<vmem>>, vector<128x8xbf16>
    %cst_90 = arith.constant dense<0.000000e+00> : vector<2x8xf32>
    %274 = tpu.matmul %272, %273, %cst_90 {dimension_numbers = #tpu.dot_dimension_numbers<[1], [0], [0], [1], [0, 0, 1, 1], [], []>} : vector<2x128xbf16>, vector<128x8xbf16>, vector<2x8xf32> -> vector<2x8xf32>
    %c0_91 = arith.constant 0 : index
    %c0_92 = arith.constant 0 : index
    %275 = vector.load %arg17[%c0_91, %c0_92] : memref<1x8xf32, #tpu.memory_space<vmem>>, vector<1x8xf32>
    %276 = vector.broadcast %275 : vector<1x8xf32> to vector<2x8xf32>
    %277 = arith.addf %274, %276 : vector<2x8xf32>
    %278 = vector.shape_cast %277 : vector<2x8xf32> to vector<2x1x8xf32>
    %c0_93 = arith.constant 0 : index
    %c0_94 = arith.constant 0 : index
    %c0_95 = arith.constant 0 : index
    %279 = vector.load %arg18[%c0_93, %c0_94, %c0_95] : memref<2x1x8xf32, #tpu.memory_space<vmem>>, vector<2x1x8xf32>
    tpu.vector_store %arg18[%c0_93, %c0_94, %c0_95], %278 {strides = array<i32>} : memref<2x1x8xf32, #tpu.memory_space<vmem>>, vector<2x1x8xf32>,
    return
  }
  func.func @transform_0(%arg0: i32) -> (i32, i32, i32) {
    %c0_i32 = arith.constant 0 : i32
    %c0_i32_0 = arith.constant 0 : i32
    %c0_i32_1 = arith.constant 0 : i32
    return %arg0, %c0_i32, %c0_i32_0 : i32, i32, i32
  }
  func.func @transform_1(%arg0: i32) -> (i32, i32) {
    %c0_i32 = arith.constant 0 : i32
    %c0_i32_0 = arith.constant 0 : i32
    %c0_i32_1 = arith.constant 0 : i32
    return %c0_i32, %c0_i32_0 : i32, i32
  }
  func.func @transform_2(%arg0: i32) -> (i32, i32) {
    %c0_i32 = arith.constant 0 : i32
    %c0_i32_0 = arith.constant 0 : i32
    %c0_i32_1 = arith.constant 0 : i32
    return %c0_i32, %c0_i32_0 : i32, i32
  }
  func.func @transform_3(%arg0: i32) -> (i32, i32) {
    %c0_i32 = arith.constant 0 : i32
    %c0_i32_0 = arith.constant 0 : i32
    %c0_i32_1 = arith.constant 0 : i32
    return %c0_i32, %c0_i32_0 : i32, i32
  }
  func.func @transform_4(%arg0: i32) -> (i32, i32) {
    %c0_i32 = arith.constant 0 : i32
    %c0_i32_0 = arith.constant 0 : i32
    %c0_i32_1 = arith.constant 0 : i32
    return %c0_i32, %c0_i32_0 : i32, i32
  }
  func.func @transform_5(%arg0: i32) -> (i32, i32) {
    %c0_i32 = arith.constant 0 : i32
    %c0_i32_0 = arith.constant 0 : i32
    %c0_i32_1 = arith.constant 0 : i32
    return %c0_i32, %c0_i32_0 : i32, i32
  }
  func.func @transform_6(%arg0: i32) -> (i32, i32) {
    %c0_i32 = arith.constant 0 : i32
    %c0_i32_0 = arith.constant 0 : i32
    %c0_i32_1 = arith.constant 0 : i32
    return %c0_i32, %c0_i32_0 : i32, i32
  }
  func.func @transform_7(%arg0: i32) -> (i32, i32) {
    %c0_i32 = arith.constant 0 : i32
    %c0_i32_0 = arith.constant 0 : i32
    %c0_i32_1 = arith.constant 0 : i32
    return %c0_i32, %c0_i32_0 : i32, i32
  }
  func.func @transform_8(%arg0: i32) -> (i32, i32) {
    %c0_i32 = arith.constant 0 : i32
    %c0_i32_0 = arith.constant 0 : i32
    %c0_i32_1 = arith.constant 0 : i32
    return %c0_i32, %c0_i32_0 : i32, i32
  }
  func.func @transform_9(%arg0: i32) -> (i32, i32) {
    %c0_i32 = arith.constant 0 : i32
    %c0_i32_0 = arith.constant 0 : i32
    %c0_i32_1 = arith.constant 0 : i32
    return %c0_i32, %c0_i32_0 : i32, i32
  }
  func.func @transform_10(%arg0: i32) -> (i32, i32) {
    %c0_i32 = arith.constant 0 : i32
    %c0_i32_0 = arith.constant 0 : i32
    %c0_i32_1 = arith.constant 0 : i32
    return %c0_i32, %c0_i32_0 : i32, i32
  }
  func.func @transform_11(%arg0: i32) -> (i32, i32) {
    %c0_i32 = arith.constant 0 : i32
    %c0_i32_0 = arith.constant 0 : i32
    %c0_i32_1 = arith.constant 0 : i32
    return %c0_i32, %c0_i32_0 : i32, i32
  }
  func.func @transform_12(%arg0: i32) -> (i32, i32) {
    %c0_i32 = arith.constant 0 : i32
    %c0_i32_0 = arith.constant 0 : i32
    %c0_i32_1 = arith.constant 0 : i32
    return %c0_i32, %c0_i32_0 : i32, i32
  }
  func.func @transform_13(%arg0: i32) -> (i32, i32) {
    %c0_i32 = arith.constant 0 : i32
    %c0_i32_0 = arith.constant 0 : i32
    %c0_i32_1 = arith.constant 0 : i32
    return %c0_i32, %c0_i32_0 : i32, i32
  }
  func.func @transform_14(%arg0: i32) -> (i32, i32) {
    %c0_i32 = arith.constant 0 : i32
    %c0_i32_0 = arith.constant 0 : i32
    %c0_i32_1 = arith.constant 0 : i32
    return %c0_i32, %c0_i32_0 : i32, i32
  }
  func.func @transform_15(%arg0: i32) -> (i32, i32) {
    %c0_i32 = arith.constant 0 : i32
    %c0_i32_0 = arith.constant 0 : i32
    %c0_i32_1 = arith.constant 0 : i32
    return %c0_i32, %c0_i32_0 : i32, i32
  }
  func.func @transform_16(%arg0: i32) -> (i32, i32) {
    %c0_i32 = arith.constant 0 : i32
    %c0_i32_0 = arith.constant 0 : i32
    %c0_i32_1 = arith.constant 0 : i32
    return %c0_i32, %c0_i32_0 : i32, i32
  }
  func.func @transform_17(%arg0: i32) -> (i32, i32, i32) {
    %c0_i32 = arith.constant 0 : i32
    %c0_i32_0 = arith.constant 0 : i32
    %c0_i32_1 = arith.constant 0 : i32
    return %arg0, %c0_i32, %c0_i32_0 : i32, i32, i32
  }
}

</mosaic_0001>

<llo_original>
// kernel: tpu_custom_call.1
$region0: #{tpu_custom_call.1}
  #allocation0 [shape = 'u32[]', space=smem, size = 0x4, offset = 0x4, fixed_abs, tag = 'smem constant byte address 0x4 - core index']
  #allocation1 [shape = 'u32[144,128]{1,0:T(1,128)}', space=vmem, size = 0x12000, scoped, tag = 'internal scratch']
  %s0 = inlined_call_operand.hbm [shape: f32[4,8,16], index: 0, kind: input, shape index: {}]
  %s1 = inlined_call_operand.hbm [shape: bf16[16,128], index: 1, kind: input, shape index: {}]
  %s2 = inlined_call_operand.vmem [shape: f32[1,128], index: 2, kind: input, shape index: {}]
  %s3 = inlined_call_operand.hbm [shape: bf16[128,384], index: 3, kind: input, shape index: {}]
  %s4 = inlined_call_operand.vmem [shape: f32[1,384], index: 4, kind: input, shape index: {}]
  %s5 = inlined_call_operand.vmem [shape: bf16[128,128], index: 5, kind: input, shape index: {}]
  %s6 = inlined_call_operand.vmem [shape: f32[1,128], index: 6, kind: input, shape index: {}]
  %s7 = inlined_call_operand.vmem [shape: f32[1,128], index: 7, kind: input, shape index: {}]
  %s8 = inlined_call_operand.vmem [shape: f32[1,128], index: 8, kind: input, shape index: {}]
  %s9 = inlined_call_operand.hbm [shape: bf16[128,2048], index: 9, kind: input, shape index: {}]
  %s10 = inlined_call_operand.vmem [shape: f32[1,2048], index: 10, kind: input, shape index: {}]
  %s11 = inlined_call_operand.hbm [shape: bf16[2048,128], index: 11, kind: input, shape index: {}]
  %s12 = inlined_call_operand.vmem [shape: f32[1,128], index: 12, kind: input, shape index: {}]
  %s13 = inlined_call_operand.vmem [shape: f32[1,128], index: 13, kind: input, shape index: {}]
  %s14 = inlined_call_operand.vmem [shape: f32[1,128], index: 14, kind: input, shape index: {}]
  %s15 = inlined_call_operand.vmem [shape: bf16[128,8], index: 15, kind: input, shape index: {}]
  %s16 = inlined_call_operand.vmem [shape: f32[1,8], index: 16, kind: input, shape index: {}]
  %s17 = inlined_call_operand.hbm [shape: f32[4,1,8], index: 17, kind: output, shape index: {}]
  %s18 = sld [smem:[#allocation0]]
  $region121: #{tpu_custom_call.1} parent=0
    _
  %s20 = ssub.s32 1, %s18
  %s21 = scalar_select 0, %s20, %s18
  $region1: #{tpu_custom_call.1} parent=0
    #allocation2 [shape = 'u8[16384]{0}', space=vmem, size = 0x4000, scoped, tag = 'input window, operand 0']
    #allocation3 [shape = 's32[2]{0}', space=sflag, size = 0x8, scoped, tag = 'scoped memory for tpu_custom_call.1']
    #allocation4 [shape = 's32[2]{0}', space=sflag, size = 0x8, scoped, tag = 'scoped memory for tpu_custom_call.1']
    #allocation5 [shape = 'u8[4096]{0}', space=vmem, size = 0x1000, scoped, tag = 'input window, operand 1, single buffered']
    #allocation6 [shape = 's32[1]{0}', space=sflag, size = 0x4, scoped, tag = 'scoped memory for tpu_custom_call.1']
    #allocation7 [shape = 'u8[98304]{0}', space=vmem, size = 0x18000, scoped, tag = 'input window, operand 3, single buffered']
    #allocation8 [shape = 'u8[524288]{0}', space=vmem, size = 0x80000, scoped, tag = 'input window, operand 9, single buffered']
    #allocation9 [shape = 's32[1]{0}', space=sflag, size = 0x4, scoped, tag = 'scoped memory for tpu_custom_call.1']
    #allocation10 [shape = 'u8[524288]{0}', space=vmem, size = 0x80000, scoped, tag = 'input window, operand 11, single buffered']
    #allocation11 [shape = 'u8[2048]{0}', space=vmem, size = 0x800, scoped, tag = 'output window, operand 0']
    %22 = vsyncpa [#allocation3], 0
    %s23 = scalar_lea.sflag [#allocation3], 1
    %24 = vsyncpa %s23, 0
    %25 = vsyncpa [#allocation6], 0
    %26 = vsyncpa [#allocation9], 0
    %27 = vsyncpa [#allocation4], 0
    %s28 = scalar_lea.sflag [#allocation4], 1
    %29 = vsyncpa %s28, 0
    loop: start=0, step=1, limit=4
    $region2: #{tpu_custom_call.1} parent=1 // loop_pre_header
      _
    $region3: #{tpu_custom_call.1} parent=1 // loop_header
      %s31 = sphi 0, %s35
      %p32 = scmp.ge.s32.totalorder %s31, 4
      %s41 = sphi 0, %s43
      %s44 = sphi 0, %s41
      %s45 = sphi 0, %s44
      %s61 = sphi 0, %s45
      %s65 = sphi 0, %s65
      %s67 = sphi 0, %s65
      %s68 = sphi 0, %s67
      %s82 = sphi 0, %s68
      %s86 = sphi 0, %s86
      %s88 = sphi 0, %s86
      %s89 = sphi 0, %s88
      %s103 = sphi 0, %s89
      %s107 = sphi 0, %s107
      %s109 = sphi 0, %s107
      %s110 = sphi 0, %s109
      %s124 = sphi 0, %s110
      %s128 = sphi 0, %s128
      %s130 = sphi 0, %s128
      %s131 = sphi 0, %s130
      %s145 = sphi 0, %s131
      %s149 = sphi 0, %s149
      %s151 = sphi 0, %s149
      %s152 = sphi 0, %s151
      %s166 = sphi 0, %s152
      %s170 = sphi 0, %s170
      %s172 = sphi 0, %s170
      %s173 = sphi 0, %s172
      %s187 = sphi 0, %s173
      %s191 = sphi 0, %s191
      %s193 = sphi 0, %s191
      %s194 = sphi 0, %s193
      %s208 = sphi 0, %s194
      %s212 = sphi 0, %s212
      %s214 = sphi 0, %s212
      %s215 = sphi 0, %s214
      %s229 = sphi 0, %s215
      %s233 = sphi 0, %s233
      %s235 = sphi 0, %s233
      %s236 = sphi 0, %s235
      %s250 = sphi 0, %s236
      %s254 = sphi 0, %s254
      %s256 = sphi 0, %s254
      %s257 = sphi 0, %s256
      %s271 = sphi 0, %s257
      %s275 = sphi 0, %s275
      %s277 = sphi 0, %s275
      %s278 = sphi 0, %s277
      %s292 = sphi 0, %s278
      %s296 = sphi 0, %s296
      %s298 = sphi 0, %s296
      %s299 = sphi 0, %s298
      %s313 = sphi 0, %s299
      %s317 = sphi 0, %s317
      %s319 = sphi 0, %s317
      %s320 = sphi 0, %s319
      %s334 = sphi 0, %s320
      %s338 = sphi 0, %s338
      %s340 = sphi 0, %s338
      %s341 = sphi 0, %s340
      %s355 = sphi 0, %s341
      %s359 = sphi 0, %s359
      %s361 = sphi 0, %s359
      %s362 = sphi 0, %s361
      %s376 = sphi 0, %s362
      %s380 = sphi 0, %s380
      %s382 = sphi 0, %s380
      %s383 = sphi 0, %s382
      %s397 = sphi 0, %s383
      %s403 = sphi 0, %s405
      %s406 = sphi 0, %s403
      %s407 = sphi 0, %s406
      %s423 = sphi 0, %s407
    $region4: #{tpu_custom_call.1} parent=1 // loop_header_branch
      %34 = sbr.rel (%p32) target = $region8
    $region5: #{tpu_custom_call.1} parent=1 // loop_body
      %s36 = ssub.s32 %s31, 1
      %s37 = ssub.s32 %s31, 2
      %s38 = sadd.s32 %s31, 1
      %s39 = ssub.s32 %s31, %s38
      %p40 = scmp.eq.s32.totalorder %s39, 0
      %s42 = sadd.s32 %s41, 1
      %s43 = scalar_select %p40, %s41, %s42
      %p46 = pneg %p40
      %p47 = scmp.eq.s32.totalorder %s31, 1
      %p48 = por %p46, %p47
      %p49 = scmp.ne.s32.totalorder %s41, %s44
      %p50 = scmp.eq.s32.totalorder %s31, 0
      %p51 = por %p49, %p50
      %p52 = scmp.ne.s32.totalorder %s41, %s44
      %p53 = scmp.eq.s32.totalorder %s36, 1
      %p54 = por %p52, %p53
      %p55 = scmp.ne.s32.totalorder %s44, %s45
      %p56 = scmp.eq.s32.totalorder %s36, 0
      %p57 = por %p55, %p56
      %p58 = scmp.ne.s32.totalorder %s44, %s45
      %p59 = scmp.eq.s32.totalorder %s37, 1
      %p60 = por %p58, %p59
      %p62 = scmp.ne.s32.totalorder %s45, %s61
      %p63 = scmp.eq.s32.totalorder %s37, 0
      %p64 = por %p62, %p63
      %s66 = sadd.s32 %s65, 1
      %p69 = scmp.eq.s32.totalorder %s31, 1
      %p70 = scmp.ne.s32.totalorder %s65, %s67
      %p71 = scmp.eq.s32.totalorder %s31, 0
      %p72 = por %p70, %p71
      %p73 = scmp.ne.s32.totalorder %s65, %s67
      %p74 = scmp.eq.s32.totalorder %s36, 1
      %p75 = por %p73, %p74
      %p76 = scmp.ne.s32.totalorder %s67, %s68
      %p77 = scmp.eq.s32.totalorder %s36, 0
      %p78 = por %p76, %p77
      %p79 = scmp.ne.s32.totalorder %s67, %s68
      %p80 = scmp.eq.s32.totalorder %s37, 1
      %p81 = por %p79, %p80
      %p83 = scmp.ne.s32.totalorder %s68, %s82
      %p84 = scmp.eq.s32.totalorder %s37, 0
      %p85 = por %p83, %p84
      %s87 = sadd.s32 %s86, 1
      %p90 = scmp.eq.s32.totalorder %s31, 1
      %p91 = scmp.ne.s32.totalorder %s86, %s88
      %p92 = scmp.eq.s32.totalorder %s31, 0
      %p93 = por %p91, %p92
      %p94 = scmp.ne.s32.totalorder %s86, %s88
      %p95 = scmp.eq.s32.totalorder %s36, 1
      %p96 = por %p94, %p95
      %p97 = scmp.ne.s32.totalorder %s88, %s89
      %p98 = scmp.eq.s32.totalorder %s36, 0
      %p99 = por %p97, %p98
      %p100 = scmp.ne.s32.totalorder %s88, %s89
      %p101 = scmp.eq.s32.totalorder %s37, 1
      %p102 = por %p100, %p101
      %p104 = scmp.ne.s32.totalorder %s89, %s103
      %p105 = scmp.eq.s32.totalorder %s37, 0
      %p106 = por %p104, %p105
      %s108 = sadd.s32 %s107, 1
      %p111 = scmp.eq.s32.totalorder %s31, 1
      %p112 = scmp.ne.s32.totalorder %s107, %s109
      %p113 = scmp.eq.s32.totalorder %s31, 0
      %p114 = por %p112, %p113
      %p115 = scmp.ne.s32.totalorder %s107, %s109
      %p116 = scmp.eq.s32.totalorder %s36, 1
      %p117 = por %p115, %p116
      %p118 = scmp.ne.s32.totalorder %s109, %s110
      %p119 = scmp.eq.s32.totalorder %s36, 0
      %p120 = por %p118, %p119
      %p121 = scmp.ne.s32.totalorder %s109, %s110
      %p122 = scmp.eq.s32.totalorder %s37, 1
      %p123 = por %p121, %p122
      %p125 = scmp.ne.s32.totalorder %s110, %s124
      %p126 = scmp.eq.s32.totalorder %s37, 0
      %p127 = por %p125, %p126
      %s129 = sadd.s32 %s128, 1
      %p132 = scmp.eq.s32.totalorder %s31, 1
      %p133 = scmp.ne.s32.totalorder %s128, %s130
      %p134 = scmp.eq.s32.totalorder %s31, 0
      %p135 = por %p133, %p134
      %p136 = scmp.ne.s32.totalorder %s128, %s130
      %p137 = scmp.eq.s32.totalorder %s36, 1
      %p138 = por %p136, %p137
      %p139 = scmp.ne.s32.totalorder %s130, %s131
      %p140 = scmp.eq.s32.totalorder %s36, 0
      %p141 = por %p139, %p140
      %p142 = scmp.ne.s32.totalorder %s130, %s131
      %p143 = scmp.eq.s32.totalorder %s37, 1
      %p144 = por %p142, %p143
      %p146 = scmp.ne.s32.totalorder %s131, %s145
      %p147 = scmp.eq.s32.totalorder %s37, 0
      %p148 = por %p146, %p147
      %s150 = sadd.s32 %s149, 1
      %p153 = scmp.eq.s32.totalorder %s31, 1
      %p154 = scmp.ne.s32.totalorder %s149, %s151
      %p155 = scmp.eq.s32.totalorder %s31, 0
      %p156 = por %p154, %p155
      %p157 = scmp.ne.s32.totalorder %s149, %s151
      %p158 = scmp.eq.s32.totalorder %s36, 1
      %p159 = por %p157, %p158
      %p160 = scmp.ne.s32.totalorder %s151, %s152
      %p161 = scmp.eq.s32.totalorder %s36, 0
      %p162 = por %p160, %p161
      %p163 = scmp.ne.s32.totalorder %s151, %s152
      %p164 = scmp.eq.s32.totalorder %s37, 1
      %p165 = por %p163, %p164
      %p167 = scmp.ne.s32.totalorder %s152, %s166
      %p168 = scmp.eq.s32.totalorder %s37, 0
      %p169 = por %p167, %p168
      %s171 = sadd.s32 %s170, 1
      %p174 = scmp.eq.s32.totalorder %s31, 1
      %p175 = scmp.ne.s32.totalorder %s170, %s172
      %p176 = scmp.eq.s32.totalorder %s31, 0
      %p177 = por %p175, %p176
      %p178 = scmp.ne.s32.totalorder %s170, %s172
      %p179 = scmp.eq.s32.totalorder %s36, 1
      %p180 = por %p178, %p179
      %p181 = scmp.ne.s32.totalorder %s172, %s173
      %p182 = scmp.eq.s32.totalorder %s36, 0
      %p183 = por %p181, %p182
      %p184 = scmp.ne.s32.totalorder %s172, %s173
      %p185 = scmp.eq.s32.totalorder %s37, 1
      %p186 = por %p184, %p185
      %p188 = scmp.ne.s32.totalorder %s173, %s187
      %p189 = scmp.eq.s32.totalorder %s37, 0
      %p190 = por %p188, %p189
      %s192 = sadd.s32 %s191, 1
      %p195 = scmp.eq.s32.totalorder %s31, 1
      %p196 = scmp.ne.s32.totalorder %s191, %s193
      %p197 = scmp.eq.s32.totalorder %s31, 0
      %p198 = por %p196, %p197
      %p199 = scmp.ne.s32.totalorder %s191, %s193
      %p200 = scmp.eq.s32.totalorder %s36, 1
      %p201 = por %p199, %p200
      %p202 = scmp.ne.s32.totalorder %s193, %s194
      %p203 = scmp.eq.s32.totalorder %s36, 0
      %p204 = por %p202, %p203
      %p205 = scmp.ne.s32.totalorder %s193, %s194
      %p206 = scmp.eq.s32.totalorder %s37, 1
      %p207 = por %p205, %p206
      %p209 = scmp.ne.s32.totalorder %s194, %s208
      %p210 = scmp.eq.s32.totalorder %s37, 0
      %p211 = por %p209, %p210
      %s213 = sadd.s32 %s212, 1
      %p216 = scmp.eq.s32.totalorder %s31, 1
      %p217 = scmp.ne.s32.totalorder %s212, %s214
      %p218 = scmp.eq.s32.totalorder %s31, 0
      %p219 = por %p217, %p218
      %p220 = scmp.ne.s32.totalorder %s212, %s214
      %p221 = scmp.eq.s32.totalorder %s36, 1
      %p222 = por %p220, %p221
      %p223 = scmp.ne.s32.totalorder %s214, %s215
      %p224 = scmp.eq.s32.totalorder %s36, 0
      %p225 = por %p223, %p224
      %p226 = scmp.ne.s32.totalorder %s214, %s215
      %p227 = scmp.eq.s32.totalorder %s37, 1
      %p228 = por %p226, %p227
      %p230 = scmp.ne.s32.totalorder %s215, %s229
      %p231 = scmp.eq.s32.totalorder %s37, 0
      %p232 = por %p230, %p231
      %s234 = sadd.s32 %s233, 1
      %p237 = scmp.eq.s32.totalorder %s31, 1
      %p238 = scmp.ne.s32.totalorder %s233, %s235
      %p239 = scmp.eq.s32.totalorder %s31, 0
      %p240 = por %p238, %p239
      %p241 = scmp.ne.s32.totalorder %s233, %s235
      %p242 = scmp.eq.s32.totalorder %s36, 1
      %p243 = por %p241, %p242
      %p244 = scmp.ne.s32.totalorder %s235, %s236
      %p245 = scmp.eq.s32.totalorder %s36, 0
      %p246 = por %p244, %p245
      %p247 = scmp.ne.s32.totalorder %s235, %s236
      %p248 = scmp.eq.s32.totalorder %s37, 1
      %p249 = por %p247, %p248
      %p251 = scmp.ne.s32.totalorder %s236, %s250
      %p252 = scmp.eq.s32.totalorder %s37, 0
      %p253 = por %p251, %p252
      %s255 = sadd.s32 %s254, 1
      %p258 = scmp.eq.s32.totalorder %s31, 1
      %p259 = scmp.ne.s32.totalorder %s254, %s256
      %p260 = scmp.eq.s32.totalorder %s31, 0
      %p261 = por %p259, %p260
      %p262 = scmp.ne.s32.totalorder %s254, %s256
      %p263 = scmp.eq.s32.totalorder %s36, 1
      %p264 = por %p262, %p263
      %p265 = scmp.ne.s32.totalorder %s256, %s257
      %p266 = scmp.eq.s32.totalorder %s36, 0
      %p267 = por %p265, %p266
      %p268 = scmp.ne.s32.totalorder %s256, %s257
      %p269 = scmp.eq.s32.totalorder %s37, 1
      %p270 = por %p268, %p269
      %p272 = scmp.ne.s32.totalorder %s257, %s271
      %p273 = scmp.eq.s32.totalorder %s37, 0
      %p274 = por %p272, %p273
      %s276 = sadd.s32 %s275, 1
      %p279 = scmp.eq.s32.totalorder %s31, 1
      %p280 = scmp.ne.s32.totalorder %s275, %s277
      %p281 = scmp.eq.s32.totalorder %s31, 0
      %p282 = por %p280, %p281
      %p283 = scmp.ne.s32.totalorder %s275, %s277
      %p284 = scmp.eq.s32.totalorder %s36, 1
      %p285 = por %p283, %p284
      %p286 = scmp.ne.s32.totalorder %s277, %s278
      %p287 = scmp.eq.s32.totalorder %s36, 0
      %p288 = por %p286, %p287
      %p289 = scmp.ne.s32.totalorder %s277, %s278
      %p290 = scmp.eq.s32.totalorder %s37, 1
      %p291 = por %p289, %p290
      %p293 = scmp.ne.s32.totalorder %s278, %s292
      %p294 = scmp.eq.s32.totalorder %s37, 0
      %p295 = por %p293, %p294
      %s297 = sadd.s32 %s296, 1
      %p300 = scmp.eq.s32.totalorder %s31, 1
      %p301 = scmp.ne.s32.totalorder %s296, %s298
      %p302 = scmp.eq.s32.totalorder %s31, 0
      %p303 = por %p301, %p302
      %p304 = scmp.ne.s32.totalorder %s296, %s298
      %p305 = scmp.eq.s32.totalorder %s36, 1
      %p306 = por %p304, %p305
      %p307 = scmp.ne.s32.totalorder %s298, %s299
      %p308 = scmp.eq.s32.totalorder %s36, 0
      %p309 = por %p307, %p308
      %p310 = scmp.ne.s32.totalorder %s298, %s299
      %p311 = scmp.eq.s32.totalorder %s37, 1
      %p312 = por %p310, %p311
      %p314 = scmp.ne.s32.totalorder %s299, %s313
      %p315 = scmp.eq.s32.totalorder %s37, 0
      %p316 = por %p314, %p315
      %s318 = sadd.s32 %s317, 1
      %p321 = scmp.eq.s32.totalorder %s31, 1
      %p322 = scmp.ne.s32.totalorder %s317, %s319
      %p323 = scmp.eq.s32.totalorder %s31, 0
      %p324 = por %p322, %p323
      %p325 = scmp.ne.s32.totalorder %s317, %s319
      %p326 = scmp.eq.s32.totalorder %s36, 1
      %p327 = por %p325, %p326
      %p328 = scmp.ne.s32.totalorder %s319, %s320
      %p329 = scmp.eq.s32.totalorder %s36, 0
      %p330 = por %p328, %p329
      %p331 = scmp.ne.s32.totalorder %s319, %s320
      %p332 = scmp.eq.s32.totalorder %s37, 1
      %p333 = por %p331, %p332
      %p335 = scmp.ne.s32.totalorder %s320, %s334
      %p336 = scmp.eq.s32.totalorder %s37, 0
      %p337 = por %p335, %p336
      %s339 = sadd.s32 %s338, 1
      %p342 = scmp.eq.s32.totalorder %s31, 1
      %p343 = scmp.ne.s32.totalorder %s338, %s340
      %p344 = scmp.eq.s32.totalorder %s31, 0
      %p345 = por %p343, %p344
      %p346 = scmp.ne.s32.totalorder %s338, %s340
      %p347 = scmp.eq.s32.totalorder %s36, 1
      %p348 = por %p346, %p347
      %p349 = scmp.ne.s32.totalorder %s340, %s341
      %p350 = scmp.eq.s32.totalorder %s36, 0
      %p351 = por %p349, %p350
      %p352 = scmp.ne.s32.totalorder %s340, %s341
      %p353 = scmp.eq.s32.totalorder %s37, 1
      %p354 = por %p352, %p353
      %p356 = scmp.ne.s32.totalorder %s341, %s355
      %p357 = scmp.eq.s32.totalorder %s37, 0
      %p358 = por %p356, %p357
      %s360 = sadd.s32 %s359, 1
      %p363 = scmp.eq.s32.totalorder %s31, 1
      %p364 = scmp.ne.s32.totalorder %s359, %s361
      %p365 = scmp.eq.s32.totalorder %s31, 0
      %p366 = por %p364, %p365
      %p367 = scmp.ne.s32.totalorder %s359, %s361
      %p368 = scmp.eq.s32.totalorder %s36, 1
      %p369 = por %p367, %p368
      %p370 = scmp.ne.s32.totalorder %s361, %s362
      %p371 = scmp.eq.s32.totalorder %s36, 0
      %p372 = por %p370, %p371
      %p373 = scmp.ne.s32.totalorder %s361, %s362
      %p374 = scmp.eq.s32.totalorder %s37, 1
      %p375 = por %p373, %p374
      %p377 = scmp.ne.s32.totalorder %s362, %s376
      %p378 = scmp.eq.s32.totalorder %s37, 0
      %p379 = por %p377, %p378
      %s381 = sadd.s32 %s380, 1
      %p384 = scmp.eq.s32.totalorder %s31, 1
      %p385 = scmp.ne.s32.totalorder %s380, %s382
      %p386 = scmp.eq.s32.totalorder %s31, 0
      %p387 = por %p385, %p386
      %p388 = scmp.ne.s32.totalorder %s380, %s382
      %p389 = scmp.eq.s32.totalorder %s36, 1
      %p390 = por %p388, %p389
      %p391 = scmp.ne.s32.totalorder %s382, %s383
      %p392 = scmp.eq.s32.totalorder %s36, 0
      %p393 = por %p391, %p392
      %p394 = scmp.ne.s32.totalorder %s382, %s383
      %p395 = scmp.eq.s32.totalorder %s37, 1
      %p396 = por %p394, %p395
      %p398 = scmp.ne.s32.totalorder %s383, %s397
      %p399 = scmp.eq.s32.totalorder %s37, 0
      %p400 = por %p398, %p399
      %s401 = ssub.s32 %s31, %s38
      %p402 = scmp.eq.s32.totalorder %s401, 0
      %s404 = sadd.s32 %s403, 1
      %s405 = scalar_select %p402, %s403, %s404
      %p408 = pneg %p402
      %p409 = scmp.eq.s32.totalorder %s31, 1
      %p410 = por %p408, %p409
      %p411 = scmp.ne.s32.totalorder %s403, %s406
      %p412 = scmp.eq.s32.totalorder %s31, 0
      %p413 = por %p411, %p412
      %p414 = scmp.ne.s32.totalorder %s403, %s406
      %p415 = scmp.eq.s32.totalorder %s36, 1
      %p416 = por %p414, %p415
      %p417 = scmp.ne.s32.totalorder %s406, %s407
      %p418 = scmp.eq.s32.totalorder %s36, 0
      %p419 = por %p417, %p418
      %p420 = scmp.ne.s32.totalorder %s406, %s407
      %p421 = scmp.eq.s32.totalorder %s37, 1
      %p422 = por %p420, %p421
      %p424 = scmp.ne.s32.totalorder %s407, %s423
      %p425 = scmp.eq.s32.totalorder %s37, 0
      %p426 = por %p424, %p425
      %p427 = scmp.le.s32.totalorder 1, %s31
      %p428 = scmp.lt.s32.totalorder %s31, 3
      %p429 = pnand %p427, %p428
      %p430 = pneg %p429
      // Predicated region
      $region9: #{tpu_custom_call.1} parent=5 // pred_check
        _
      $region10: #{tpu_custom_call.1} parent=5 // pred_check_branch
        %432 = sbr.rel (%p429) target = $region12
      $region11: #{tpu_custom_call.1} parent=5 // pred_region
        %s433 = ssub.s32 %s31, 1
        // Predicated region
        $region13: #{tpu_custom_call.1} parent=11 // pred_check
          %p434 = pneg %p78
        $region14: #{tpu_custom_call.1} parent=11 // pred_check_branch
          %436 = sbr.rel (%p434) target = $region16
        $region15: #{tpu_custom_call.1} parent=11 // pred_region
          %s438 = ssub.s32 128, 128
          %439 = vsyncadd [#allocation6], %s438
          %s440 = sshll.u32 [#allocation5], 4
          %s441 = int_to_ptr.vmem [resolvable:$true] %s440
          %446 = dma.hbm_to_vmem [thread:$0]  %s1, 128, %s441, [#allocation6], 64, 64, 4
        $region16: #{tpu_custom_call.1} parent=11 // pred_fallthru
          _
        // Predicated region
        $region17: #{tpu_custom_call.1} parent=11 // pred_check
          %p447 = pneg %p99
        $region18: #{tpu_custom_call.1} parent=11 // pred_check_branch
          %449 = sbr.rel (%p447) target = $region20
        $region19: #{tpu_custom_call.1} parent=11 // pred_region
          _
        $region20: #{tpu_custom_call.1} parent=11 // pred_fallthru
          _
        // Predicated region
        $region21: #{tpu_custom_call.1} parent=11 // pred_check
          %p450 = pneg %p120
        $region22: #{tpu_custom_call.1} parent=11 // pred_check_branch
          %452 = sbr.rel (%p450) target = $region24
        $region23: #{tpu_custom_call.1} parent=11 // pred_region
          %s454 = ssub.s32 3072, 3072
          %455 = vsyncadd [#allocation6], %s454
          %s456 = sshll.u32 [#allocation7], 4
          %s457 = int_to_ptr.vmem [resolvable:$true] %s456
          %462 = dma.hbm_to_vmem [thread:$0]  %s3, 3072, %s457, [#allocation6], 192, 192, 12
        $region24: #{tpu_custom_call.1} parent=11 // pred_fallthru
          _
        // Predicated region
        $region25: #{tpu_custom_call.1} parent=11 // pred_check
          %p463 = pneg %p141
        $region26: #{tpu_custom_call.1} parent=11 // pred_check_branch
          %465 = sbr.rel (%p463) target = $region28
        $region27: #{tpu_custom_call.1} parent=11 // pred_region
          _
        $region28: #{tpu_custom_call.1} parent=11 // pred_fallthru
          _
        // Predicated region
        $region29: #{tpu_custom_call.1} parent=11 // pred_check
          %p466 = pneg %p162
        $region30: #{tpu_custom_call.1} parent=11 // pred_check_branch
          %468 = sbr.rel (%p466) target = $region32
        $region31: #{tpu_custom_call.1} parent=11 // pred_region
          _
        $region32: #{tpu_custom_call.1} parent=11 // pred_fallthru
          _
        // Predicated region
        $region33: #{tpu_custom_call.1} parent=11 // pred_check
          %p469 = pneg %p183
        $region34: #{tpu_custom_call.1} parent=11 // pred_check_branch
          %471 = sbr.rel (%p469) target = $region36
        $region35: #{tpu_custom_call.1} parent=11 // pred_region
          _
        $region36: #{tpu_custom_call.1} parent=11 // pred_fallthru
          _
        // Predicated region
        $region37: #{tpu_custom_call.1} parent=11 // pred_check
          %p472 = pneg %p204
        $region38: #{tpu_custom_call.1} parent=11 // pred_check_branch
          %474 = sbr.rel (%p472) target = $region40
        $region39: #{tpu_custom_call.1} parent=11 // pred_region
          _
        $region40: #{tpu_custom_call.1} parent=11 // pred_fallthru
          _
        // Predicated region
        $region41: #{tpu_custom_call.1} parent=11 // pred_check
          %p475 = pneg %p225
        $region42: #{tpu_custom_call.1} parent=11 // pred_check_branch
          %477 = sbr.rel (%p475) target = $region44
        $region43: #{tpu_custom_call.1} parent=11 // pred_region
          _
        $region44: #{tpu_custom_call.1} parent=11 // pred_fallthru
          _
        // Predicated region
        $region45: #{tpu_custom_call.1} parent=11 // pred_check
          %p478 = pneg %p246
        $region46: #{tpu_custom_call.1} parent=11 // pred_check_branch
          %480 = sbr.rel (%p478) target = $region48
        $region47: #{tpu_custom_call.1} parent=11 // pred_region
          %s482 = ssub.s32 16384, 16384
          %483 = vsyncadd [#allocation9], %s482
          %s484 = sshll.u32 [#allocation8], 4
          %s485 = int_to_ptr.vmem [resolvable:$true] %s484
          %490 = dma.hbm_to_vmem [thread:$0]  %s9, 16384, %s485, [#allocation9], 1024, 1024, 64
        $region48: #{tpu_custom_call.1} parent=11 // pred_fallthru
          _
        // Predicated region
        $region49: #{tpu_custom_call.1} parent=11 // pred_check
          %p491 = pneg %p267
        $region50: #{tpu_custom_call.1} parent=11 // pred_check_branch
          %493 = sbr.rel (%p491) target = $region52
        $region51: #{tpu_custom_call.1} parent=11 // pred_region
          _
        $region52: #{tpu_custom_call.1} parent=11 // pred_fallthru
          _
        // Predicated region
        $region53: #{tpu_custom_call.1} parent=11 // pred_check
          %p494 = pneg %p288
        $region54: #{tpu_custom_call.1} parent=11 // pred_check_branch
          %496 = sbr.rel (%p494) target = $region56
        $region55: #{tpu_custom_call.1} parent=11 // pred_region
          %s498 = ssub.s32 16384, 16384
          %499 = vsyncadd [#allocation9], %s498
          %s500 = sshll.u32 [#allocation10], 4
          %s501 = int_to_ptr.vmem [resolvable:$true] %s500
          %506 = dma.hbm_to_vmem [thread:$0]  %s11, 16384, %s501, [#allocation9], 64, 64, 4
        $region56: #{tpu_custom_call.1} parent=11 // pred_fallthru
          _
        // Predicated region
        $region57: #{tpu_custom_call.1} parent=11 // pred_check
          %p507 = pneg %p309
        $region58: #{tpu_custom_call.1} parent=11 // pred_check_branch
          %509 = sbr.rel (%p507) target = $region60
        $region59: #{tpu_custom_call.1} parent=11 // pred_region
          _
        $region60: #{tpu_custom_call.1} parent=11 // pred_fallthru
          _
        // Predicated region
        $region61: #{tpu_custom_call.1} parent=11 // pred_check
          %p510 = pneg %p330
        $region62: #{tpu_custom_call.1} parent=11 // pred_check_branch
          %512 = sbr.rel (%p510) target = $region64
        $region63: #{tpu_custom_call.1} parent=11 // pred_region
          _
        $region64: #{tpu_custom_call.1} parent=11 // pred_fallthru
          _
        // Predicated region
        $region65: #{tpu_custom_call.1} parent=11 // pred_check
          %p513 = pneg %p351
        $region66: #{tpu_custom_call.1} parent=11 // pred_check_branch
          %515 = sbr.rel (%p513) target = $region68
        $region67: #{tpu_custom_call.1} parent=11 // pred_region
          _
        $region68: #{tpu_custom_call.1} parent=11 // pred_fallthru
          _
        // Predicated region
        $region69: #{tpu_custom_call.1} parent=11 // pred_check
          %p516 = pneg %p372
        $region70: #{tpu_custom_call.1} parent=11 // pred_check_branch
          %518 = sbr.rel (%p516) target = $region72
        $region71: #{tpu_custom_call.1} parent=11 // pred_region
          _
        $region72: #{tpu_custom_call.1} parent=11 // pred_fallthru
          _
        // Predicated region
        $region73: #{tpu_custom_call.1} parent=11 // pred_check
          %p519 = pneg %p393
        $region74: #{tpu_custom_call.1} parent=11 // pred_check_branch
          %521 = sbr.rel (%p519) target = $region76
        $region75: #{tpu_custom_call.1} parent=11 // pred_region
          _
        $region76: #{tpu_custom_call.1} parent=11 // pred_fallthru
          _
      $region12: #{tpu_custom_call.1} parent=5 // pred_fallthru
        _
      %p522 = scmp.lt.s32.totalorder %s31, 2
      // Predicated region
      $region77: #{tpu_custom_call.1} parent=5 // pred_check
        %p523 = pneg %p522
      $region78: #{tpu_custom_call.1} parent=5 // pred_check_branch
        %525 = sbr.rel (%p523) target = $region80
      $region79: #{tpu_custom_call.1} parent=5 // pred_region
        // Predicated region
        $region81: #{tpu_custom_call.1} parent=79 // pred_check
          %p526 = pneg %p51
        $region82: #{tpu_custom_call.1} parent=79 // pred_check_branch
          %528 = sbr.rel (%p526) target = $region84
        $region83: #{tpu_custom_call.1} parent=79 // pred_region
          %s529 = sand.u32 %s41, 1
          %s530 = scalar_lea.sflag [#allocation3], %s529
          %s531 = sand.u32 %s41, 1
          %s532 = smul.addr %s531, 16
          %s533 = scalar_lea.vmem [#allocation2], %s532
          %s534 = smul.u32 2, %s31
          %s536 = ssub.s32 256, 256
          %537 = vsyncadd %s530, %s536
          %s538 = smul.addr %s534, 128
          %s539 = scalar_lea.hbm %s0, %s538
          %s540 = sshll.u32 %s533, 4
          %s541 = int_to_ptr.vmem [resolvable:$true] %s540
          %546 = dma.hbm_to_vmem [thread:$0]  %s539, 256, %s541, %s530, 128, 128, 8
        $region84: #{tpu_custom_call.1} parent=79 // pred_fallthru
          _
      $region80: #{tpu_custom_call.1} parent=5 // pred_fallthru
        _
      %p547 = scmp.le.s32.totalorder 1, %s31
      %p548 = scmp.lt.s32.totalorder %s31, 3
      %p549 = pnand %p547, %p548
      %p550 = pneg %p549
      // Predicated region
      $region85: #{tpu_custom_call.1} parent=5 // pred_check
        _
      $region86: #{tpu_custom_call.1} parent=5 // pred_check_branch
        %552 = sbr.rel (%p549) target = $region88
      $region87: #{tpu_custom_call.1} parent=5 // pred_region
        %s553 = ssub.s32 %s31, 1
        %s554 = sand.u32 %s44, 1
        %s555 = scalar_lea.sflag [#allocation3], %s554
        %s556 = sand.u32 %s44, 1
        %s557 = smul.addr %s556, 16
        %s558 = scalar_lea.vmem [#allocation2], %s557
        // Predicated region
        $region89: #{tpu_custom_call.1} parent=87 // pred_check
          %p559 = pneg %p57
        $region90: #{tpu_custom_call.1} parent=87 // pred_check_branch
          %561 = sbr.rel (%p559) target = $region92
        $region91: #{tpu_custom_call.1} parent=87 // pred_region
          %562 = dma.done %s555, 256
        $region92: #{tpu_custom_call.1} parent=87 // pred_fallthru
          _
        // Predicated region
        $region93: #{tpu_custom_call.1} parent=87 // pred_check
          %p563 = pneg %p78
        $region94: #{tpu_custom_call.1} parent=87 // pred_check_branch
          %565 = sbr.rel (%p563) target = $region96
        $region95: #{tpu_custom_call.1} parent=87 // pred_region
          %566 = dma.done [#allocation6], 128
        $region96: #{tpu_custom_call.1} parent=87 // pred_fallthru
          _
        // Predicated region
        $region97: #{tpu_custom_call.1} parent=87 // pred_check
          %p567 = pneg %p120
        $region98: #{tpu_custom_call.1} parent=87 // pred_check_branch
          %569 = sbr.rel (%p567) target = $region100
        $region99: #{tpu_custom_call.1} parent=87 // pred_region
          %570 = dma.done [#allocation6], 3072
        $region100: #{tpu_custom_call.1} parent=87 // pred_fallthru
          _
        // Predicated region
        $region101: #{tpu_custom_call.1} parent=87 // pred_check
          %p571 = pneg %p246
        $region102: #{tpu_custom_call.1} parent=87 // pred_check_branch
          %573 = sbr.rel (%p571) target = $region104
        $region103: #{tpu_custom_call.1} parent=87 // pred_region
          %574 = dma.done [#allocation9], 16384
        $region104: #{tpu_custom_call.1} parent=87 // pred_fallthru
          _
        // Predicated region
        $region105: #{tpu_custom_call.1} parent=87 // pred_check
          %p575 = pneg %p288
        $region106: #{tpu_custom_call.1} parent=87 // pred_check_branch
          %577 = sbr.rel (%p575) target = $region108
        $region107: #{tpu_custom_call.1} parent=87 // pred_region
          %578 = dma.done [#allocation9], 16384
        $region108: #{tpu_custom_call.1} parent=87 // pred_fallthru
          _
        %s579 = sand.u32 %s44, 1
        %s580 = scalar_lea.sflag [#allocation3], %s579
        %s581 = sand.u32 %s44, 1
        %s582 = smul.addr %s581, 16
        %s583 = scalar_lea.vmem [#allocation2], %s582
        %p584 = pneg %p57
        %p585 = pneg %p54
        %p586 = pneg %p78
        %p587 = pneg %p75
        %p588 = pneg %p99
        %p589 = pneg %p96
        %p590 = pneg %p120
        %p591 = pneg %p117
        %p592 = pneg %p141
        %p593 = pneg %p138
        %p594 = pneg %p162
        %p595 = pneg %p159
        %p596 = pneg %p183
        %p597 = pneg %p180
        %p598 = pneg %p204
        %p599 = pneg %p201
        %p600 = pneg %p225
        %p601 = pneg %p222
        %p602 = pneg %p246
        %p603 = pneg %p243
        %p604 = pneg %p267
        %p605 = pneg %p264
        %p606 = pneg %p288
        %p607 = pneg %p285
        %p608 = pneg %p309
        %p609 = pneg %p306
        %p610 = pneg %p330
        %p611 = pneg %p327
        %p612 = pneg %p351
        %p613 = pneg %p348
        %p614 = pneg %p372
        %p615 = pneg %p369
        %p616 = pneg %p393
        %p617 = pneg %p390
        %p618 = pneg %p419
        %p619 = pneg %p416
        %s620 = sand.u32 %s406, 1
        %s621 = scalar_lea.sflag [#allocation4], %s620
        %s622 = sand.u32 %s406, 1
        %s623 = smul.addr %s622, 2
        %s624 = scalar_lea.vmem [#allocation11], %s623
        %s625 = smul.u32 2, %s36
        %s626 = smul.u32 2, %s36
        %v628 = vld [vmem:[%s558] sm:$0xff]
        %v629 = vld [vmem:[%s558 + $0x8] sm:$0xff]
        %v630 = vpack.c.bf16 %v629, %v628
        %v631 = vld [vmem:[#allocation5] sm:$0xf]
        %v632 = vld [vmem:[#allocation5 + $0x4] sm:$0xf]
        %v633 = vld [vmem:[%s2] sm:$0x1]
        %v635 = vlaneseq
        %v636 = vshrl.u32 %v635, 7
        %v637 = vsub.s32 0, %v636
        %v638 = vrot.slane %v633, %v637
        %v642 = vunpack.c.l.b16 %v631
        %v643 = vunpack.c.l.b16 %v632
        %v644 = vpack.c.b16 %v643, %v642
        %vm646 = vcmask 130048
        %v648 = vsel %vm646, %v630, 0
        %650 = vmatprep.subr.bf16.mxu0 0
        %651 = vmatpush1.bf16.msra.mxu0 %v644
        %652 = vmatprep.subr.bf16.mxu0 0
        %653 = vmatpush1.bf16.msra.mxu0 0
        %654 = vmatprep.subr.bf16.mxu0 0
        %655 = vmatpush1.bf16.msra.mxu0 0
        %656 = vmatprep.subr.bf16.mxu0 0
        %657 = vmatpush1.bf16.msra.mxu0 0
        %658 = vmatprep.subr.bf16.mxu0 0
        %659 = vmatpush1.bf16.msra.mxu0 0
        %660 = vmatprep.subr.bf16.mxu0 0
        %661 = vmatpush1.bf16.msra.mxu0 0
        %662 = vmatprep.subr.bf16.mxu0 0
        %663 = vmatpush1.bf16.msra.mxu0 0
        %664 = vmatprep.subr.bf16.mxu0 0
        %665 = vmatpush1.bf16.msra.mxu0 0
        %666 = vmatprep.subr.bf16.mxu0 0
        %667 = vmatpush1.bf16.msra.mxu0 0
        %668 = vmatprep.subr.bf16.mxu0 0
        %669 = vmatpush1.bf16.msra.mxu0 0
        %670 = vmatprep.subr.bf16.mxu0 0
        %671 = vmatpush1.bf16.msra.mxu0 0
        %672 = vmatprep.subr.bf16.mxu0 0
        %673 = vmatpush1.bf16.msra.mxu0 0
        %674 = vmatprep.subr.bf16.mxu0 0
        %675 = vmatpush1.bf16.msra.mxu0 0
        %676 = vmatprep.subr.bf16.mxu0 0
        %677 = vmatpush1.bf16.msra.mxu0 0
        %678 = vmatprep.subr.bf16.mxu0 0
        %679 = vmatpush1.bf16.msra.mxu0 0
        %680 = vmatprep.subr.bf16.mxu0 0
        %681 = vmatpush1.bf16.msra.mxu0 0
        %682 = vmatprep.mubr.bf16.mxu0 0
        %683 = vmatmul.mubr.bf16.gmra.mrb[0].mxu0 %v648
        %v684 = vpop.f32.mrb[0].mxu0
        %v685 = vadd.f32 %v638, %v684
        %v686 = vpop.f32.mrb[0].mxu0
        %v687 = vpop.f32.mrb[0].mxu0
        %v688 = vadd.f32 %v638, %v687
        %v689 = vpop.f32.mrb[0].mxu0
        %690 = vdwg.mxu0
        %691 = vadd.xlane.f32.xlu0 %v685
        %v692 = vpop.xlane.xlu0 %691
        %693 = vadd.xlane.f32.xlu0 %v688
        %v694 = vpop.xlane.xlu0 %693
        %v695 = vlaneseq
        %v696 = vand.u32 %v695, 127
        %vm697 = vcmp.eq.f32.partialorder %v692, 0.0
        %vm698 = vcmp.eq.f32.partialorder %v694, 0.0
        %vm699 = vcmp.ne.s32.totalorder %v696, 0
        %v700 = vsel %vm699, 1, 0
        %702 = vbcast.lane.b32.xlu0 %v700, 256
        %v703 = vpop.permute.xlu0 %702
        %vm704 = vcmp.ne.s32.totalorder %v703, 0
        %vm705 = vmand %vm697, %vm704
        %vm706 = vmand %vm698, %vm704
        %v707 = vsel %vm705, -1e+30, 0.0
        %v708 = vsel %vm706, -1e+30, 0.0
        %v709 = vlaneseq
        %v710 = vshrl.u32 %v709, 7
        %vm711 = vcmp.ne.s32.totalorder %v710, 0
        %vm712 = vmand %vm697, %vm711
        %vm713 = vmand %vm698, %vm711
        %vm714 = vmxor %vm712, 1
        %vm715 = vmxor %vm713, 1
        %v716 = vpack.c.bf16 %v688, %v685
        %v717 = vld [vmem:[#allocation7] sm:$0xff]
        %v718 = vld [vmem:[#allocation7 + $0x8] sm:$0xf]
        %v719 = vld [vmem:[#allocation7 + $0xc] sm:$0xff]
        %v720 = vld [vmem:[#allocation7 + $0x14] sm:$0xf]
        %v721 = vld [vmem:[#allocation7 + $0x18] sm:$0xff]
        %v722 = vld [vmem:[#allocation7 + $0x20] sm:$0xf]
        %v723 = vld [vmem:[#allocation7 + $0x24] sm:$0xff]
        %v724 = vld [vmem:[#allocation7 + $0x2c] sm:$0xf]
        %v725 = vld [vmem:[#allocation7 + $0x30] sm:$0xff]
        %v726 = vld [vmem:[#allocation7 + $0x38] sm:$0xf]
        %v727 = vld [vmem:[#allocation7 + $0x3c] sm:$0xff]
        %v728 = vld [vmem:[#allocation7 + $0x44] sm:$0xf]
        %v729 = vld [vmem:[#allocation7 + $0x48] sm:$0xff]
        %v730 = vld [vmem:[#allocation7 + $0x50] sm:$0xf]
        %v731 = vld [vmem:[#allocation7 + $0x54] sm:$0xff]
        %v732 = vld [vmem:[#allocation7 + $0x5c] sm:$0xf]
        %v733 = vld [vmem:[#allocation7 + $0x60] sm:$0xff]
        %v734 = vld [vmem:[#allocation7 + $0x68] sm:$0xf]
        %v735 = vld [vmem:[#allocation7 + $0x6c] sm:$0xff]
        %v736 = vld [vmem:[#allocation7 + $0x74] sm:$0xf]
        %v737 = vld [vmem:[#allocation7 + $0x78] sm:$0xff]
        %v738 = vld [vmem:[#allocation7 + $0x80] sm:$0xf]
        %v739 = vld [vmem:[#allocation7 + $0x84] sm:$0xff]
        %v740 = vld [vmem:[#allocation7 + $0x8c] sm:$0xf]
        %v741 = vld [vmem:[#allocation7 + $0x90] sm:$0xff]
        %v742 = vld [vmem:[#allocation7 + $0x98] sm:$0xf]
        %v743 = vld [vmem:[#allocation7 + $0x9c] sm:$0xff]
        %v744 = vld [vmem:[#allocation7 + $0xa4] sm:$0xf]
        %v745 = vld [vmem:[#allocation7 + $0xa8] sm:$0xff]
        %v746 = vld [vmem:[#allocation7 + $0xb0] sm:$0xf]
        %v747 = vld [vmem:[#allocation7 + $0xb4] sm:$0xff]
        %v748 = vld [vmem:[#allocation7 + $0xbc] sm:$0xf]
        %v749 = vld [vmem:[%s4] sm:$0x7]
        %v751 = vlaneseq
        %v752 = vshrl.u32 %v751, 7
        %v753 = vsub.s32 0, %v752
        %v754 = vrot.slane %v749, %v753
        %v755 = vlaneseq
        %v756 = vshrl.u32 %v755, 7
        %v757 = vsub.s32 1, %v756
        %v758 = vrot.slane %v749, %v757
        %v759 = vlaneseq
        %v760 = vshrl.u32 %v759, 7
        %v761 = vsub.s32 2, %v760
        %v762 = vrot.slane %v749, %v761
        %v798 = vunpack.c.l.b16 %v717
        %v799 = vunpack.c.h.b16 %v717
        %v800 = vunpack.c.l.b16 %v718
        %v801 = vunpack.c.l.b16 %v719
        %v802 = vunpack.c.h.b16 %v719
        %v803 = vunpack.c.l.b16 %v720
        %v804 = vunpack.c.l.b16 %v721
        %v805 = vunpack.c.h.b16 %v721
        %v806 = vunpack.c.l.b16 %v722
        %v807 = vunpack.c.l.b16 %v723
        %v808 = vunpack.c.h.b16 %v723
        %v809 = vunpack.c.l.b16 %v724
        %v810 = vunpack.c.l.b16 %v725
        %v811 = vunpack.c.h.b16 %v725
        %v812 = vunpack.c.l.b16 %v726
        %v813 = vunpack.c.l.b16 %v727
        %v814 = vunpack.c.h.b16 %v727
        %v815 = vunpack.c.l.b16 %v728
        %v816 = vunpack.c.l.b16 %v729
        %v817 = vunpack.c.h.b16 %v729
        %v818 = vunpack.c.l.b16 %v730
        %v819 = vunpack.c.l.b16 %v731
        %v820 = vunpack.c.h.b16 %v731
        %v821 = vunpack.c.l.b16 %v732
        %v822 = vunpack.c.l.b16 %v733
        %v823 = vunpack.c.h.b16 %v733
        %v824 = vunpack.c.l.b16 %v734
        %v825 = vunpack.c.l.b16 %v735
        %v826 = vunpack.c.h.b16 %v735
        %v827 = vunpack.c.l.b16 %v736
        %v828 = vunpack.c.l.b16 %v737
        %v829 = vunpack.c.h.b16 %v737
        %v830 = vunpack.c.l.b16 %v738
        %v831 = vunpack.c.l.b16 %v739
        %v832 = vunpack.c.h.b16 %v739
        %v833 = vunpack.c.l.b16 %v740
        %v834 = vunpack.c.l.b16 %v741
        %v835 = vunpack.c.h.b16 %v741
        %v836 = vunpack.c.l.b16 %v742
        %v837 = vunpack.c.l.b16 %v743
        %v838 = vunpack.c.h.b16 %v743
        %v839 = vunpack.c.l.b16 %v744
        %v840 = vunpack.c.l.b16 %v745
        %v841 = vunpack.c.h.b16 %v745
        %v842 = vunpack.c.l.b16 %v746
        %v843 = vunpack.c.l.b16 %v747
        %v844 = vunpack.c.h.b16 %v747
        %v845 = vunpack.c.l.b16 %v748
        %v846 = vpack.c.b16 %v801, %v798
        %v847 = vpack.c.b16 %v802, %v799
        %v848 = vpack.c.b16 %v803, %v800
        %v849 = vpack.c.b16 %v807, %v804
        %v850 = vpack.c.b16 %v808, %v805
        %v851 = vpack.c.b16 %v809, %v806
        %v852 = vpack.c.b16 %v813, %v810
        %v853 = vpack.c.b16 %v814, %v811
        %v854 = vpack.c.b16 %v815, %v812
        %v855 = vpack.c.b16 %v819, %v816
        %v856 = vpack.c.b16 %v820, %v817
        %v857 = vpack.c.b16 %v821, %v818
        %v858 = vpack.c.b16 %v825, %v822
        %v859 = vpack.c.b16 %v826, %v823
        %v860 = vpack.c.b16 %v827, %v824
        %v861 = vpack.c.b16 %v831, %v828
        %v862 = vpack.c.b16 %v832, %v829
        %v863 = vpack.c.b16 %v833, %v830
        %v864 = vpack.c.b16 %v837, %v834
        %v865 = vpack.c.b16 %v838, %v835
        %v866 = vpack.c.b16 %v839, %v836
        %v867 = vpack.c.b16 %v843, %v840
        %v868 = vpack.c.b16 %v844, %v841
        %v869 = vpack.c.b16 %v845, %v842
        %894 = vmatprep.subr.bf16.mxu0 %v847
        %895 = vmatpush1.bf16.msra.mxu0 %v846
        %896 = vmatprep.subr.bf16.mxu0 %v850
        %897 = vmatpush1.bf16.msra.mxu0 %v849
        %898 = vmatprep.subr.bf16.mxu0 %v853
        %899 = vmatpush1.bf16.msra.mxu0 %v852
        %900 = vmatprep.subr.bf16.mxu0 %v856
        %901 = vmatpush1.bf16.msra.mxu0 %v855
        %902 = vmatprep.subr.bf16.mxu0 %v859
        %903 = vmatpush1.bf16.msra.mxu0 %v858
        %904 = vmatprep.subr.bf16.mxu0 %v862
        %905 = vmatpush1.bf16.msra.mxu0 %v861
        %906 = vmatprep.subr.bf16.mxu0 %v865
        %907 = vmatpush1.bf16.msra.mxu0 %v864
        %908 = vmatprep.subr.bf16.mxu0 %v868
        %909 = vmatpush1.bf16.msra.mxu0 %v867
        %910 = vmatprep.subr.bf16.mxu0 0
        %911 = vmatpush1.bf16.msra.mxu0 0
        %912 = vmatprep.subr.bf16.mxu0 0
        %913 = vmatpush1.bf16.msra.mxu0 0
        %914 = vmatprep.subr.bf16.mxu0 0
        %915 = vmatpush1.bf16.msra.mxu0 0
        %916 = vmatprep.subr.bf16.mxu0 0
        %917 = vmatpush1.bf16.msra.mxu0 0
        %918 = vmatprep.subr.bf16.mxu0 0
        %919 = vmatpush1.bf16.msra.mxu0 0
        %920 = vmatprep.subr.bf16.mxu0 0
        %921 = vmatpush1.bf16.msra.mxu0 0
        %922 = vmatprep.subr.bf16.mxu0 0
        %923 = vmatpush1.bf16.msra.mxu0 0
        %924 = vmatprep.subr.bf16.mxu0 0
        %925 = vmatpush1.bf16.msra.mxu0 0
        %926 = vmatprep.mubr.bf16.mxu0 0
        %927 = vmatmul.mubr.bf16.gmra.mrb[0].mxu0 %v716
        %v928 = vpop.f32.mrb[0].mxu0
        %v929 = vadd.f32 %v754, %v928
        %v930 = vpop.f32.mrb[0].mxu0
        %v931 = vadd.f32 %v758, %v930
        %v932 = vpop.f32.mrb[0].mxu0
        %v933 = vadd.f32 %v754, %v932
        %v934 = vpop.f32.mrb[0].mxu0
        %v935 = vadd.f32 %v758, %v934
        %936 = vdwg.mxu0
        %937 = vmatprep.subr.bf16.mxu0 0
        %938 = vmatpush1.bf16.msra.mxu0 %v848
        %939 = vmatprep.subr.bf16.mxu0 0
        %940 = vmatpush1.bf16.msra.mxu0 %v851
        %941 = vmatprep.subr.bf16.mxu0 0
        %942 = vmatpush1.bf16.msra.mxu0 %v854
        %943 = vmatprep.subr.bf16.mxu0 0
        %944 = vmatpush1.bf16.msra.mxu0 %v857
        %945 = vmatprep.subr.bf16.mxu0 0
        %946 = vmatpush1.bf16.msra.mxu0 %v860
        %947 = vmatprep.subr.bf16.mxu0 0
        %948 = vmatpush1.bf16.msra.mxu0 %v863
        %949 = vmatprep.subr.bf16.mxu0 0
        %950 = vmatpush1.bf16.msra.mxu0 %v866
        %951 = vmatprep.subr.bf16.mxu0 0
        %952 = vmatpush1.bf16.msra.mxu0 %v869
        %953 = vmatprep.subr.bf16.mxu0 0
        %954 = vmatpush1.bf16.msra.mxu0 0
        %955 = vmatprep.subr.bf16.mxu0 0
        %956 = vmatpush1.bf16.msra.mxu0 0
        %957 = vmatprep.subr.bf16.mxu0 0
        %958 = vmatpush1.bf16.msra.mxu0 0
        %959 = vmatprep.subr.bf16.mxu0 0
        %960 = vmatpush1.bf16.msra.mxu0 0
        %961 = vmatprep.subr.bf16.mxu0 0
        %962 = vmatpush1.bf16.msra.mxu0 0
        %963 = vmatprep.subr.bf16.mxu0 0
        %964 = vmatpush1.bf16.msra.mxu0 0
        %965 = vmatprep.subr.bf16.mxu0 0
        %966 = vmatpush1.bf16.msra.mxu0 0
        %967 = vmatprep.subr.bf16.mxu0 0
        %968 = vmatpush1.bf16.msra.mxu0 0
        %969 = vmatprep.mubr.bf16.mxu0 0
        %970 = vmatmul.mubr.bf16.gmra.mrb[0].mxu0 %v716
        %v971 = vpop.f32.mrb[0].mxu0
        %v972 = vadd.f32 %v762, %v971
        %v973 = vpop.f32.mrb[0].mxu0
        %v974 = vpop.f32.mrb[0].mxu0
        %v975 = vadd.f32 %v762, %v974
        %v976 = vpop.f32.mrb[0].mxu0
        %977 = vdwg.mxu0
        %v978 = vmul.f32 %v929, 0.25
        %v979 = vmul.f32 %v933, 0.25
        %v980 = vpack.c.bf16 %v978, %v978
        %v981 = vpack.c.bf16 %v979, %v979
        %v982 = vpack.c.bf16 %v931, %v931
        %v983 = vpack.c.bf16 %v935, %v935
        %v984 = vpack.c.bf16 %v972, %v972
        %v985 = vpack.c.bf16 %v975, %v975
        %987 = vset.pattern.permute.xlu0 0
        %988 = vperm.xlu0 %987, %v707
        %v989 = vpop.permute.xlu0 %988
        %v990 = vlaneseq
        %v991 = vshrl.u32 %v990, 7
        %v992 = vsub.s32 %v696, %v991
        %v993 = vrot.slane %v989, %v992
        %vm994 = vcmask 1041409
        %vm995 = vcmask 1042434
        %v996 = vsel %vm995, %v993, %v993
        %vm997 = vcmask 1043459
        %v998 = vsel %vm997, %v993, %v996
        %vm999 = vcmask 1044484
        %v1000 = vsel %vm999, %v993, %v998
        %vm1001 = vcmask 1045509
        %v1002 = vsel %vm1001, %v993, %v1000
        %vm1003 = vcmask 1046534
        %v1004 = vsel %vm1003, %v993, %v1002
        %vm1005 = vcmask 1047559
        %v1006 = vsel %vm1005, %v993, %v1004
        %v1009 = vsel %vm646, %v980, 0
        %v1012 = vsel %vm646, %v982, 0
        %1014 = vmatprep.subr.bf16.mxu0 0
        %1015 = vmatpush1.bf16.xpose.msra.mxu0 %v1012
        %1016 = vmatprep.subr.bf16.mxu0 0
        %1017 = vmatpush1.bf16.xpose.msra.mxu0 0
        %1018 = vmatprep.subr.bf16.mxu0 0
        %1019 = vmatpush1.bf16.xpose.msra.mxu0 0
        %1020 = vmatprep.subr.bf16.mxu0 0
        %1021 = vmatpush1.bf16.xpose.msra.mxu0 0
        %1022 = vmatprep.subr.bf16.mxu0 0
        %1023 = vmatpush1.bf16.xpose.msra.mxu0 0
        %1024 = vmatprep.subr.bf16.mxu0 0
        %1025 = vmatpush1.bf16.xpose.msra.mxu0 0
        %1026 = vmatprep.subr.bf16.mxu0 0
        %1027 = vmatpush1.bf16.xpose.msra.mxu0 0
        %1028 = vmatprep.subr.bf16.mxu0 0
        %1029 = vmatpush1.bf16.xpose.msra.mxu0 0
        %1030 = vmatprep.subr.bf16.mxu0 0
        %1031 = vmatpush1.bf16.xpose.msra.mxu0 0
        %1032 = vmatprep.subr.bf16.mxu0 0
        %1033 = vmatpush1.bf16.xpose.msra.mxu0 0
        %1034 = vmatprep.subr.bf16.mxu0 0
        %1035 = vmatpush1.bf16.xpose.msra.mxu0 0
        %1036 = vmatprep.subr.bf16.mxu0 0
        %1037 = vmatpush1.bf16.xpose.msra.mxu0 0
        %1038 = vmatprep.subr.bf16.mxu0 0
        %1039 = vmatpush1.bf16.xpose.msra.mxu0 0
        %1040 = vmatprep.subr.bf16.mxu0 0
        %1041 = vmatpush1.bf16.xpose.msra.mxu0 0
        %1042 = vmatprep.subr.bf16.mxu0 0
        %1043 = vmatpush1.bf16.xpose.msra.mxu0 0
        %1044 = vmatprep.subr.bf16.mxu0 0
        %1045 = vmatpush1.bf16.xpose.msra.mxu0 0
        %1046 = vmatprep.mubr.bf16.mxu0 0
        %1047 = vmatmul.mubr.bf16.gmra.mrb[0].mxu0 %v1009
        %v1048 = vpop.f32.mrb[0].mxu0
        %v1049 = vadd.f32 %v1006, %v1048
        %v1050 = vpop.f32.mrb[0].mxu0
        %v1051 = vpop.f32.mrb[0].mxu0
        %v1052 = vpop.f32.mrb[0].mxu0
        %1053 = vdwg.mxu0
        %1055 = vset.pattern.permute.xlu0 0
        %1056 = vperm.xlu0 %1055, %v708
        %v1057 = vpop.permute.xlu0 %1056
        %v1058 = vlaneseq
        %v1059 = vshrl.u32 %v1058, 7
        %v1060 = vsub.s32 %v696, %v1059
        %v1061 = vrot.slane %v1057, %v1060
        %v1062 = vsel %vm995, %v1061, %v1061
        %v1063 = vsel %vm997, %v1061, %v1062
        %v1064 = vsel %vm999, %v1061, %v1063
        %v1065 = vsel %vm1001, %v1061, %v1064
        %v1066 = vsel %vm1003, %v1061, %v1065
        %v1067 = vsel %vm1005, %v1061, %v1066
        %v1070 = vsel %vm646, %v981, 0
        %v1073 = vsel %vm646, %v983, 0
        %1075 = vmatprep.subr.bf16.mxu0 0
        %1076 = vmatpush1.bf16.xpose.msra.mxu0 %v1073
        %1077 = vmatprep.subr.bf16.mxu0 0
        %1078 = vmatpush1.bf16.xpose.msra.mxu0 0
        %1079 = vmatprep.subr.bf16.mxu0 0
        %1080 = vmatpush1.bf16.xpose.msra.mxu0 0
        %1081 = vmatprep.subr.bf16.mxu0 0
        %1082 = vmatpush1.bf16.xpose.msra.mxu0 0
        %1083 = vmatprep.subr.bf16.mxu0 0
        %1084 = vmatpush1.bf16.xpose.msra.mxu0 0
        %1085 = vmatprep.subr.bf16.mxu0 0
        %1086 = vmatpush1.bf16.xpose.msra.mxu0 0
        %1087 = vmatprep.subr.bf16.mxu0 0
        %1088 = vmatpush1.bf16.xpose.msra.mxu0 0
        %1089 = vmatprep.subr.bf16.mxu0 0
        %1090 = vmatpush1.bf16.xpose.msra.mxu0 0
        %1091 = vmatprep.subr.bf16.mxu0 0
        %1092 = vmatpush1.bf16.xpose.msra.mxu0 0
        %1093 = vmatprep.subr.bf16.mxu0 0
        %1094 = vmatpush1.bf16.xpose.msra.mxu0 0
        %1095 = vmatprep.subr.bf16.mxu0 0
        %1096 = vmatpush1.bf16.xpose.msra.mxu0 0
        %1097 = vmatprep.subr.bf16.mxu0 0
        %1098 = vmatpush1.bf16.xpose.msra.mxu0 0
        %1099 = vmatprep.subr.bf16.mxu0 0
        %1100 = vmatpush1.bf16.xpose.msra.mxu0 0
        %1101 = vmatprep.subr.bf16.mxu0 0
        %1102 = vmatpush1.bf16.xpose.msra.mxu0 0
        %1103 = vmatprep.subr.bf16.mxu0 0
        %1104 = vmatpush1.bf16.xpose.msra.mxu0 0
        %1105 = vmatprep.subr.bf16.mxu0 0
        %1106 = vmatpush1.bf16.xpose.msra.mxu0 0
        %1107 = vmatprep.mubr.bf16.mxu0 0
        %1108 = vmatmul.mubr.bf16.gmra.mrb[0].mxu0 %v1070
        %v1109 = vpop.f32.mrb[0].mxu0
        %v1110 = vadd.f32 %v1067, %v1109
        %v1111 = vpop.f32.mrb[0].mxu0
        %v1112 = vpop.f32.mrb[0].mxu0
        %v1113 = vpop.f32.mrb[0].mxu0
        %1114 = vdwg.mxu0
        %vm1115 = vcmask 64512
        %v1116 = vsel %vm1115, %v1049, -inf
        %1117 = vmax.xlane.f32.xlu0 %v1116
        %v1118 = vpop.xlane.xlu0 %1117
        %v1119 = vsel %vm1115, %v1110, -inf
        %1120 = vmax.xlane.f32.xlu0 %v1119
        %v1121 = vpop.xlane.xlu0 %1120
        %v1122 = vsub.f32 %v1049, %v1118
        %v1123 = vsub.f32 %v1110, %v1121
        %v1124 = vmul.f32 %v1122, 1.442695
        %v1125 = vpow.pop %v1124
        %v1126 = vmul.f32 %v1123, 1.442695
        %v1127 = vpow.pop %v1126
        %v1128 = vsel %vm1115, %v1125, 0.0
        %1129 = vadd.xlane.f32.xlu0 %v1128
        %v1130 = vpop.xlane.xlu0 %1129
        %v1131 = vsel %vm1115, %v1127, 0.0
        %1132 = vadd.xlane.f32.xlu0 %v1131
        %v1133 = vpop.xlane.xlu0 %1132
        %v1134 = vrcp.pop %v1130
        %v1135 = vrcp.pop %v1133
        %v1136 = vmul.f32 %v1125, %v1134
        %v1137 = vmul.f32 %v1127, %v1135
        %v1138 = vpack.c.bf16 %v1136, %v1136
        %v1139 = vpack.c.bf16 %v1137, %v1137
        %v1141 = vsel %vm1115, %v1138, 0
        %vm1143 = vcmask 1043456
        %v1145 = vsel %vm1143, %v984, 0
        %1147 = vmatprep.subr.bf16.mxu0 0
        %1148 = vmatpush1.bf16.msra.mxu0 %v1145
        %1149 = vmatprep.subr.bf16.mxu0 0
        %1150 = vmatpush1.bf16.msra.mxu0 0
        %1151 = vmatprep.subr.bf16.mxu0 0
        %1152 = vmatpush1.bf16.msra.mxu0 0
        %1153 = vmatprep.subr.bf16.mxu0 0
        %1154 = vmatpush1.bf16.msra.mxu0 0
        %1155 = vmatprep.subr.bf16.mxu0 0
        %1156 = vmatpush1.bf16.msra.mxu0 0
        %1157 = vmatprep.subr.bf16.mxu0 0
        %1158 = vmatpush1.bf16.msra.mxu0 0
        %1159 = vmatprep.subr.bf16.mxu0 0
        %1160 = vmatpush1.bf16.msra.mxu0 0
        %1161 = vmatprep.subr.bf16.mxu0 0
        %1162 = vmatpush1.bf16.msra.mxu0 0
        %1163 = vmatprep.subr.bf16.mxu0 0
        %1164 = vmatpush1.bf16.msra.mxu0 0
        %1165 = vmatprep.subr.bf16.mxu0 0
        %1166 = vmatpush1.bf16.msra.mxu0 0
        %1167 = vmatprep.subr.bf16.mxu0 0
        %1168 = vmatpush1.bf16.msra.mxu0 0
        %1169 = vmatprep.subr.bf16.mxu0 0
        %1170 = vmatpush1.bf16.msra.mxu0 0
        %1171 = vmatprep.subr.bf16.mxu0 0
        %1172 = vmatpush1.bf16.msra.mxu0 0
        %1173 = vmatprep.subr.bf16.mxu0 0
        %1174 = vmatpush1.bf16.msra.mxu0 0
        %1175 = vmatprep.subr.bf16.mxu0 0
        %1176 = vmatpush1.bf16.msra.mxu0 0
        %1177 = vmatprep.subr.bf16.mxu0 0
        %1178 = vmatpush1.bf16.msra.mxu0 0
        %1179 = vmatprep.mubr.bf16.mxu0 0
        %1180 = vmatmul.mubr.bf16.gmra.mrb[0].mxu0 %v1141
        %v1181 = vpop.f32.mrb[0].mxu0
        %v1182 = vadd.f32 0.0, %v1181
        %v1183 = vpop.f32.mrb[0].mxu0
        %v1184 = vpop.f32.mrb[0].mxu0
        %v1185 = vpop.f32.mrb[0].mxu0
        %1186 = vdwg.mxu0
        %v1188 = vsel %vm1115, %v1139, 0
        %v1191 = vsel %vm1143, %v985, 0
        %1193 = vmatprep.subr.bf16.mxu0 0
        %1194 = vmatpush1.bf16.msra.mxu0 %v1191
        %1195 = vmatprep.subr.bf16.mxu0 0
        %1196 = vmatpush1.bf16.msra.mxu0 0
        %1197 = vmatprep.subr.bf16.mxu0 0
        %1198 = vmatpush1.bf16.msra.mxu0 0
        %1199 = vmatprep.subr.bf16.mxu0 0
        %1200 = vmatpush1.bf16.msra.mxu0 0
        %1201 = vmatprep.subr.bf16.mxu0 0
        %1202 = vmatpush1.bf16.msra.mxu0 0
        %1203 = vmatprep.subr.bf16.mxu0 0
        %1204 = vmatpush1.bf16.msra.mxu0 0
        %1205 = vmatprep.subr.bf16.mxu0 0
        %1206 = vmatpush1.bf16.msra.mxu0 0
        %1207 = vmatprep.subr.bf16.mxu0 0
        %1208 = vmatpush1.bf16.msra.mxu0 0
        %1209 = vmatprep.subr.bf16.mxu0 0
        %1210 = vmatpush1.bf16.msra.mxu0 0
        %1211 = vmatprep.subr.bf16.mxu0 0
        %1212 = vmatpush1.bf16.msra.mxu0 0
        %1213 = vmatprep.subr.bf16.mxu0 0
        %1214 = vmatpush1.bf16.msra.mxu0 0
        %1215 = vmatprep.subr.bf16.mxu0 0
        %1216 = vmatpush1.bf16.msra.mxu0 0
        %1217 = vmatprep.subr.bf16.mxu0 0
        %1218 = vmatpush1.bf16.msra.mxu0 0
        %1219 = vmatprep.subr.bf16.mxu0 0
        %1220 = vmatpush1.bf16.msra.mxu0 0
        %1221 = vmatprep.subr.bf16.mxu0 0
        %1222 = vmatpush1.bf16.msra.mxu0 0
        %1223 = vmatprep.subr.bf16.mxu0 0
        %1224 = vmatpush1.bf16.msra.mxu0 0
        %1225 = vmatprep.mubr.bf16.mxu0 0
        %1226 = vmatmul.mubr.bf16.gmra.mrb[0].mxu0 %v1188
        %v1227 = vpop.f32.mrb[0].mxu0
        %v1228 = vadd.f32 0.0, %v1227
        %v1229 = vpop.f32.mrb[0].mxu0
        %v1230 = vpop.f32.mrb[0].mxu0
        %v1231 = vpop.f32.mrb[0].mxu0
        %1232 = vdwg.mxu0
        %1234 = vrot.lane.b32.xlu0 %v980, 112
        %v1235 = vpop.permute.xlu0 %1234
        %1237 = vrot.lane.b32.xlu0 %v982, 112
        %v1238 = vpop.permute.xlu0 %1237
        %v1240 = vsel %vm646, %v1235, 0
        %v1243 = vsel %vm646, %v1238, 0
        %1245 = vmatprep.subr.bf16.mxu0 0
        %1246 = vmatpush1.bf16.xpose.msra.mxu0 %v1243
        %1247 = vmatprep.subr.bf16.mxu0 0
        %1248 = vmatpush1.bf16.xpose.msra.mxu0 0
        %1249 = vmatprep.subr.bf16.mxu0 0
        %1250 = vmatpush1.bf16.xpose.msra.mxu0 0
        %1251 = vmatprep.subr.bf16.mxu0 0
        %1252 = vmatpush1.bf16.xpose.msra.mxu0 0
        %1253 = vmatprep.subr.bf16.mxu0 0
        %1254 = vmatpush1.bf16.xpose.msra.mxu0 0
        %1255 = vmatprep.subr.bf16.mxu0 0
        %1256 = vmatpush1.bf16.xpose.msra.mxu0 0
        %1257 = vmatprep.subr.bf16.mxu0 0
        %1258 = vmatpush1.bf16.xpose.msra.mxu0 0
        %1259 = vmatprep.subr.bf16.mxu0 0
        %1260 = vmatpush1.bf16.xpose.msra.mxu0 0
        %1261 = vmatprep.subr.bf16.mxu0 0
        %1262 = vmatpush1.bf16.xpose.msra.mxu0 0
        %1263 = vmatprep.subr.bf16.mxu0 0
        %1264 = vmatpush1.bf16.xpose.msra.mxu0 0
        %1265 = vmatprep.subr.bf16.mxu0 0
        %1266 = vmatpush1.bf16.xpose.msra.mxu0 0
        %1267 = vmatprep.subr.bf16.mxu0 0
        %1268 = vmatpush1.bf16.xpose.msra.mxu0 0
        %1269 = vmatprep.subr.bf16.mxu0 0
        %1270 = vmatpush1.bf16.xpose.msra.mxu0 0
        %1271 = vmatprep.subr.bf16.mxu0 0
        %1272 = vmatpush1.bf16.xpose.msra.mxu0 0
        %1273 = vmatprep.subr.bf16.mxu0 0
        %1274 = vmatpush1.bf16.xpose.msra.mxu0 0
        %1275 = vmatprep.subr.bf16.mxu0 0
        %1276 = vmatpush1.bf16.xpose.msra.mxu0 0
        %1277 = vmatprep.mubr.bf16.mxu0 0
        %1278 = vmatmul.mubr.bf16.gmra.mrb[0].mxu0 %v1240
        %v1279 = vpop.f32.mrb[0].mxu0
        %v1280 = vadd.f32 %v1006, %v1279
        %v1281 = vpop.f32.mrb[0].mxu0
        %v1282 = vpop.f32.mrb[0].mxu0
        %v1283 = vpop.f32.mrb[0].mxu0
        %1284 = vdwg.mxu0
        %1286 = vrot.lane.b32.xlu0 %v981, 112
        %v1287 = vpop.permute.xlu0 %1286
        %1289 = vrot.lane.b32.xlu0 %v983, 112
        %v1290 = vpop.permute.xlu0 %1289
        %v1292 = vsel %vm646, %v1287, 0
        %v1295 = vsel %vm646, %v1290, 0
        %1297 = vmatprep.subr.bf16.mxu0 0
        %1298 = vmatpush1.bf16.xpose.msra.mxu0 %v1295
        %1299 = vmatprep.subr.bf16.mxu0 0
        %1300 = vmatpush1.bf16.xpose.msra.mxu0 0
        %1301 = vmatprep.subr.bf16.mxu0 0
        %1302 = vmatpush1.bf16.xpose.msra.mxu0 0
        %1303 = vmatprep.subr.bf16.mxu0 0
        %1304 = vmatpush1.bf16.xpose.msra.mxu0 0
        %1305 = vmatprep.subr.bf16.mxu0 0
        %1306 = vmatpush1.bf16.xpose.msra.mxu0 0
        %1307 = vmatprep.subr.bf16.mxu0 0
        %1308 = vmatpush1.bf16.xpose.msra.mxu0 0
        %1309 = vmatprep.subr.bf16.mxu0 0
        %1310 = vmatpush1.bf16.xpose.msra.mxu0 0
        %1311 = vmatprep.subr.bf16.mxu0 0
        %1312 = vmatpush1.bf16.xpose.msra.mxu0 0
        %1313 = vmatprep.subr.bf16.mxu0 0
        %1314 = vmatpush1.bf16.xpose.msra.mxu0 0
        %1315 = vmatprep.subr.bf16.mxu0 0
        %1316 = vmatpush1.bf16.xpose.msra.mxu0 0
        %1317 = vmatprep.subr.bf16.mxu0 0
        %1318 = vmatpush1.bf16.xpose.msra.mxu0 0
        %1319 = vmatprep.subr.bf16.mxu0 0
        %1320 = vmatpush1.bf16.xpose.msra.mxu0 0
        %1321 = vmatprep.subr.bf16.mxu0 0
        %1322 = vmatpush1.bf16.xpose.msra.mxu0 0
        %1323 = vmatprep.subr.bf16.mxu0 0
        %1324 = vmatpush1.bf16.xpose.msra.mxu0 0
        %1325 = vmatprep.subr.bf16.mxu0 0
        %1326 = vmatpush1.bf16.xpose.msra.mxu0 0
        %1327 = vmatprep.subr.bf16.mxu0 0
        %1328 = vmatpush1.bf16.xpose.msra.mxu0 0
        %1329 = vmatprep.mubr.bf16.mxu0 0
        %1330 = vmatmul.mubr.bf16.gmra.mrb[0].mxu0 %v1292
        %v1331 = vpop.f32.mrb[0].mxu0
        %v1332 = vadd.f32 %v1067, %v1331
        %v1333 = vpop.f32.mrb[0].mxu0
        %v1334 = vpop.f32.mrb[0].mxu0
        %v1335 = vpop.f32.mrb[0].mxu0
        %1336 = vdwg.mxu0
        %v1337 = vsel %vm1115, %v1280, -inf
        %1338 = vmax.xlane.f32.xlu0 %v1337
        %v1339 = vpop.xlane.xlu0 %1338
        %v1340 = vsel %vm1115, %v1332, -inf
        %1341 = vmax.xlane.f32.xlu0 %v1340
        %v1342 = vpop.xlane.xlu0 %1341
        %v1343 = vsub.f32 %v1280, %v1339
        %v1344 = vsub.f32 %v1332, %v1342
        %v1345 = vmul.f32 %v1343, 1.442695
        %v1346 = vpow.pop %v1345
        %v1347 = vmul.f32 %v1344, 1.442695
        %v1348 = vpow.pop %v1347
        %v1349 = vsel %vm1115, %v1346, 0.0
        %1350 = vadd.xlane.f32.xlu0 %v1349
        %v1351 = vpop.xlane.xlu0 %1350
        %v1352 = vsel %vm1115, %v1348, 0.0
        %1353 = vadd.xlane.f32.xlu0 %v1352
        %v1354 = vpop.xlane.xlu0 %1353
        %v1355 = vrcp.pop %v1351
        %v1356 = vrcp.pop %v1354
        %v1357 = vmul.f32 %v1346, %v1355
        %v1358 = vmul.f32 %v1348, %v1356
        %v1359 = vpack.c.bf16 %v1357, %v1357
        %v1360 = vpack.c.bf16 %v1358, %v1358
        %1362 = vrot.lane.b32.xlu0 %v984, 112
        %v1363 = vpop.permute.xlu0 %1362
        %v1365 = vsel %vm1115, %v1359, 0
        %v1368 = vsel %vm1143, %v1363, 0
        %1370 = vmatprep.subr.bf16.mxu0 0
        %1371 = vmatpush1.bf16.msra.mxu0 %v1368
        %1372 = vmatprep.subr.bf16.mxu0 0
        %1373 = vmatpush1.bf16.msra.mxu0 0
        %1374 = vmatprep.subr.bf16.mxu0 0
        %1375 = vmatpush1.bf16.msra.mxu0 0
        %1376 = vmatprep.subr.bf16.mxu0 0
        %1377 = vmatpush1.bf16.msra.mxu0 0
        %1378 = vmatprep.subr.bf16.mxu0 0
        %1379 = vmatpush1.bf16.msra.mxu0 0
        %1380 = vmatprep.subr.bf16.mxu0 0
        %1381 = vmatpush1.bf16.msra.mxu0 0
        %1382 = vmatprep.subr.bf16.mxu0 0
        %1383 = vmatpush1.bf16.msra.mxu0 0
        %1384 = vmatprep.subr.bf16.mxu0 0
        %1385 = vmatpush1.bf16.msra.mxu0 0
        %1386 = vmatprep.subr.bf16.mxu0 0
        %1387 = vmatpush1.bf16.msra.mxu0 0
        %1388 = vmatprep.subr.bf16.mxu0 0
        %1389 = vmatpush1.bf16.msra.mxu0 0
        %1390 = vmatprep.subr.bf16.mxu0 0
        %1391 = vmatpush1.bf16.msra.mxu0 0
        %1392 = vmatprep.subr.bf16.mxu0 0
        %1393 = vmatpush1.bf16.msra.mxu0 0
        %1394 = vmatprep.subr.bf16.mxu0 0
        %1395 = vmatpush1.bf16.msra.mxu0 0
        %1396 = vmatprep.subr.bf16.mxu0 0
        %1397 = vmatpush1.bf16.msra.mxu0 0
        %1398 = vmatprep.subr.bf16.mxu0 0
        %1399 = vmatpush1.bf16.msra.mxu0 0
        %1400 = vmatprep.subr.bf16.mxu0 0
        %1401 = vmatpush1.bf16.msra.mxu0 0
        %1402 = vmatprep.mubr.bf16.mxu0 0
        %1403 = vmatmul.mubr.bf16.gmra.mrb[0].mxu0 %v1365
        %v1404 = vpop.f32.mrb[0].mxu0
        %v1405 = vadd.f32 0.0, %v1404
        %v1406 = vpop.f32.mrb[0].mxu0
        %v1407 = vpop.f32.mrb[0].mxu0
        %v1408 = vpop.f32.mrb[0].mxu0
        %1409 = vdwg.mxu0
        %1411 = vrot.lane.b32.xlu0 %v985, 112
        %v1412 = vpop.permute.xlu0 %1411
        %v1414 = vsel %vm1115, %v1360, 0
        %v1417 = vsel %vm1143, %v1412, 0
        %1419 = vmatprep.subr.bf16.mxu0 0
        %1420 = vmatpush1.bf16.msra.mxu0 %v1417
        %1421 = vmatprep.subr.bf16.mxu0 0
        %1422 = vmatpush1.bf16.msra.mxu0 0
        %1423 = vmatprep.subr.bf16.mxu0 0
        %1424 = vmatpush1.bf16.msra.mxu0 0
        %1425 = vmatprep.subr.bf16.mxu0 0
        %1426 = vmatpush1.bf16.msra.mxu0 0
        %1427 = vmatprep.subr.bf16.mxu0 0
        %1428 = vmatpush1.bf16.msra.mxu0 0
        %1429 = vmatprep.subr.bf16.mxu0 0
        %1430 = vmatpush1.bf16.msra.mxu0 0
        %1431 = vmatprep.subr.bf16.mxu0 0
        %1432 = vmatpush1.bf16.msra.mxu0 0
        %1433 = vmatprep.subr.bf16.mxu0 0
        %1434 = vmatpush1.bf16.msra.mxu0 0
        %1435 = vmatprep.subr.bf16.mxu0 0
        %1436 = vmatpush1.bf16.msra.mxu0 0
        %1437 = vmatprep.subr.bf16.mxu0 0
        %1438 = vmatpush1.bf16.msra.mxu0 0
        %1439 = vmatprep.subr.bf16.mxu0 0
        %1440 = vmatpush1.bf16.msra.mxu0 0
        %1441 = vmatprep.subr.bf16.mxu0 0
        %1442 = vmatpush1.bf16.msra.mxu0 0
        %1443 = vmatprep.subr.bf16.mxu0 0
        %1444 = vmatpush1.bf16.msra.mxu0 0
        %1445 = vmatprep.subr.bf16.mxu0 0
        %1446 = vmatpush1.bf16.msra.mxu0 0
        %1447 = vmatprep.subr.bf16.mxu0 0
        %1448 = vmatpush1.bf16.msra.mxu0 0
        %1449 = vmatprep.subr.bf16.mxu0 0
        %1450 = vmatpush1.bf16.msra.mxu0 0
        %1451 = vmatprep.mubr.bf16.mxu0 0
        %1452 = vmatmul.mubr.bf16.gmra.mrb[0].mxu0 %v1414
        %v1453 = vpop.f32.mrb[0].mxu0
        %v1454 = vadd.f32 0.0, %v1453
        %v1455 = vpop.f32.mrb[0].mxu0
        %v1456 = vpop.f32.mrb[0].mxu0
        %v1457 = vpop.f32.mrb[0].mxu0
        %1458 = vdwg.mxu0
        %1459 = vrot.lane.b32.xlu0 %v980, 96
        %v1460 = vpop.permute.xlu0 %1459
        %1461 = vrot.lane.b32.xlu0 %v982, 96
        %v1462 = vpop.permute.xlu0 %1461
        %v1464 = vsel %vm646, %v1460, 0
        %v1467 = vsel %vm646, %v1462, 0
        %1469 = vmatprep.subr.bf16.mxu0 0
        %1470 = vmatpush1.bf16.xpose.msra.mxu0 %v1467
        %1471 = vmatprep.subr.bf16.mxu0 0
        %1472 = vmatpush1.bf16.xpose.msra.mxu0 0
        %1473 = vmatprep.subr.bf16.mxu0 0
        %1474 = vmatpush1.bf16.xpose.msra.mxu0 0
        %1475 = vmatprep.subr.bf16.mxu0 0
        %1476 = vmatpush1.bf16.xpose.msra.mxu0 0
        %1477 = vmatprep.subr.bf16.mxu0 0
        %1478 = vmatpush1.bf16.xpose.msra.mxu0 0
        %1479 = vmatprep.subr.bf16.mxu0 0
        %1480 = vmatpush1.bf16.xpose.msra.mxu0 0
        %1481 = vmatprep.subr.bf16.mxu0 0
        %1482 = vmatpush1.bf16.xpose.msra.mxu0 0
        %1483 = vmatprep.subr.bf16.mxu0 0
        %1484 = vmatpush1.bf16.xpose.msra.mxu0 0
        %1485 = vmatprep.subr.bf16.mxu0 0
        %1486 = vmatpush1.bf16.xpose.msra.mxu0 0
        %1487 = vmatprep.subr.bf16.mxu0 0
        %1488 = vmatpush1.bf16.xpose.msra.mxu0 0
        %1489 = vmatprep.subr.bf16.mxu0 0
        %1490 = vmatpush1.bf16.xpose.msra.mxu0 0
        %1491 = vmatprep.subr.bf16.mxu0 0
        %1492 = vmatpush1.bf16.xpose.msra.mxu0 0
        %1493 = vmatprep.subr.bf16.mxu0 0
        %1494 = vmatpush1.bf16.xpose.msra.mxu0 0
        %1495 = vmatprep.subr.bf16.mxu0 0
        %1496 = vmatpush1.bf16.xpose.msra.mxu0 0
        %1497 = vmatprep.subr.bf16.mxu0 0
        %1498 = vmatpush1.bf16.xpose.msra.mxu0 0
        %1499 = vmatprep.subr.bf16.mxu0 0
        %1500 = vmatpush1.bf16.xpose.msra.mxu0 0
        %1501 = vmatprep.mubr.bf16.mxu0 0
        %1502 = vmatmul.mubr.bf16.gmra.mrb[0].mxu0 %v1464
        %v1503 = vpop.f32.mrb[0].mxu0
        %v1504 = vadd.f32 %v1006, %v1503
        %v1505 = vpop.f32.mrb[0].mxu0
        %v1506 = vpop.f32.mrb[0].mxu0
        %v1507 = vpop.f32.mrb[0].mxu0
        %1508 = vdwg.mxu0
        %1509 = vrot.lane.b32.xlu0 %v981, 96
        %v1510 = vpop.permute.xlu0 %1509
        %1511 = vrot.lane.b32.xlu0 %v983, 96
        %v1512 = vpop.permute.xlu0 %1511
        %v1514 = vsel %vm646, %v1510, 0
        %v1517 = vsel %vm646, %v1512, 0
        %1519 = vmatprep.subr.bf16.mxu0 0
        %1520 = vmatpush1.bf16.xpose.msra.mxu0 %v1517
        %1521 = vmatprep.subr.bf16.mxu0 0
        %1522 = vmatpush1.bf16.xpose.msra.mxu0 0
        %1523 = vmatprep.subr.bf16.mxu0 0
        %1524 = vmatpush1.bf16.xpose.msra.mxu0 0
        %1525 = vmatprep.subr.bf16.mxu0 0
        %1526 = vmatpush1.bf16.xpose.msra.mxu0 0
        %1527 = vmatprep.subr.bf16.mxu0 0
        %1528 = vmatpush1.bf16.xpose.msra.mxu0 0
        %1529 = vmatprep.subr.bf16.mxu0 0
        %1530 = vmatpush1.bf16.xpose.msra.mxu0 0
        %1531 = vmatprep.subr.bf16.mxu0 0
        %1532 = vmatpush1.bf16.xpose.msra.mxu0 0
        %1533 = vmatprep.subr.bf16.mxu0 0
        %1534 = vmatpush1.bf16.xpose.msra.mxu0 0
        %1535 = vmatprep.subr.bf16.mxu0 0
        %1536 = vmatpush1.bf16.xpose.msra.mxu0 0
        %1537 = vmatprep.subr.bf16.mxu0 0
        %1538 = vmatpush1.bf16.xpose.msra.mxu0 0
        %1539 = vmatprep.subr.bf16.mxu0 0
        %1540 = vmatpush1.bf16.xpose.msra.mxu0 0
        %1541 = vmatprep.subr.bf16.mxu0 0
        %1542 = vmatpush1.bf16.xpose.msra.mxu0 0
        %1543 = vmatprep.subr.bf16.mxu0 0
        %1544 = vmatpush1.bf16.xpose.msra.mxu0 0
        %1545 = vmatprep.subr.bf16.mxu0 0
        %1546 = vmatpush1.bf16.xpose.msra.mxu0 0
        %1547 = vmatprep.subr.bf16.mxu0 0
        %1548 = vmatpush1.bf16.xpose.msra.mxu0 0
        %1549 = vmatprep.subr.bf16.mxu0 0
        %1550 = vmatpush1.bf16.xpose.msra.mxu0 0
        %1551 = vmatprep.mubr.bf16.mxu0 0
        %1552 = vmatmul.mubr.bf16.gmra.mrb[0].mxu0 %v1514
        %v1553 = vpop.f32.mrb[0].mxu0
        %v1554 = vadd.f32 %v1067, %v1553
        %v1555 = vpop.f32.mrb[0].mxu0
        %v1556 = vpop.f32.mrb[0].mxu0
        %v1557 = vpop.f32.mrb[0].mxu0
        %1558 = vdwg.mxu0
        %v1559 = vsel %vm1115, %v1504, -inf
        %1560 = vmax.xlane.f32.xlu0 %v1559
        %v1561 = vpop.xlane.xlu0 %1560
        %v1562 = vsel %vm1115, %v1554, -inf
        %1563 = vmax.xlane.f32.xlu0 %v1562
        %v1564 = vpop.xlane.xlu0 %1563
        %v1565 = vsub.f32 %v1504, %v1561
        %v1566 = vsub.f32 %v1554, %v1564
        %v1567 = vmul.f32 %v1565, 1.442695
        %v1568 = vpow.pop %v1567
        %v1569 = vmul.f32 %v1566, 1.442695
        %v1570 = vpow.pop %v1569
        %v1571 = vsel %vm1115, %v1568, 0.0
        %1572 = vadd.xlane.f32.xlu0 %v1571
        %v1573 = vpop.xlane.xlu0 %1572
        %v1574 = vsel %vm1115, %v1570, 0.0
        %1575 = vadd.xlane.f32.xlu0 %v1574
        %v1576 = vpop.xlane.xlu0 %1575
        %v1577 = vrcp.pop %v1573
        %v1578 = vrcp.pop %v1576
        %v1579 = vmul.f32 %v1568, %v1577
        %v1580 = vmul.f32 %v1570, %v1578
        %v1581 = vpack.c.bf16 %v1579, %v1579
        %v1582 = vpack.c.bf16 %v1580, %v1580
        %1583 = vrot.lane.b32.xlu0 %v984, 96
        %v1584 = vpop.permute.xlu0 %1583
        %v1586 = vsel %vm1115, %v1581, 0
        %v1589 = vsel %vm1143, %v1584, 0
        %1591 = vmatprep.subr.bf16.mxu0 0
        %1592 = vmatpush1.bf16.msra.mxu0 %v1589
        %1593 = vmatprep.subr.bf16.mxu0 0
        %1594 = vmatpush1.bf16.msra.mxu0 0
        %1595 = vmatprep.subr.bf16.mxu0 0
        %1596 = vmatpush1.bf16.msra.mxu0 0
        %1597 = vmatprep.subr.bf16.mxu0 0
        %1598 = vmatpush1.bf16.msra.mxu0 0
        %1599 = vmatprep.subr.bf16.mxu0 0
        %1600 = vmatpush1.bf16.msra.mxu0 0
        %1601 = vmatprep.subr.bf16.mxu0 0
        %1602 = vmatpush1.bf16.msra.mxu0 0
        %1603 = vmatprep.subr.bf16.mxu0 0
        %1604 = vmatpush1.bf16.msra.mxu0 0
        %1605 = vmatprep.subr.bf16.mxu0 0
        %1606 = vmatpush1.bf16.msra.mxu0 0
        %1607 = vmatprep.subr.bf16.mxu0 0
        %1608 = vmatpush1.bf16.msra.mxu0 0
        %1609 = vmatprep.subr.bf16.mxu0 0
        %1610 = vmatpush1.bf16.msra.mxu0 0
        %1611 = vmatprep.subr.bf16.mxu0 0
        %1612 = vmatpush1.bf16.msra.mxu0 0
        %1613 = vmatprep.subr.bf16.mxu0 0
        %1614 = vmatpush1.bf16.msra.mxu0 0
        %1615 = vmatprep.subr.bf16.mxu0 0
        %1616 = vmatpush1.bf16.msra.mxu0 0
        %1617 = vmatprep.subr.bf16.mxu0 0
        %1618 = vmatpush1.bf16.msra.mxu0 0
        %1619 = vmatprep.subr.bf16.mxu0 0
        %1620 = vmatpush1.bf16.msra.mxu0 0
        %1621 = vmatprep.subr.bf16.mxu0 0
        %1622 = vmatpush1.bf16.msra.mxu0 0
        %1623 = vmatprep.mubr.bf16.mxu0 0
        %1624 = vmatmul.mubr.bf16.gmra.mrb[0].mxu0 %v1586
        %v1625 = vpop.f32.mrb[0].mxu0
        %v1626 = vadd.f32 0.0, %v1625
        %v1627 = vpop.f32.mrb[0].mxu0
        %v1628 = vpop.f32.mrb[0].mxu0
        %v1629 = vpop.f32.mrb[0].mxu0
        %1630 = vdwg.mxu0
        %1631 = vrot.lane.b32.xlu0 %v985, 96
        %v1632 = vpop.permute.xlu0 %1631
        %v1634 = vsel %vm1115, %v1582, 0
        %v1637 = vsel %vm1143, %v1632, 0
        %1639 = vmatprep.subr.bf16.mxu0 0
        %1640 = vmatpush1.bf16.msra.mxu0 %v1637
        %1641 = vmatprep.subr.bf16.mxu0 0
        %1642 = vmatpush1.bf16.msra.mxu0 0
        %1643 = vmatprep.subr.bf16.mxu0 0
        %1644 = vmatpush1.bf16.msra.mxu0 0
        %1645 = vmatprep.subr.bf16.mxu0 0
        %1646 = vmatpush1.bf16.msra.mxu0 0
        %1647 = vmatprep.subr.bf16.mxu0 0
        %1648 = vmatpush1.bf16.msra.mxu0 0
        %1649 = vmatprep.subr.bf16.mxu0 0
        %1650 = vmatpush1.bf16.msra.mxu0 0
        %1651 = vmatprep.subr.bf16.mxu0 0
        %1652 = vmatpush1.bf16.msra.mxu0 0
        %1653 = vmatprep.subr.bf16.mxu0 0
        %1654 = vmatpush1.bf16.msra.mxu0 0
        %1655 = vmatprep.subr.bf16.mxu0 0
        %1656 = vmatpush1.bf16.msra.mxu0 0
        %1657 = vmatprep.subr.bf16.mxu0 0
        %1658 = vmatpush1.bf16.msra.mxu0 0
        %1659 = vmatprep.subr.bf16.mxu0 0
        %1660 = vmatpush1.bf16.msra.mxu0 0
        %1661 = vmatprep.subr.bf16.mxu0 0
        %1662 = vmatpush1.bf16.msra.mxu0 0
        %1663 = vmatprep.subr.bf16.mxu0 0
        %1664 = vmatpush1.bf16.msra.mxu0 0
        %1665 = vmatprep.subr.bf16.mxu0 0
        %1666 = vmatpush1.bf16.msra.mxu0 0
        %1667 = vmatprep.subr.bf16.mxu0 0
        %1668 = vmatpush1.bf16.msra.mxu0 0
        %1669 = vmatprep.subr.bf16.mxu0 0
        %1670 = vmatpush1.bf16.msra.mxu0 0
        %1671 = vmatprep.mubr.bf16.mxu0 0
        %1672 = vmatmul.mubr.bf16.gmra.mrb[0].mxu0 %v1634
        %v1673 = vpop.f32.mrb[0].mxu0
        %v1674 = vadd.f32 0.0, %v1673
        %v1675 = vpop.f32.mrb[0].mxu0
        %v1676 = vpop.f32.mrb[0].mxu0
        %v1677 = vpop.f32.mrb[0].mxu0
        %1678 = vdwg.mxu0
        %1679 = vrot.lane.b32.xlu0 %v980, 80
        %v1680 = vpop.permute.xlu0 %1679
        %1681 = vrot.lane.b32.xlu0 %v982, 80
        %v1682 = vpop.permute.xlu0 %1681
        %v1684 = vsel %vm646, %v1680, 0
        %v1687 = vsel %vm646, %v1682, 0
        %1689 = vmatprep.subr.bf16.mxu0 0
        %1690 = vmatpush1.bf16.xpose.msra.mxu0 %v1687
        %1691 = vmatprep.subr.bf16.mxu0 0
        %1692 = vmatpush1.bf16.xpose.msra.mxu0 0
        %1693 = vmatprep.subr.bf16.mxu0 0
        %1694 = vmatpush1.bf16.xpose.msra.mxu0 0
        %1695 = vmatprep.subr.bf16.mxu0 0
        %1696 = vmatpush1.bf16.xpose.msra.mxu0 0
        %1697 = vmatprep.subr.bf16.mxu0 0
        %1698 = vmatpush1.bf16.xpose.msra.mxu0 0
        %1699 = vmatprep.subr.bf16.mxu0 0
        %1700 = vmatpush1.bf16.xpose.msra.mxu0 0
        %1701 = vmatprep.subr.bf16.mxu0 0
        %1702 = vmatpush1.bf16.xpose.msra.mxu0 0
        %1703 = vmatprep.subr.bf16.mxu0 0
        %1704 = vmatpush1.bf16.xpose.msra.mxu0 0
        %1705 = vmatprep.subr.bf16.mxu0 0
        %1706 = vmatpush1.bf16.xpose.msra.mxu0 0
        %1707 = vmatprep.subr.bf16.mxu0 0
        %1708 = vmatpush1.bf16.xpose.msra.mxu0 0
        %1709 = vmatprep.subr.bf16.mxu0 0
        %1710 = vmatpush1.bf16.xpose.msra.mxu0 0
        %1711 = vmatprep.subr.bf16.mxu0 0
        %1712 = vmatpush1.bf16.xpose.msra.mxu0 0
        %1713 = vmatprep.subr.bf16.mxu0 0
        %1714 = vmatpush1.bf16.xpose.msra.mxu0 0
        %1715 = vmatprep.subr.bf16.mxu0 0
        %1716 = vmatpush1.bf16.xpose.msra.mxu0 0
        %1717 = vmatprep.subr.bf16.mxu0 0
        %1718 = vmatpush1.bf16.xpose.msra.mxu0 0
        %1719 = vmatprep.subr.bf16.mxu0 0
        %1720 = vmatpush1.bf16.xpose.msra.mxu0 0
        %1721 = vmatprep.mubr.bf16.mxu0 0
        %1722 = vmatmul.mubr.bf16.gmra.mrb[0].mxu0 %v1684
        %v1723 = vpop.f32.mrb[0].mxu0
        %v1724 = vadd.f32 %v1006, %v1723
        %v1725 = vpop.f32.mrb[0].mxu0
        %v1726 = vpop.f32.mrb[0].mxu0
        %v1727 = vpop.f32.mrb[0].mxu0
        %1728 = vdwg.mxu0
        %1729 = vrot.lane.b32.xlu0 %v981, 80
        %v1730 = vpop.permute.xlu0 %1729
        %1731 = vrot.lane.b32.xlu0 %v983, 80
        %v1732 = vpop.permute.xlu0 %1731
        %v1734 = vsel %vm646, %v1730, 0
        %v1737 = vsel %vm646, %v1732, 0
        %1739 = vmatprep.subr.bf16.mxu0 0
        %1740 = vmatpush1.bf16.xpose.msra.mxu0 %v1737
        %1741 = vmatprep.subr.bf16.mxu0 0
        %1742 = vmatpush1.bf16.xpose.msra.mxu0 0
        %1743 = vmatprep.subr.bf16.mxu0 0
        %1744 = vmatpush1.bf16.xpose.msra.mxu0 0
        %1745 = vmatprep.subr.bf16.mxu0 0
        %1746 = vmatpush1.bf16.xpose.msra.mxu0 0
        %1747 = vmatprep.subr.bf16.mxu0 0
        %1748 = vmatpush1.bf16.xpose.msra.mxu0 0
        %1749 = vmatprep.subr.bf16.mxu0 0
        %1750 = vmatpush1.bf16.xpose.msra.mxu0 0
        %1751 = vmatprep.subr.bf16.mxu0 0
        %1752 = vmatpush1.bf16.xpose.msra.mxu0 0
        %1753 = vmatprep.subr.bf16.mxu0 0
        %1754 = vmatpush1.bf16.xpose.msra.mxu0 0
        %1755 = vmatprep.subr.bf16.mxu0 0
        %1756 = vmatpush1.bf16.xpose.msra.mxu0 0
        %1757 = vmatprep.subr.bf16.mxu0 0
        %1758 = vmatpush1.bf16.xpose.msra.mxu0 0
        %1759 = vmatprep.subr.bf16.mxu0 0
        %1760 = vmatpush1.bf16.xpose.msra.mxu0 0
        %1761 = vmatprep.subr.bf16.mxu0 0
        %1762 = vmatpush1.bf16.xpose.msra.mxu0 0
        %1763 = vmatprep.subr.bf16.mxu0 0
        %1764 = vmatpush1.bf16.xpose.msra.mxu0 0
        %1765 = vmatprep.subr.bf16.mxu0 0
        %1766 = vmatpush1.bf16.xpose.msra.mxu0 0
        %1767 = vmatprep.subr.bf16.mxu0 0
        %1768 = vmatpush1.bf16.xpose.msra.mxu0 0
        %1769 = vmatprep.subr.bf16.mxu0 0
        %1770 = vmatpush1.bf16.xpose.msra.mxu0 0
        %1771 = vmatprep.mubr.bf16.mxu0 0
        %1772 = vmatmul.mubr.bf16.gmra.mrb[0].mxu0 %v1734
        %v1773 = vpop.f32.mrb[0].mxu0
        %v1774 = vadd.f32 %v1067, %v1773
        %v1775 = vpop.f32.mrb[0].mxu0
        %v1776 = vpop.f32.mrb[0].mxu0
        %v1777 = vpop.f32.mrb[0].mxu0
        %1778 = vdwg.mxu0
        %v1779 = vsel %vm1115, %v1724, -inf
        %1780 = vmax.xlane.f32.xlu0 %v1779
        %v1781 = vpop.xlane.xlu0 %1780
        %v1782 = vsel %vm1115, %v1774, -inf
        %1783 = vmax.xlane.f32.xlu0 %v1782
        %v1784 = vpop.xlane.xlu0 %1783
        %v1785 = vsub.f32 %v1724, %v1781
        %v1786 = vsub.f32 %v1774, %v1784
        %v1787 = vmul.f32 %v1785, 1.442695
        %v1788 = vpow.pop %v1787
        %v1789 = vmul.f32 %v1786, 1.442695
        %v1790 = vpow.pop %v1789
        %v1791 = vsel %vm1115, %v1788, 0.0
        %1792 = vadd.xlane.f32.xlu0 %v1791
        %v1793 = vpop.xlane.xlu0 %1792
        %v1794 = vsel %vm1115, %v1790, 0.0
        %1795 = vadd.xlane.f32.xlu0 %v1794
        %v1796 = vpop.xlane.xlu0 %1795
        %v1797 = vrcp.pop %v1793
        %v1798 = vrcp.pop %v1796
        %v1799 = vmul.f32 %v1788, %v1797
        %v1800 = vmul.f32 %v1790, %v1798
        %v1801 = vpack.c.bf16 %v1799, %v1799
        %v1802 = vpack.c.bf16 %v1800, %v1800
        %1803 = vrot.lane.b32.xlu0 %v984, 80
        %v1804 = vpop.permute.xlu0 %1803
        %v1806 = vsel %vm1115, %v1801, 0
        %v1809 = vsel %vm1143, %v1804, 0
        %1811 = vmatprep.subr.bf16.mxu0 0
        %1812 = vmatpush1.bf16.msra.mxu0 %v1809
        %1813 = vmatprep.subr.bf16.mxu0 0
        %1814 = vmatpush1.bf16.msra.mxu0 0
        %1815 = vmatprep.subr.bf16.mxu0 0
        %1816 = vmatpush1.bf16.msra.mxu0 0
        %1817 = vmatprep.subr.bf16.mxu0 0
        %1818 = vmatpush1.bf16.msra.mxu0 0
        %1819 = vmatprep.subr.bf16.mxu0 0
        %1820 = vmatpush1.bf16.msra.mxu0 0
        %1821 = vmatprep.subr.bf16.mxu0 0
        %1822 = vmatpush1.bf16.msra.mxu0 0
        %1823 = vmatprep.subr.bf16.mxu0 0
        %1824 = vmatpush1.bf16.msra.mxu0 0
        %1825 = vmatprep.subr.bf16.mxu0 0
        %1826 = vmatpush1.bf16.msra.mxu0 0
        %1827 = vmatprep.subr.bf16.mxu0 0
        %1828 = vmatpush1.bf16.msra.mxu0 0
        %1829 = vmatprep.subr.bf16.mxu0 0
        %1830 = vmatpush1.bf16.msra.mxu0 0
        %1831 = vmatprep.subr.bf16.mxu0 0
        %1832 = vmatpush1.bf16.msra.mxu0 0
        %1833 = vmatprep.subr.bf16.mxu0 0
        %1834 = vmatpush1.bf16.msra.mxu0 0
        %1835 = vmatprep.subr.bf16.mxu0 0
        %1836 = vmatpush1.bf16.msra.mxu0 0
        %1837 = vmatprep.subr.bf16.mxu0 0
        %1838 = vmatpush1.bf16.msra.mxu0 0
        %1839 = vmatprep.subr.bf16.mxu0 0
        %1840 = vmatpush1.bf16.msra.mxu0 0
        %1841 = vmatprep.subr.bf16.mxu0 0
        %1842 = vmatpush1.bf16.msra.mxu0 0
        %1843 = vmatprep.mubr.bf16.mxu0 0
        %1844 = vmatmul.mubr.bf16.gmra.mrb[0].mxu0 %v1806
        %v1845 = vpop.f32.mrb[0].mxu0
        %v1846 = vadd.f32 0.0, %v1845
        %v1847 = vpop.f32.mrb[0].mxu0
        %v1848 = vpop.f32.mrb[0].mxu0
        %v1849 = vpop.f32.mrb[0].mxu0
        %1850 = vdwg.mxu0
        %1851 = vrot.lane.b32.xlu0 %v985, 80
        %v1852 = vpop.permute.xlu0 %1851
        %v1854 = vsel %vm1115, %v1802, 0
        %v1857 = vsel %vm1143, %v1852, 0
        %1859 = vmatprep.subr.bf16.mxu0 0
        %1860 = vmatpush1.bf16.msra.mxu0 %v1857
        %1861 = vmatprep.subr.bf16.mxu0 0
        %1862 = vmatpush1.bf16.msra.mxu0 0
        %1863 = vmatprep.subr.bf16.mxu0 0
        %1864 = vmatpush1.bf16.msra.mxu0 0
        %1865 = vmatprep.subr.bf16.mxu0 0
        %1866 = vmatpush1.bf16.msra.mxu0 0
        %1867 = vmatprep.subr.bf16.mxu0 0
        %1868 = vmatpush1.bf16.msra.mxu0 0
        %1869 = vmatprep.subr.bf16.mxu0 0
        %1870 = vmatpush1.bf16.msra.mxu0 0
        %1871 = vmatprep.subr.bf16.mxu0 0
        %1872 = vmatpush1.bf16.msra.mxu0 0
        %1873 = vmatprep.subr.bf16.mxu0 0
        %1874 = vmatpush1.bf16.msra.mxu0 0
        %1875 = vmatprep.subr.bf16.mxu0 0
        %1876 = vmatpush1.bf16.msra.mxu0 0
        %1877 = vmatprep.subr.bf16.mxu0 0
        %1878 = vmatpush1.bf16.msra.mxu0 0
        %1879 = vmatprep.subr.bf16.mxu0 0
        %1880 = vmatpush1.bf16.msra.mxu0 0
        %1881 = vmatprep.subr.bf16.mxu0 0
        %1882 = vmatpush1.bf16.msra.mxu0 0
        %1883 = vmatprep.subr.bf16.mxu0 0
        %1884 = vmatpush1.bf16.msra.mxu0 0
        %1885 = vmatprep.subr.bf16.mxu0 0
        %1886 = vmatpush1.bf16.msra.mxu0 0
        %1887 = vmatprep.subr.bf16.mxu0 0
        %1888 = vmatpush1.bf16.msra.mxu0 0
        %1889 = vmatprep.subr.bf16.mxu0 0
        %1890 = vmatpush1.bf16.msra.mxu0 0
        %1891 = vmatprep.mubr.bf16.mxu0 0
        %1892 = vmatmul.mubr.bf16.gmra.mrb[0].mxu0 %v1854
        %v1893 = vpop.f32.mrb[0].mxu0
        %v1894 = vadd.f32 0.0, %v1893
        %v1895 = vpop.f32.mrb[0].mxu0
        %v1896 = vpop.f32.mrb[0].mxu0
        %v1897 = vpop.f32.mrb[0].mxu0
        %1898 = vdwg.mxu0
        %1899 = vrot.lane.b32.xlu0 %v980, 64
        %v1900 = vpop.permute.xlu0 %1899
        %1901 = vrot.lane.b32.xlu0 %v982, 64
        %v1902 = vpop.permute.xlu0 %1901
        %v1904 = vsel %vm646, %v1900, 0
        %v1907 = vsel %vm646, %v1902, 0
        %1909 = vmatprep.subr.bf16.mxu0 0
        %1910 = vmatpush1.bf16.xpose.msra.mxu0 %v1907
        %1911 = vmatprep.subr.bf16.mxu0 0
        %1912 = vmatpush1.bf16.xpose.msra.mxu0 0
        %1913 = vmatprep.subr.bf16.mxu0 0
        %1914 = vmatpush1.bf16.xpose.msra.mxu0 0
        %1915 = vmatprep.subr.bf16.mxu0 0
        %1916 = vmatpush1.bf16.xpose.msra.mxu0 0
        %1917 = vmatprep.subr.bf16.mxu0 0
        %1918 = vmatpush1.bf16.xpose.msra.mxu0 0
        %1919 = vmatprep.subr.bf16.mxu0 0
        %1920 = vmatpush1.bf16.xpose.msra.mxu0 0
        %1921 = vmatprep.subr.bf16.mxu0 0
        %1922 = vmatpush1.bf16.xpose.msra.mxu0 0
        %1923 = vmatprep.subr.bf16.mxu0 0
        %1924 = vmatpush1.bf16.xpose.msra.mxu0 0
        %1925 = vmatprep.subr.bf16.mxu0 0
        %1926 = vmatpush1.bf16.xpose.msra.mxu0 0
        %1927 = vmatprep.subr.bf16.mxu0 0
        %1928 = vmatpush1.bf16.xpose.msra.mxu0 0
        %1929 = vmatprep.subr.bf16.mxu0 0
        %1930 = vmatpush1.bf16.xpose.msra.mxu0 0
        %1931 = vmatprep.subr.bf16.mxu0 0
        %1932 = vmatpush1.bf16.xpose.msra.mxu0 0
        %1933 = vmatprep.subr.bf16.mxu0 0
        %1934 = vmatpush1.bf16.xpose.msra.mxu0 0
        %1935 = vmatprep.subr.bf16.mxu0 0
        %1936 = vmatpush1.bf16.xpose.msra.mxu0 0
        %1937 = vmatprep.subr.bf16.mxu0 0
        %1938 = vmatpush1.bf16.xpose.msra.mxu0 0
        %1939 = vmatprep.subr.bf16.mxu0 0
        %1940 = vmatpush1.bf16.xpose.msra.mxu0 0
        %1941 = vmatprep.mubr.bf16.mxu0 0
        %1942 = vmatmul.mubr.bf16.gmra.mrb[0].mxu0 %v1904
        %v1943 = vpop.f32.mrb[0].mxu0
        %v1944 = vadd.f32 %v1006, %v1943
        %v1945 = vpop.f32.mrb[0].mxu0
        %v1946 = vpop.f32.mrb[0].mxu0
        %v1947 = vpop.f32.mrb[0].mxu0
        %1948 = vdwg.mxu0
        %1949 = vrot.lane.b32.xlu0 %v981, 64
        %v1950 = vpop.permute.xlu0 %1949
        %1951 = vrot.lane.b32.xlu0 %v983, 64
        %v1952 = vpop.permute.xlu0 %1951
        %v1954 = vsel %vm646, %v1950, 0
        %v1957 = vsel %vm646, %v1952, 0
        %1959 = vmatprep.subr.bf16.mxu0 0
        %1960 = vmatpush1.bf16.xpose.msra.mxu0 %v1957
        %1961 = vmatprep.subr.bf16.mxu0 0
        %1962 = vmatpush1.bf16.xpose.msra.mxu0 0
        %1963 = vmatprep.subr.bf16.mxu0 0
        %1964 = vmatpush1.bf16.xpose.msra.mxu0 0
        %1965 = vmatprep.subr.bf16.mxu0 0
        %1966 = vmatpush1.bf16.xpose.msra.mxu0 0
        %1967 = vmatprep.subr.bf16.mxu0 0
        %1968 = vmatpush1.bf16.xpose.msra.mxu0 0
        %1969 = vmatprep.subr.bf16.mxu0 0
        %1970 = vmatpush1.bf16.xpose.msra.mxu0 0
        %1971 = vmatprep.subr.bf16.mxu0 0
        %1972 = vmatpush1.bf16.xpose.msra.mxu0 0
        %1973 = vmatprep.subr.bf16.mxu0 0
        %1974 = vmatpush1.bf16.xpose.msra.mxu0 0
        %1975 = vmatprep.subr.bf16.mxu0 0
        %1976 = vmatpush1.bf16.xpose.msra.mxu0 0
        %1977 = vmatprep.subr.bf16.mxu0 0
        %1978 = vmatpush1.bf16.xpose.msra.mxu0 0
        %1979 = vmatprep.subr.bf16.mxu0 0
        %1980 = vmatpush1.bf16.xpose.msra.mxu0 0
        %1981 = vmatprep.subr.bf16.mxu0 0
        %1982 = vmatpush1.bf16.xpose.msra.mxu0 0
        %1983 = vmatprep.subr.bf16.mxu0 0
        %1984 = vmatpush1.bf16.xpose.msra.mxu0 0
        %1985 = vmatprep.subr.bf16.mxu0 0
        %1986 = vmatpush1.bf16.xpose.msra.mxu0 0
        %1987 = vmatprep.subr.bf16.mxu0 0
        %1988 = vmatpush1.bf16.xpose.msra.mxu0 0
        %1989 = vmatprep.subr.bf16.mxu0 0
        %1990 = vmatpush1.bf16.xpose.msra.mxu0 0
        %1991 = vmatprep.mubr.bf16.mxu0 0
        %1992 = vmatmul.mubr.bf16.gmra.mrb[0].mxu0 %v1954
        %v1993 = vpop.f32.mrb[0].mxu0
        %v1994 = vadd.f32 %v1067, %v1993
        %v1995 = vpop.f32.mrb[0].mxu0
        %v1996 = vpop.f32.mrb[0].mxu0
        %v1997 = vpop.f32.mrb[0].mxu0
        %1998 = vdwg.mxu0
        %v1999 = vsel %vm1115, %v1944, -inf
        %2000 = vmax.xlane.f32.xlu0 %v1999
        %v2001 = vpop.xlane.xlu0 %2000
        %v2002 = vsel %vm1115, %v1994, -inf
        %2003 = vmax.xlane.f32.xlu0 %v2002
        %v2004 = vpop.xlane.xlu0 %2003
        %v2005 = vsub.f32 %v1944, %v2001
        %v2006 = vsub.f32 %v1994, %v2004
        %v2007 = vmul.f32 %v2005, 1.442695
        %v2008 = vpow.pop %v2007
        %v2009 = vmul.f32 %v2006, 1.442695
        %v2010 = vpow.pop %v2009
        %v2011 = vsel %vm1115, %v2008, 0.0
        %2012 = vadd.xlane.f32.xlu0 %v2011
        %v2013 = vpop.xlane.xlu0 %2012
        %v2014 = vsel %vm1115, %v2010, 0.0
        %2015 = vadd.xlane.f32.xlu0 %v2014
        %v2016 = vpop.xlane.xlu0 %2015
        %v2017 = vrcp.pop %v2013
        %v2018 = vrcp.pop %v2016
        %v2019 = vmul.f32 %v2008, %v2017
        %v2020 = vmul.f32 %v2010, %v2018
        %v2021 = vpack.c.bf16 %v2019, %v2019
        %v2022 = vpack.c.bf16 %v2020, %v2020
        %2023 = vrot.lane.b32.xlu0 %v984, 64
        %v2024 = vpop.permute.xlu0 %2023
        %v2026 = vsel %vm1115, %v2021, 0
        %v2029 = vsel %vm1143, %v2024, 0
        %2031 = vmatprep.subr.bf16.mxu0 0
        %2032 = vmatpush1.bf16.msra.mxu0 %v2029
        %2033 = vmatprep.subr.bf16.mxu0 0
        %2034 = vmatpush1.bf16.msra.mxu0 0
        %2035 = vmatprep.subr.bf16.mxu0 0
        %2036 = vmatpush1.bf16.msra.mxu0 0
        %2037 = vmatprep.subr.bf16.mxu0 0
        %2038 = vmatpush1.bf16.msra.mxu0 0
        %2039 = vmatprep.subr.bf16.mxu0 0
        %2040 = vmatpush1.bf16.msra.mxu0 0
        %2041 = vmatprep.subr.bf16.mxu0 0
        %2042 = vmatpush1.bf16.msra.mxu0 0
        %2043 = vmatprep.subr.bf16.mxu0 0
        %2044 = vmatpush1.bf16.msra.mxu0 0
        %2045 = vmatprep.subr.bf16.mxu0 0
        %2046 = vmatpush1.bf16.msra.mxu0 0
        %2047 = vmatprep.subr.bf16.mxu0 0
        %2048 = vmatpush1.bf16.msra.mxu0 0
        %2049 = vmatprep.subr.bf16.mxu0 0
        %2050 = vmatpush1.bf16.msra.mxu0 0
        %2051 = vmatprep.subr.bf16.mxu0 0
        %2052 = vmatpush1.bf16.msra.mxu0 0
        %2053 = vmatprep.subr.bf16.mxu0 0
        %2054 = vmatpush1.bf16.msra.mxu0 0
        %2055 = vmatprep.subr.bf16.mxu0 0
        %2056 = vmatpush1.bf16.msra.mxu0 0
        %2057 = vmatprep.subr.bf16.mxu0 0
        %2058 = vmatpush1.bf16.msra.mxu0 0
        %2059 = vmatprep.subr.bf16.mxu0 0
        %2060 = vmatpush1.bf16.msra.mxu0 0
        %2061 = vmatprep.subr.bf16.mxu0 0
        %2062 = vmatpush1.bf16.msra.mxu0 0
        %2063 = vmatprep.mubr.bf16.mxu0 0
        %2064 = vmatmul.mubr.bf16.gmra.mrb[0].mxu0 %v2026
        %v2065 = vpop.f32.mrb[0].mxu0
        %v2066 = vadd.f32 0.0, %v2065
        %v2067 = vpop.f32.mrb[0].mxu0
        %v2068 = vpop.f32.mrb[0].mxu0
        %v2069 = vpop.f32.mrb[0].mxu0
        %2070 = vdwg.mxu0
        %2071 = vrot.lane.b32.xlu0 %v985, 64
        %v2072 = vpop.permute.xlu0 %2071
        %v2074 = vsel %vm1115, %v2022, 0
        %v2077 = vsel %vm1143, %v2072, 0
        %2079 = vmatprep.subr.bf16.mxu0 0
        %2080 = vmatpush1.bf16.msra.mxu0 %v2077
        %2081 = vmatprep.subr.bf16.mxu0 0
        %2082 = vmatpush1.bf16.msra.mxu0 0
        %2083 = vmatprep.subr.bf16.mxu0 0
        %2084 = vmatpush1.bf16.msra.mxu0 0
        %2085 = vmatprep.subr.bf16.mxu0 0
        %2086 = vmatpush1.bf16.msra.mxu0 0
        %2087 = vmatprep.subr.bf16.mxu0 0
        %2088 = vmatpush1.bf16.msra.mxu0 0
        %2089 = vmatprep.subr.bf16.mxu0 0
        %2090 = vmatpush1.bf16.msra.mxu0 0
        %2091 = vmatprep.subr.bf16.mxu0 0
        %2092 = vmatpush1.bf16.msra.mxu0 0
        %2093 = vmatprep.subr.bf16.mxu0 0
        %2094 = vmatpush1.bf16.msra.mxu0 0
        %2095 = vmatprep.subr.bf16.mxu0 0
        %2096 = vmatpush1.bf16.msra.mxu0 0
        %2097 = vmatprep.subr.bf16.mxu0 0
        %2098 = vmatpush1.bf16.msra.mxu0 0
        %2099 = vmatprep.subr.bf16.mxu0 0
        %2100 = vmatpush1.bf16.msra.mxu0 0
        %2101 = vmatprep.subr.bf16.mxu0 0
        %2102 = vmatpush1.bf16.msra.mxu0 0
        %2103 = vmatprep.subr.bf16.mxu0 0
        %2104 = vmatpush1.bf16.msra.mxu0 0
        %2105 = vmatprep.subr.bf16.mxu0 0
        %2106 = vmatpush1.bf16.msra.mxu0 0
        %2107 = vmatprep.subr.bf16.mxu0 0
        %2108 = vmatpush1.bf16.msra.mxu0 0
        %2109 = vmatprep.subr.bf16.mxu0 0
        %2110 = vmatpush1.bf16.msra.mxu0 0
        %2111 = vmatprep.mubr.bf16.mxu0 0
        %2112 = vmatmul.mubr.bf16.gmra.mrb[0].mxu0 %v2074
        %v2113 = vpop.f32.mrb[0].mxu0
        %v2114 = vadd.f32 0.0, %v2113
        %v2115 = vpop.f32.mrb[0].mxu0
        %v2116 = vpop.f32.mrb[0].mxu0
        %v2117 = vpop.f32.mrb[0].mxu0
        %2118 = vdwg.mxu0
        %2119 = vrot.lane.b32.xlu0 %v980, 48
        %v2120 = vpop.permute.xlu0 %2119
        %2121 = vrot.lane.b32.xlu0 %v982, 48
        %v2122 = vpop.permute.xlu0 %2121
        %v2124 = vsel %vm646, %v2120, 0
        %v2127 = vsel %vm646, %v2122, 0
        %2129 = vmatprep.subr.bf16.mxu0 0
        %2130 = vmatpush1.bf16.xpose.msra.mxu0 %v2127
        %2131 = vmatprep.subr.bf16.mxu0 0
        %2132 = vmatpush1.bf16.xpose.msra.mxu0 0
        %2133 = vmatprep.subr.bf16.mxu0 0
        %2134 = vmatpush1.bf16.xpose.msra.mxu0 0
        %2135 = vmatprep.subr.bf16.mxu0 0
        %2136 = vmatpush1.bf16.xpose.msra.mxu0 0
        %2137 = vmatprep.subr.bf16.mxu0 0
        %2138 = vmatpush1.bf16.xpose.msra.mxu0 0
        %2139 = vmatprep.subr.bf16.mxu0 0
        %2140 = vmatpush1.bf16.xpose.msra.mxu0 0
        %2141 = vmatprep.subr.bf16.mxu0 0
        %2142 = vmatpush1.bf16.xpose.msra.mxu0 0
        %2143 = vmatprep.subr.bf16.mxu0 0
        %2144 = vmatpush1.bf16.xpose.msra.mxu0 0
        %2145 = vmatprep.subr.bf16.mxu0 0
        %2146 = vmatpush1.bf16.xpose.msra.mxu0 0
        %2147 = vmatprep.subr.bf16.mxu0 0
        %2148 = vmatpush1.bf16.xpose.msra.mxu0 0
        %2149 = vmatprep.subr.bf16.mxu0 0
        %2150 = vmatpush1.bf16.xpose.msra.mxu0 0
        %2151 = vmatprep.subr.bf16.mxu0 0
        %2152 = vmatpush1.bf16.xpose.msra.mxu0 0
        %2153 = vmatprep.subr.bf16.mxu0 0
        %2154 = vmatpush1.bf16.xpose.msra.mxu0 0
        %2155 = vmatprep.subr.bf16.mxu0 0
        %2156 = vmatpush1.bf16.xpose.msra.mxu0 0
        %2157 = vmatprep.subr.bf16.mxu0 0
        %2158 = vmatpush1.bf16.xpose.msra.mxu0 0
        %2159 = vmatprep.subr.bf16.mxu0 0
        %2160 = vmatpush1.bf16.xpose.msra.mxu0 0
        %2161 = vmatprep.mubr.bf16.mxu0 0
        %2162 = vmatmul.mubr.bf16.gmra.mrb[0].mxu0 %v2124
        %v2163 = vpop.f32.mrb[0].mxu0
        %v2164 = vadd.f32 %v1006, %v2163
        %v2165 = vpop.f32.mrb[0].mxu0
        %v2166 = vpop.f32.mrb[0].mxu0
        %v2167 = vpop.f32.mrb[0].mxu0
        %2168 = vdwg.mxu0
        %2169 = vrot.lane.b32.xlu0 %v981, 48
        %v2170 = vpop.permute.xlu0 %2169
        %2171 = vrot.lane.b32.xlu0 %v983, 48
        %v2172 = vpop.permute.xlu0 %2171
        %v2174 = vsel %vm646, %v2170, 0
        %v2177 = vsel %vm646, %v2172, 0
        %2179 = vmatprep.subr.bf16.mxu0 0
        %2180 = vmatpush1.bf16.xpose.msra.mxu0 %v2177
        %2181 = vmatprep.subr.bf16.mxu0 0
        %2182 = vmatpush1.bf16.xpose.msra.mxu0 0
        %2183 = vmatprep.subr.bf16.mxu0 0
        %2184 = vmatpush1.bf16.xpose.msra.mxu0 0
        %2185 = vmatprep.subr.bf16.mxu0 0
        %2186 = vmatpush1.bf16.xpose.msra.mxu0 0
        %2187 = vmatprep.subr.bf16.mxu0 0
        %2188 = vmatpush1.bf16.xpose.msra.mxu0 0
        %2189 = vmatprep.subr.bf16.mxu0 0
        %2190 = vmatpush1.bf16.xpose.msra.mxu0 0
        %2191 = vmatprep.subr.bf16.mxu0 0
        %2192 = vmatpush1.bf16.xpose.msra.mxu0 0
        %2193 = vmatprep.subr.bf16.mxu0 0
        %2194 = vmatpush1.bf16.xpose.msra.mxu0 0
        %2195 = vmatprep.subr.bf16.mxu0 0
        %2196 = vmatpush1.bf16.xpose.msra.mxu0 0
        %2197 = vmatprep.subr.bf16.mxu0 0
        %2198 = vmatpush1.bf16.xpose.msra.mxu0 0
        %2199 = vmatprep.subr.bf16.mxu0 0
        %2200 = vmatpush1.bf16.xpose.msra.mxu0 0
        %2201 = vmatprep.subr.bf16.mxu0 0
        %2202 = vmatpush1.bf16.xpose.msra.mxu0 0
        %2203 = vmatprep.subr.bf16.mxu0 0
        %2204 = vmatpush1.bf16.xpose.msra.mxu0 0
        %2205 = vmatprep.subr.bf16.mxu0 0
        %2206 = vmatpush1.bf16.xpose.msra.mxu0 0
        %2207 = vmatprep.subr.bf16.mxu0 0
        %2208 = vmatpush1.bf16.xpose.msra.mxu0 0
        %2209 = vmatprep.subr.bf16.mxu0 0
        %2210 = vmatpush1.bf16.xpose.msra.mxu0 0
        %2211 = vmatprep.mubr.bf16.mxu0 0
        %2212 = vmatmul.mubr.bf16.gmra.mrb[0].mxu0 %v2174
        %v2213 = vpop.f32.mrb[0].mxu0
        %v2214 = vadd.f32 %v1067, %v2213
        %v2215 = vpop.f32.mrb[0].mxu0
        %v2216 = vpop.f32.mrb[0].mxu0
        %v2217 = vpop.f32.mrb[0].mxu0
        %2218 = vdwg.mxu0
        %v2219 = vsel %vm1115, %v2164, -inf
        %2220 = vmax.xlane.f32.xlu0 %v2219
        %v2221 = vpop.xlane.xlu0 %2220
        %v2222 = vsel %vm1115, %v2214, -inf
        %2223 = vmax.xlane.f32.xlu0 %v2222
        %v2224 = vpop.xlane.xlu0 %2223
        %v2225 = vsub.f32 %v2164, %v2221
        %v2226 = vsub.f32 %v2214, %v2224
        %v2227 = vmul.f32 %v2225, 1.442695
        %v2228 = vpow.pop %v2227
        %v2229 = vmul.f32 %v2226, 1.442695
        %v2230 = vpow.pop %v2229
        %v2231 = vsel %vm1115, %v2228, 0.0
        %2232 = vadd.xlane.f32.xlu0 %v2231
        %v2233 = vpop.xlane.xlu0 %2232
        %v2234 = vsel %vm1115, %v2230, 0.0
        %2235 = vadd.xlane.f32.xlu0 %v2234
        %v2236 = vpop.xlane.xlu0 %2235
        %v2237 = vrcp.pop %v2233
        %v2238 = vrcp.pop %v2236
        %v2239 = vmul.f32 %v2228, %v2237
        %v2240 = vmul.f32 %v2230, %v2238
        %v2241 = vpack.c.bf16 %v2239, %v2239
        %v2242 = vpack.c.bf16 %v2240, %v2240
        %2243 = vrot.lane.b32.xlu0 %v984, 48
        %v2244 = vpop.permute.xlu0 %2243
        %v2246 = vsel %vm1115, %v2241, 0
        %v2249 = vsel %vm1143, %v2244, 0
        %2251 = vmatprep.subr.bf16.mxu0 0
        %2252 = vmatpush1.bf16.msra.mxu0 %v2249
        %2253 = vmatprep.subr.bf16.mxu0 0
        %2254 = vmatpush1.bf16.msra.mxu0 0
        %2255 = vmatprep.subr.bf16.mxu0 0
        %2256 = vmatpush1.bf16.msra.mxu0 0
        %2257 = vmatprep.subr.bf16.mxu0 0
        %2258 = vmatpush1.bf16.msra.mxu0 0
        %2259 = vmatprep.subr.bf16.mxu0 0
        %2260 = vmatpush1.bf16.msra.mxu0 0
        %2261 = vmatprep.subr.bf16.mxu0 0
        %2262 = vmatpush1.bf16.msra.mxu0 0
        %2263 = vmatprep.subr.bf16.mxu0 0
        %2264 = vmatpush1.bf16.msra.mxu0 0
        %2265 = vmatprep.subr.bf16.mxu0 0
        %2266 = vmatpush1.bf16.msra.mxu0 0
        %2267 = vmatprep.subr.bf16.mxu0 0
        %2268 = vmatpush1.bf16.msra.mxu0 0
        %2269 = vmatprep.subr.bf16.mxu0 0
        %2270 = vmatpush1.bf16.msra.mxu0 0
        %2271 = vmatprep.subr.bf16.mxu0 0
        %2272 = vmatpush1.bf16.msra.mxu0 0
        %2273 = vmatprep.subr.bf16.mxu0 0
        %2274 = vmatpush1.bf16.msra.mxu0 0
        %2275 = vmatprep.subr.bf16.mxu0 0
        %2276 = vmatpush1.bf16.msra.mxu0 0
        %2277 = vmatprep.subr.bf16.mxu0 0
        %2278 = vmatpush1.bf16.msra.mxu0 0
        %2279 = vmatprep.subr.bf16.mxu0 0
        %2280 = vmatpush1.bf16.msra.mxu0 0
        %2281 = vmatprep.subr.bf16.mxu0 0
        %2282 = vmatpush1.bf16.msra.mxu0 0
        %2283 = vmatprep.mubr.bf16.mxu0 0
        %2284 = vmatmul.mubr.bf16.gmra.mrb[0].mxu0 %v2246
        %v2285 = vpop.f32.mrb[0].mxu0
        %v2286 = vadd.f32 0.0, %v2285
        %v2287 = vpop.f32.mrb[0].mxu0
        %v2288 = vpop.f32.mrb[0].mxu0
        %v2289 = vpop.f32.mrb[0].mxu0
        %2290 = vdwg.mxu0
        %2291 = vrot.lane.b32.xlu0 %v985, 48
        %v2292 = vpop.permute.xlu0 %2291
        %v2294 = vsel %vm1115, %v2242, 0
        %v2297 = vsel %vm1143, %v2292, 0
        %2299 = vmatprep.subr.bf16.mxu0 0
        %2300 = vmatpush1.bf16.msra.mxu0 %v2297
        %2301 = vmatprep.subr.bf16.mxu0 0
        %2302 = vmatpush1.bf16.msra.mxu0 0
        %2303 = vmatprep.subr.bf16.mxu0 0
        %2304 = vmatpush1.bf16.msra.mxu0 0
        %2305 = vmatprep.subr.bf16.mxu0 0
        %2306 = vmatpush1.bf16.msra.mxu0 0
        %2307 = vmatprep.subr.bf16.mxu0 0
        %2308 = vmatpush1.bf16.msra.mxu0 0
        %2309 = vmatprep.subr.bf16.mxu0 0
        %2310 = vmatpush1.bf16.msra.mxu0 0
        %2311 = vmatprep.subr.bf16.mxu0 0
        %2312 = vmatpush1.bf16.msra.mxu0 0
        %2313 = vmatprep.subr.bf16.mxu0 0
        %2314 = vmatpush1.bf16.msra.mxu0 0
        %2315 = vmatprep.subr.bf16.mxu0 0
        %2316 = vmatpush1.bf16.msra.mxu0 0
        %2317 = vmatprep.subr.bf16.mxu0 0
        %2318 = vmatpush1.bf16.msra.mxu0 0
        %2319 = vmatprep.subr.bf16.mxu0 0
        %2320 = vmatpush1.bf16.msra.mxu0 0
        %2321 = vmatprep.subr.bf16.mxu0 0
        %2322 = vmatpush1.bf16.msra.mxu0 0
        %2323 = vmatprep.subr.bf16.mxu0 0
        %2324 = vmatpush1.bf16.msra.mxu0 0
        %2325 = vmatprep.subr.bf16.mxu0 0
        %2326 = vmatpush1.bf16.msra.mxu0 0
        %2327 = vmatprep.subr.bf16.mxu0 0
        %2328 = vmatpush1.bf16.msra.mxu0 0
        %2329 = vmatprep.subr.bf16.mxu0 0
        %2330 = vmatpush1.bf16.msra.mxu0 0
        %2331 = vmatprep.mubr.bf16.mxu0 0
        %2332 = vmatmul.mubr.bf16.gmra.mrb[0].mxu0 %v2294
        %v2333 = vpop.f32.mrb[0].mxu0
        %v2334 = vadd.f32 0.0, %v2333
        %v2335 = vpop.f32.mrb[0].mxu0
        %v2336 = vpop.f32.mrb[0].mxu0
        %v2337 = vpop.f32.mrb[0].mxu0
        %2338 = vdwg.mxu0
        %2339 = vrot.lane.b32.xlu0 %v980, 32
        %v2340 = vpop.permute.xlu0 %2339
        %2341 = vrot.lane.b32.xlu0 %v982, 32
        %v2342 = vpop.permute.xlu0 %2341
        %v2344 = vsel %vm646, %v2340, 0
        %v2347 = vsel %vm646, %v2342, 0
        %2349 = vmatprep.subr.bf16.mxu0 0
        %2350 = vmatpush1.bf16.xpose.msra.mxu0 %v2347
        %2351 = vmatprep.subr.bf16.mxu0 0
        %2352 = vmatpush1.bf16.xpose.msra.mxu0 0
        %2353 = vmatprep.subr.bf16.mxu0 0
        %2354 = vmatpush1.bf16.xpose.msra.mxu0 0
        %2355 = vmatprep.subr.bf16.mxu0 0
        %2356 = vmatpush1.bf16.xpose.msra.mxu0 0
        %2357 = vmatprep.subr.bf16.mxu0 0
        %2358 = vmatpush1.bf16.xpose.msra.mxu0 0
        %2359 = vmatprep.subr.bf16.mxu0 0
        %2360 = vmatpush1.bf16.xpose.msra.mxu0 0
        %2361 = vmatprep.subr.bf16.mxu0 0
        %2362 = vmatpush1.bf16.xpose.msra.mxu0 0
        %2363 = vmatprep.subr.bf16.mxu0 0
        %2364 = vmatpush1.bf16.xpose.msra.mxu0 0
        %2365 = vmatprep.subr.bf16.mxu0 0
        %2366 = vmatpush1.bf16.xpose.msra.mxu0 0
        %2367 = vmatprep.subr.bf16.mxu0 0
        %2368 = vmatpush1.bf16.xpose.msra.mxu0 0
        %2369 = vmatprep.subr.bf16.mxu0 0
        %2370 = vmatpush1.bf16.xpose.msra.mxu0 0
        %2371 = vmatprep.subr.bf16.mxu0 0
        %2372 = vmatpush1.bf16.xpose.msra.mxu0 0
        %2373 = vmatprep.subr.bf16.mxu0 0
        %2374 = vmatpush1.bf16.xpose.msra.mxu0 0
        %2375 = vmatprep.subr.bf16.mxu0 0
        %2376 = vmatpush1.bf16.xpose.msra.mxu0 0
        %2377 = vmatprep.subr.bf16.mxu0 0
        %2378 = vmatpush1.bf16.xpose.msra.mxu0 0
        %2379 = vmatprep.subr.bf16.mxu0 0
        %2380 = vmatpush1.bf16.xpose.msra.mxu0 0
        %2381 = vmatprep.mubr.bf16.mxu0 0
        %2382 = vmatmul.mubr.bf16.gmra.mrb[0].mxu0 %v2344
        %v2383 = vpop.f32.mrb[0].mxu0
        %v2384 = vadd.f32 %v1006, %v2383
        %v2385 = vpop.f32.mrb[0].mxu0
        %v2386 = vpop.f32.mrb[0].mxu0
        %v2387 = vpop.f32.mrb[0].mxu0
        %2388 = vdwg.mxu0
        %2389 = vrot.lane.b32.xlu0 %v981, 32
        %v2390 = vpop.permute.xlu0 %2389
        %2391 = vrot.lane.b32.xlu0 %v983, 32
        %v2392 = vpop.permute.xlu0 %2391
        %v2394 = vsel %vm646, %v2390, 0
        %v2397 = vsel %vm646, %v2392, 0
        %2399 = vmatprep.subr.bf16.mxu0 0
        %2400 = vmatpush1.bf16.xpose.msra.mxu0 %v2397
        %2401 = vmatprep.subr.bf16.mxu0 0
        %2402 = vmatpush1.bf16.xpose.msra.mxu0 0
        %2403 = vmatprep.subr.bf16.mxu0 0
        %2404 = vmatpush1.bf16.xpose.msra.mxu0 0
        %2405 = vmatprep.subr.bf16.mxu0 0
        %2406 = vmatpush1.bf16.xpose.msra.mxu0 0
        %2407 = vmatprep.subr.bf16.mxu0 0
        %2408 = vmatpush1.bf16.xpose.msra.mxu0 0
        %2409 = vmatprep.subr.bf16.mxu0 0
        %2410 = vmatpush1.bf16.xpose.msra.mxu0 0
        %2411 = vmatprep.subr.bf16.mxu0 0
        %2412 = vmatpush1.bf16.xpose.msra.mxu0 0
        %2413 = vmatprep.subr.bf16.mxu0 0
        %2414 = vmatpush1.bf16.xpose.msra.mxu0 0
        %2415 = vmatprep.subr.bf16.mxu0 0
        %2416 = vmatpush1.bf16.xpose.msra.mxu0 0
        %2417 = vmatprep.subr.bf16.mxu0 0
        %2418 = vmatpush1.bf16.xpose.msra.mxu0 0
        %2419 = vmatprep.subr.bf16.mxu0 0
        %2420 = vmatpush1.bf16.xpose.msra.mxu0 0
        %2421 = vmatprep.subr.bf16.mxu0 0
        %2422 = vmatpush1.bf16.xpose.msra.mxu0 0
        %2423 = vmatprep.subr.bf16.mxu0 0
        %2424 = vmatpush1.bf16.xpose.msra.mxu0 0
        %2425 = vmatprep.subr.bf16.mxu0 0
        %2426 = vmatpush1.bf16.xpose.msra.mxu0 0
        %2427 = vmatprep.subr.bf16.mxu0 0
        %2428 = vmatpush1.bf16.xpose.msra.mxu0 0
        %2429 = vmatprep.subr.bf16.mxu0 0
        %2430 = vmatpush1.bf16.xpose.msra.mxu0 0
        %2431 = vmatprep.mubr.bf16.mxu0 0
        %2432 = vmatmul.mubr.bf16.gmra.mrb[0].mxu0 %v2394
        %v2433 = vpop.f32.mrb[0].mxu0
        %v2434 = vadd.f32 %v1067, %v2433
        %v2435 = vpop.f32.mrb[0].mxu0
        %v2436 = vpop.f32.mrb[0].mxu0
        %v2437 = vpop.f32.mrb[0].mxu0
        %2438 = vdwg.mxu0
        %v2439 = vsel %vm1115, %v2384, -inf
        %2440 = vmax.xlane.f32.xlu0 %v2439
        %v2441 = vpop.xlane.xlu0 %2440
        %v2442 = vsel %vm1115, %v2434, -inf
        %2443 = vmax.xlane.f32.xlu0 %v2442
        %v2444 = vpop.xlane.xlu0 %2443
        %v2445 = vsub.f32 %v2384, %v2441
        %v2446 = vsub.f32 %v2434, %v2444
        %v2447 = vmul.f32 %v2445, 1.442695
        %v2448 = vpow.pop %v2447
        %v2449 = vmul.f32 %v2446, 1.442695
        %v2450 = vpow.pop %v2449
        %v2451 = vsel %vm1115, %v2448, 0.0
        %2452 = vadd.xlane.f32.xlu0 %v2451
        %v2453 = vpop.xlane.xlu0 %2452
        %v2454 = vsel %vm1115, %v2450, 0.0
        %2455 = vadd.xlane.f32.xlu0 %v2454
        %v2456 = vpop.xlane.xlu0 %2455
        %v2457 = vrcp.pop %v2453
        %v2458 = vrcp.pop %v2456
        %v2459 = vmul.f32 %v2448, %v2457
        %v2460 = vmul.f32 %v2450, %v2458
        %v2461 = vpack.c.bf16 %v2459, %v2459
        %v2462 = vpack.c.bf16 %v2460, %v2460
        %2463 = vrot.lane.b32.xlu0 %v984, 32
        %v2464 = vpop.permute.xlu0 %2463
        %v2466 = vsel %vm1115, %v2461, 0
        %v2469 = vsel %vm1143, %v2464, 0
        %2471 = vmatprep.subr.bf16.mxu0 0
        %2472 = vmatpush1.bf16.msra.mxu0 %v2469
        %2473 = vmatprep.subr.bf16.mxu0 0
        %2474 = vmatpush1.bf16.msra.mxu0 0
        %2475 = vmatprep.subr.bf16.mxu0 0
        %2476 = vmatpush1.bf16.msra.mxu0 0
        %2477 = vmatprep.subr.bf16.mxu0 0
        %2478 = vmatpush1.bf16.msra.mxu0 0
        %2479 = vmatprep.subr.bf16.mxu0 0
        %2480 = vmatpush1.bf16.msra.mxu0 0
        %2481 = vmatprep.subr.bf16.mxu0 0
        %2482 = vmatpush1.bf16.msra.mxu0 0
        %2483 = vmatprep.subr.bf16.mxu0 0
        %2484 = vmatpush1.bf16.msra.mxu0 0
        %2485 = vmatprep.subr.bf16.mxu0 0
        %2486 = vmatpush1.bf16.msra.mxu0 0
        %2487 = vmatprep.subr.bf16.mxu0 0
        %2488 = vmatpush1.bf16.msra.mxu0 0
        %2489 = vmatprep.subr.bf16.mxu0 0
        %2490 = vmatpush1.bf16.msra.mxu0 0
        %2491 = vmatprep.subr.bf16.mxu0 0
        %2492 = vmatpush1.bf16.msra.mxu0 0
        %2493 = vmatprep.subr.bf16.mxu0 0
        %2494 = vmatpush1.bf16.msra.mxu0 0
        %2495 = vmatprep.subr.bf16.mxu0 0
        %2496 = vmatpush1.bf16.msra.mxu0 0
        %2497 = vmatprep.subr.bf16.mxu0 0
        %2498 = vmatpush1.bf16.msra.mxu0 0
        %2499 = vmatprep.subr.bf16.mxu0 0
        %2500 = vmatpush1.bf16.msra.mxu0 0
        %2501 = vmatprep.subr.bf16.mxu0 0
        %2502 = vmatpush1.bf16.msra.mxu0 0
        %2503 = vmatprep.mubr.bf16.mxu0 0
        %2504 = vmatmul.mubr.bf16.gmra.mrb[0].mxu0 %v2466
        %v2505 = vpop.f32.mrb[0].mxu0
        %v2506 = vadd.f32 0.0, %v2505
        %v2507 = vpop.f32.mrb[0].mxu0
        %v2508 = vpop.f32.mrb[0].mxu0
        %v2509 = vpop.f32.mrb[0].mxu0
        %2510 = vdwg.mxu0
        %2511 = vrot.lane.b32.xlu0 %v985, 32
        %v2512 = vpop.permute.xlu0 %2511
        %v2514 = vsel %vm1115, %v2462, 0
        %v2517 = vsel %vm1143, %v2512, 0
        %2519 = vmatprep.subr.bf16.mxu0 0
        %2520 = vmatpush1.bf16.msra.mxu0 %v2517
        %2521 = vmatprep.subr.bf16.mxu0 0
        %2522 = vmatpush1.bf16.msra.mxu0 0
        %2523 = vmatprep.subr.bf16.mxu0 0
        %2524 = vmatpush1.bf16.msra.mxu0 0
        %2525 = vmatprep.subr.bf16.mxu0 0
        %2526 = vmatpush1.bf16.msra.mxu0 0
        %2527 = vmatprep.subr.bf16.mxu0 0
        %2528 = vmatpush1.bf16.msra.mxu0 0
        %2529 = vmatprep.subr.bf16.mxu0 0
        %2530 = vmatpush1.bf16.msra.mxu0 0
        %2531 = vmatprep.subr.bf16.mxu0 0
        %2532 = vmatpush1.bf16.msra.mxu0 0
        %2533 = vmatprep.subr.bf16.mxu0 0
        %2534 = vmatpush1.bf16.msra.mxu0 0
        %2535 = vmatprep.subr.bf16.mxu0 0
        %2536 = vmatpush1.bf16.msra.mxu0 0
        %2537 = vmatprep.subr.bf16.mxu0 0
        %2538 = vmatpush1.bf16.msra.mxu0 0
        %2539 = vmatprep.subr.bf16.mxu0 0
        %2540 = vmatpush1.bf16.msra.mxu0 0
        %2541 = vmatprep.subr.bf16.mxu0 0
        %2542 = vmatpush1.bf16.msra.mxu0 0
        %2543 = vmatprep.subr.bf16.mxu0 0
        %2544 = vmatpush1.bf16.msra.mxu0 0
        %2545 = vmatprep.subr.bf16.mxu0 0
        %2546 = vmatpush1.bf16.msra.mxu0 0
        %2547 = vmatprep.subr.bf16.mxu0 0
        %2548 = vmatpush1.bf16.msra.mxu0 0
        %2549 = vmatprep.subr.bf16.mxu0 0
        %2550 = vmatpush1.bf16.msra.mxu0 0
        %2551 = vmatprep.mubr.bf16.mxu0 0
        %2552 = vmatmul.mubr.bf16.gmra.mrb[0].mxu0 %v2514
        %v2553 = vpop.f32.mrb[0].mxu0
        %v2554 = vadd.f32 0.0, %v2553
        %v2555 = vpop.f32.mrb[0].mxu0
        %v2556 = vpop.f32.mrb[0].mxu0
        %v2557 = vpop.f32.mrb[0].mxu0
        %2558 = vdwg.mxu0
        %2559 = vrot.lane.b32.xlu0 %v980, 16
        %v2560 = vpop.permute.xlu0 %2559
        %2561 = vrot.lane.b32.xlu0 %v982, 16
        %v2562 = vpop.permute.xlu0 %2561
        %v2564 = vsel %vm646, %v2560, 0
        %v2567 = vsel %vm646, %v2562, 0
        %2569 = vmatprep.subr.bf16.mxu0 0
        %2570 = vmatpush1.bf16.xpose.msra.mxu0 %v2567
        %2571 = vmatprep.subr.bf16.mxu0 0
        %2572 = vmatpush1.bf16.xpose.msra.mxu0 0
        %2573 = vmatprep.subr.bf16.mxu0 0
        %2574 = vmatpush1.bf16.xpose.msra.mxu0 0
        %2575 = vmatprep.subr.bf16.mxu0 0
        %2576 = vmatpush1.bf16.xpose.msra.mxu0 0
        %2577 = vmatprep.subr.bf16.mxu0 0
        %2578 = vmatpush1.bf16.xpose.msra.mxu0 0
        %2579 = vmatprep.subr.bf16.mxu0 0
        %2580 = vmatpush1.bf16.xpose.msra.mxu0 0
        %2581 = vmatprep.subr.bf16.mxu0 0
        %2582 = vmatpush1.bf16.xpose.msra.mxu0 0
        %2583 = vmatprep.subr.bf16.mxu0 0
        %2584 = vmatpush1.bf16.xpose.msra.mxu0 0
        %2585 = vmatprep.subr.bf16.mxu0 0
        %2586 = vmatpush1.bf16.xpose.msra.mxu0 0
        %2587 = vmatprep.subr.bf16.mxu0 0
        %2588 = vmatpush1.bf16.xpose.msra.mxu0 0
        %2589 = vmatprep.subr.bf16.mxu0 0
        %2590 = vmatpush1.bf16.xpose.msra.mxu0 0
        %2591 = vmatprep.subr.bf16.mxu0 0
        %2592 = vmatpush1.bf16.xpose.msra.mxu0 0
        %2593 = vmatprep.subr.bf16.mxu0 0
        %2594 = vmatpush1.bf16.xpose.msra.mxu0 0
        %2595 = vmatprep.subr.bf16.mxu0 0
        %2596 = vmatpush1.bf16.xpose.msra.mxu0 0
        %2597 = vmatprep.subr.bf16.mxu0 0
        %2598 = vmatpush1.bf16.xpose.msra.mxu0 0
        %2599 = vmatprep.subr.bf16.mxu0 0
        %2600 = vmatpush1.bf16.xpose.msra.mxu0 0
        %2601 = vmatprep.mubr.bf16.mxu0 0
        %2602 = vmatmul.mubr.bf16.gmra.mrb[0].mxu0 %v2564
        %v2603 = vpop.f32.mrb[0].mxu0
        %v2604 = vadd.f32 %v1006, %v2603
        %v2605 = vpop.f32.mrb[0].mxu0
        %v2606 = vpop.f32.mrb[0].mxu0
        %v2607 = vpop.f32.mrb[0].mxu0
        %2608 = vdwg.mxu0
        %2609 = vrot.lane.b32.xlu0 %v981, 16
        %v2610 = vpop.permute.xlu0 %2609
        %2611 = vrot.lane.b32.xlu0 %v983, 16
        %v2612 = vpop.permute.xlu0 %2611
        %v2614 = vsel %vm646, %v2610, 0
        %v2617 = vsel %vm646, %v2612, 0
        %2619 = vmatprep.subr.bf16.mxu0 0
        %2620 = vmatpush1.bf16.xpose.msra.mxu0 %v2617
        %2621 = vmatprep.subr.bf16.mxu0 0
        %2622 = vmatpush1.bf16.xpose.msra.mxu0 0
        %2623 = vmatprep.subr.bf16.mxu0 0
        %2624 = vmatpush1.bf16.xpose.msra.mxu0 0
        %2625 = vmatprep.subr.bf16.mxu0 0
        %2626 = vmatpush1.bf16.xpose.msra.mxu0 0
        %2627 = vmatprep.subr.bf16.mxu0 0
        %2628 = vmatpush1.bf16.xpose.msra.mxu0 0
        %2629 = vmatprep.subr.bf16.mxu0 0
        %2630 = vmatpush1.bf16.xpose.msra.mxu0 0
        %2631 = vmatprep.subr.bf16.mxu0 0
        %2632 = vmatpush1.bf16.xpose.msra.mxu0 0
        %2633 = vmatprep.subr.bf16.mxu0 0
        %2634 = vmatpush1.bf16.xpose.msra.mxu0 0
        %2635 = vmatprep.subr.bf16.mxu0 0
        %2636 = vmatpush1.bf16.xpose.msra.mxu0 0
        %2637 = vmatprep.subr.bf16.mxu0 0
        %2638 = vmatpush1.bf16.xpose.msra.mxu0 0
        %2639 = vmatprep.subr.bf16.mxu0 0
        %2640 = vmatpush1.bf16.xpose.msra.mxu0 0
        %2641 = vmatprep.subr.bf16.mxu0 0
        %2642 = vmatpush1.bf16.xpose.msra.mxu0 0
        %2643 = vmatprep.subr.bf16.mxu0 0
        %2644 = vmatpush1.bf16.xpose.msra.mxu0 0
        %2645 = vmatprep.subr.bf16.mxu0 0
        %2646 = vmatpush1.bf16.xpose.msra.mxu0 0
        %2647 = vmatprep.subr.bf16.mxu0 0
        %2648 = vmatpush1.bf16.xpose.msra.mxu0 0
        %2649 = vmatprep.subr.bf16.mxu0 0
        %2650 = vmatpush1.bf16.xpose.msra.mxu0 0
        %2651 = vmatprep.mubr.bf16.mxu0 0
        %2652 = vmatmul.mubr.bf16.gmra.mrb[0].mxu0 %v2614
        %v2653 = vpop.f32.mrb[0].mxu0
        %v2654 = vadd.f32 %v1067, %v2653
        %v2655 = vpop.f32.mrb[0].mxu0
        %v2656 = vpop.f32.mrb[0].mxu0
        %v2657 = vpop.f32.mrb[0].mxu0
        %2658 = vdwg.mxu0
        %v2659 = vsel %vm1115, %v2604, -inf
        %2660 = vmax.xlane.f32.xlu0 %v2659
        %v2661 = vpop.xlane.xlu0 %2660
        %v2662 = vsel %vm1115, %v2654, -inf
        %2663 = vmax.xlane.f32.xlu0 %v2662
        %v2664 = vpop.xlane.xlu0 %2663
        %v2665 = vsub.f32 %v2604, %v2661
        %v2666 = vsub.f32 %v2654, %v2664
        %v2667 = vmul.f32 %v2665, 1.442695
        %v2668 = vpow.pop %v2667
        %v2669 = vmul.f32 %v2666, 1.442695
        %v2670 = vpow.pop %v2669
        %v2671 = vsel %vm1115, %v2668, 0.0
        %2672 = vadd.xlane.f32.xlu0 %v2671
        %v2673 = vpop.xlane.xlu0 %2672
        %v2674 = vsel %vm1115, %v2670, 0.0
        %2675 = vadd.xlane.f32.xlu0 %v2674
        %v2676 = vpop.xlane.xlu0 %2675
        %v2677 = vrcp.pop %v2673
        %v2678 = vrcp.pop %v2676
        %v2679 = vmul.f32 %v2668, %v2677
        %v2680 = vmul.f32 %v2670, %v2678
        %v2681 = vpack.c.bf16 %v2679, %v2679
        %v2682 = vpack.c.bf16 %v2680, %v2680
        %2683 = vrot.lane.b32.xlu0 %v984, 16
        %v2684 = vpop.permute.xlu0 %2683
        %v2686 = vsel %vm1115, %v2681, 0
        %v2689 = vsel %vm1143, %v2684, 0
        %2691 = vmatprep.subr.bf16.mxu0 0
        %2692 = vmatpush1.bf16.msra.mxu0 %v2689
        %2693 = vmatprep.subr.bf16.mxu0 0
        %2694 = vmatpush1.bf16.msra.mxu0 0
        %2695 = vmatprep.subr.bf16.mxu0 0
        %2696 = vmatpush1.bf16.msra.mxu0 0
        %2697 = vmatprep.subr.bf16.mxu0 0
        %2698 = vmatpush1.bf16.msra.mxu0 0
        %2699 = vmatprep.subr.bf16.mxu0 0
        %2700 = vmatpush1.bf16.msra.mxu0 0
        %2701 = vmatprep.subr.bf16.mxu0 0
        %2702 = vmatpush1.bf16.msra.mxu0 0
        %2703 = vmatprep.subr.bf16.mxu0 0
        %2704 = vmatpush1.bf16.msra.mxu0 0
        %2705 = vmatprep.subr.bf16.mxu0 0
        %2706 = vmatpush1.bf16.msra.mxu0 0
        %2707 = vmatprep.subr.bf16.mxu0 0
        %2708 = vmatpush1.bf16.msra.mxu0 0
        %2709 = vmatprep.subr.bf16.mxu0 0
        %2710 = vmatpush1.bf16.msra.mxu0 0
        %2711 = vmatprep.subr.bf16.mxu0 0
        %2712 = vmatpush1.bf16.msra.mxu0 0
        %2713 = vmatprep.subr.bf16.mxu0 0
        %2714 = vmatpush1.bf16.msra.mxu0 0
        %2715 = vmatprep.subr.bf16.mxu0 0
        %2716 = vmatpush1.bf16.msra.mxu0 0
        %2717 = vmatprep.subr.bf16.mxu0 0
        %2718 = vmatpush1.bf16.msra.mxu0 0
        %2719 = vmatprep.subr.bf16.mxu0 0
        %2720 = vmatpush1.bf16.msra.mxu0 0
        %2721 = vmatprep.subr.bf16.mxu0 0
        %2722 = vmatpush1.bf16.msra.mxu0 0
        %2723 = vmatprep.mubr.bf16.mxu0 0
        %2724 = vmatmul.mubr.bf16.gmra.mrb[0].mxu0 %v2686
        %v2725 = vpop.f32.mrb[0].mxu0
        %v2726 = vadd.f32 0.0, %v2725
        %v2727 = vpop.f32.mrb[0].mxu0
        %v2728 = vpop.f32.mrb[0].mxu0
        %v2729 = vpop.f32.mrb[0].mxu0
        %2730 = vdwg.mxu0
        %2731 = vrot.lane.b32.xlu0 %v985, 16
        %v2732 = vpop.permute.xlu0 %2731
        %v2734 = vsel %vm1115, %v2682, 0
        %v2737 = vsel %vm1143, %v2732, 0
        %2739 = vmatprep.subr.bf16.mxu0 0
        %2740 = vmatpush1.bf16.msra.mxu0 %v2737
        %2741 = vmatprep.subr.bf16.mxu0 0
        %2742 = vmatpush1.bf16.msra.mxu0 0
        %2743 = vmatprep.subr.bf16.mxu0 0
        %2744 = vmatpush1.bf16.msra.mxu0 0
        %2745 = vmatprep.subr.bf16.mxu0 0
        %2746 = vmatpush1.bf16.msra.mxu0 0
        %2747 = vmatprep.subr.bf16.mxu0 0
        %2748 = vmatpush1.bf16.msra.mxu0 0
        %2749 = vmatprep.subr.bf16.mxu0 0
        %2750 = vmatpush1.bf16.msra.mxu0 0
        %2751 = vmatprep.subr.bf16.mxu0 0
        %2752 = vmatpush1.bf16.msra.mxu0 0
        %2753 = vmatprep.subr.bf16.mxu0 0
        %2754 = vmatpush1.bf16.msra.mxu0 0
        %2755 = vmatprep.subr.bf16.mxu0 0
        %2756 = vmatpush1.bf16.msra.mxu0 0
        %2757 = vmatprep.subr.bf16.mxu0 0
        %2758 = vmatpush1.bf16.msra.mxu0 0
        %2759 = vmatprep.subr.bf16.mxu0 0
        %2760 = vmatpush1.bf16.msra.mxu0 0
        %2761 = vmatprep.subr.bf16.mxu0 0
        %2762 = vmatpush1.bf16.msra.mxu0 0
        %2763 = vmatprep.subr.bf16.mxu0 0
        %2764 = vmatpush1.bf16.msra.mxu0 0
        %2765 = vmatprep.subr.bf16.mxu0 0
        %2766 = vmatpush1.bf16.msra.mxu0 0
        %2767 = vmatprep.subr.bf16.mxu0 0
        %2768 = vmatpush1.bf16.msra.mxu0 0
        %2769 = vmatprep.subr.bf16.mxu0 0
        %2770 = vmatpush1.bf16.msra.mxu0 0
        %2771 = vmatprep.mubr.bf16.mxu0 0
        %2772 = vmatmul.mubr.bf16.gmra.mrb[0].mxu0 %v2734
        %v2773 = vpop.f32.mrb[0].mxu0
        %v2774 = vadd.f32 0.0, %v2773
        %v2775 = vpop.f32.mrb[0].mxu0
        %v2776 = vpop.f32.mrb[0].mxu0
        %v2777 = vpop.f32.mrb[0].mxu0
        %2778 = vdwg.mxu0
        %2781 = vrot.lane.b32.xlu0 %v1405, 16
        %v2782 = vpop.permute.xlu0 %2781
        %2783 = vrot.lane.b32.xlu0 %v1454, 16
        %v2784 = vpop.permute.xlu0 %2783
        %2789 = vrot.lane.b32.xlu0 %v1626, 32
        %v2790 = vpop.permute.xlu0 %2789
        %2791 = vrot.lane.b32.xlu0 %v1674, 32
        %v2792 = vpop.permute.xlu0 %2791
        %2797 = vrot.lane.b32.xlu0 %v1846, 48
        %v2798 = vpop.permute.xlu0 %2797
        %2799 = vrot.lane.b32.xlu0 %v1894, 48
        %v2800 = vpop.permute.xlu0 %2799
        %2805 = vrot.lane.b32.xlu0 %v2066, 64
        %v2806 = vpop.permute.xlu0 %2805
        %2807 = vrot.lane.b32.xlu0 %v2114, 64
        %v2808 = vpop.permute.xlu0 %2807
        %2813 = vrot.lane.b32.xlu0 %v2286, 80
        %v2814 = vpop.permute.xlu0 %2813
        %2815 = vrot.lane.b32.xlu0 %v2334, 80
        %v2816 = vpop.permute.xlu0 %2815
        %2821 = vrot.lane.b32.xlu0 %v2506, 96
        %v2822 = vpop.permute.xlu0 %2821
        %2823 = vrot.lane.b32.xlu0 %v2554, 96
        %v2824 = vpop.permute.xlu0 %2823
        %2829 = vrot.lane.b32.xlu0 %v2726, 112
        %v2830 = vpop.permute.xlu0 %2829
        %2831 = vrot.lane.b32.xlu0 %v2774, 112
        %v2832 = vpop.permute.xlu0 %2831
        %v2835 = vsel %vm646, %v1182, %v2782
        %v2836 = vsel %vm646, %v1228, %v2784
        %vm2837 = vcmask 261120
        %v2838 = vsel %vm2837, %v2835, %v2790
        %v2839 = vsel %vm2837, %v2836, %v2792
        %vm2840 = vcmask 392192
        %v2841 = vsel %vm2840, %v2838, %v2798
        %v2842 = vsel %vm2840, %v2839, %v2800
        %vm2843 = vcmask 523264
        %v2844 = vsel %vm2843, %v2841, %v2806
        %v2845 = vsel %vm2843, %v2842, %v2808
        %vm2846 = vcmask 654336
        %v2847 = vsel %vm2846, %v2844, %v2814
        %v2848 = vsel %vm2846, %v2845, %v2816
        %vm2849 = vcmask 785408
        %v2850 = vsel %vm2849, %v2847, %v2822
        %v2851 = vsel %vm2849, %v2848, %v2824
        %vm2852 = vcmask 916480
        %v2853 = vsel %vm2852, %v2850, %v2830
        %v2854 = vsel %vm2852, %v2851, %v2832
        %v2855 = vpack.c.bf16 %v2854, %v2853
        %v2856 = vld [vmem:[%s5] sm:$0xf]
        %v2857 = vld [vmem:[%s5 + $0x4] sm:$0xf]
        %v2858 = vld [vmem:[%s5 + $0x8] sm:$0xf]
        %v2859 = vld [vmem:[%s5 + $0xc] sm:$0xf]
        %v2860 = vld [vmem:[%s5 + $0x10] sm:$0xf]
        %v2861 = vld [vmem:[%s5 + $0x14] sm:$0xf]
        %v2862 = vld [vmem:[%s5 + $0x18] sm:$0xf]
        %v2863 = vld [vmem:[%s5 + $0x1c] sm:$0xf]
        %v2864 = vld [vmem:[%s5 + $0x20] sm:$0xf]
        %v2865 = vld [vmem:[%s5 + $0x24] sm:$0xf]
        %v2866 = vld [vmem:[%s5 + $0x28] sm:$0xf]
        %v2867 = vld [vmem:[%s5 + $0x2c] sm:$0xf]
        %v2868 = vld [vmem:[%s5 + $0x30] sm:$0xf]
        %v2869 = vld [vmem:[%s5 + $0x34] sm:$0xf]
        %v2870 = vld [vmem:[%s5 + $0x38] sm:$0xf]
        %v2871 = vld [vmem:[%s5 + $0x3c] sm:$0xf]
        %v2872 = vld [vmem:[%s6] sm:$0x1]
        %v2874 = vlaneseq
        %v2875 = vshrl.u32 %v2874, 7
        %v2876 = vsub.s32 0, %v2875
        %v2877 = vrot.slane %v2872, %v2876
        %v2895 = vunpack.c.l.b16 %v2856
        %v2896 = vunpack.c.l.b16 %v2857
        %v2897 = vunpack.c.l.b16 %v2858
        %v2898 = vunpack.c.l.b16 %v2859
        %v2899 = vunpack.c.l.b16 %v2860
        %v2900 = vunpack.c.l.b16 %v2861
        %v2901 = vunpack.c.l.b16 %v2862
        %v2902 = vunpack.c.l.b16 %v2863
        %v2903 = vunpack.c.l.b16 %v2864
        %v2904 = vunpack.c.l.b16 %v2865
        %v2905 = vunpack.c.l.b16 %v2866
        %v2906 = vunpack.c.l.b16 %v2867
        %v2907 = vunpack.c.l.b16 %v2868
        %v2908 = vunpack.c.l.b16 %v2869
        %v2909 = vunpack.c.l.b16 %v2870
        %v2910 = vunpack.c.l.b16 %v2871
        %v2911 = vpack.c.b16 %v2896, %v2895
        %v2912 = vpack.c.b16 %v2898, %v2897
        %v2913 = vpack.c.b16 %v2900, %v2899
        %v2914 = vpack.c.b16 %v2902, %v2901
        %v2915 = vpack.c.b16 %v2904, %v2903
        %v2916 = vpack.c.b16 %v2906, %v2905
        %v2917 = vpack.c.b16 %v2908, %v2907
        %v2918 = vpack.c.b16 %v2910, %v2909
        %2927 = vmatprep.subr.bf16.mxu0 0
        %2928 = vmatpush1.bf16.msra.mxu0 %v2911
        %2929 = vmatprep.subr.bf16.mxu0 0
        %2930 = vmatpush1.bf16.msra.mxu0 %v2912
        %2931 = vmatprep.subr.bf16.mxu0 0
        %2932 = vmatpush1.bf16.msra.mxu0 %v2913
        %2933 = vmatprep.subr.bf16.mxu0 0
        %2934 = vmatpush1.bf16.msra.mxu0 %v2914
        %2935 = vmatprep.subr.bf16.mxu0 0
        %2936 = vmatpush1.bf16.msra.mxu0 %v2915
        %2937 = vmatprep.subr.bf16.mxu0 0
        %2938 = vmatpush1.bf16.msra.mxu0 %v2916
        %2939 = vmatprep.subr.bf16.mxu0 0
        %2940 = vmatpush1.bf16.msra.mxu0 %v2917
        %2941 = vmatprep.subr.bf16.mxu0 0
        %2942 = vmatpush1.bf16.msra.mxu0 %v2918
        %2943 = vmatprep.subr.bf16.mxu0 0
        %2944 = vmatpush1.bf16.msra.mxu0 0
        %2945 = vmatprep.subr.bf16.mxu0 0
        %2946 = vmatpush1.bf16.msra.mxu0 0
        %2947 = vmatprep.subr.bf16.mxu0 0
        %2948 = vmatpush1.bf16.msra.mxu0 0
        %2949 = vmatprep.subr.bf16.mxu0 0
        %2950 = vmatpush1.bf16.msra.mxu0 0
        %2951 = vmatprep.subr.bf16.mxu0 0
        %2952 = vmatpush1.bf16.msra.mxu0 0
        %2953 = vmatprep.subr.bf16.mxu0 0
        %2954 = vmatpush1.bf16.msra.mxu0 0
        %2955 = vmatprep.subr.bf16.mxu0 0
        %2956 = vmatpush1.bf16.msra.mxu0 0
        %2957 = vmatprep.subr.bf16.mxu0 0
        %2958 = vmatpush1.bf16.msra.mxu0 0
        %2959 = vmatprep.mubr.bf16.mxu0 0
        %2960 = vmatmul.mubr.bf16.gmra.mrb[0].mxu0 %v2855
        %v2961 = vpop.f32.mrb[0].mxu0
        %v2962 = vadd.f32 %v2877, %v2961
        %v2963 = vpop.f32.mrb[0].mxu0
        %v2964 = vpop.f32.mrb[0].mxu0
        %v2965 = vadd.f32 %v2877, %v2964
        %v2966 = vpop.f32.mrb[0].mxu0
        %2967 = vdwg.mxu0
        %v2968 = vadd.f32 %v685, %v2962
        %v2969 = vadd.f32 %v688, %v2965
        %v2970 = vld [vmem:[%s7] sm:$0x1]
        %v2971 = vld [vmem:[%s8] sm:$0x1]
        %2972 = vadd.xlane.f32.xlu0 %v2968
        %v2973 = vpop.xlane.xlu0 %2972
        %2974 = vadd.xlane.f32.xlu0 %v2969
        %v2975 = vpop.xlane.xlu0 %2974
        %v2976 = vrcp.pop 128.0
        %v2977 = vmul.f32 %v2973, %v2976
        %v2978 = vmul.f32 %v2975, %v2976
        %v2979 = vsub.f32 %v2968, %v2977
        %v2980 = vsub.f32 %v2969, %v2978
        %v2981 = vmul.f32 %v2979, %v2979
        %v2982 = vmul.f32 %v2980, %v2980
        %2983 = vadd.xlane.f32.xlu0 %v2981
        %v2984 = vpop.xlane.xlu0 %2983
        %2985 = vadd.xlane.f32.xlu0 %v2982
        %v2986 = vpop.xlane.xlu0 %2985
        %v2987 = vmul.f32 %v2984, %v2976
        %v2988 = vmul.f32 %v2986, %v2976
        %v2989 = vadd.f32 %v2987, 1e-05
        %v2990 = vadd.f32 %v2988, 1e-05
        %v2991 = vrsqrt.pop %v2989
        %v2992 = vrsqrt.pop %v2990
        %v2993 = vmul.f32 %v2979, %v2991
        %v2994 = vmul.f32 %v2980, %v2992
        %v2996 = vlaneseq
        %v2997 = vshrl.u32 %v2996, 7
        %v2998 = vsub.s32 0, %v2997
        %v2999 = vrot.slane %v2970, %v2998
        %v3001 = vmul.f32 %v2993, %v2999
        %v3002 = vmul.f32 %v2994, %v2999
        %v3004 = vlaneseq
        %v3005 = vshrl.u32 %v3004, 7
        %v3006 = vsub.s32 0, %v3005
        %v3007 = vrot.slane %v2971, %v3006
        %v3009 = vadd.f32 %v3001, %v3007
        %v3010 = vadd.f32 %v3002, %v3007
        %v3011 = vpack.c.bf16 %v3010, %v3009
        %v3012 = vld [vmem:[#allocation8] sm:$0xff]
        %v3013 = vld [vmem:[#allocation8 + $0x8] sm:$0xff]
        %v3014 = vld [vmem:[#allocation8 + $0x10] sm:$0xff]
        %v3015 = vld [vmem:[#allocation8 + $0x18] sm:$0xff]
        %v3016 = vld [vmem:[#allocation8 + $0x20] sm:$0xff]
        %v3017 = vld [vmem:[#allocation8 + $0x28] sm:$0xff]
        %v3018 = vld [vmem:[#allocation8 + $0x30] sm:$0xff]
        %v3019 = vld [vmem:[#allocation8 + $0x38] sm:$0xff]
        %v3020 = vld [vmem:[#allocation8 + $0x40] sm:$0xff]
        %v3021 = vld [vmem:[#allocation8 + $0x48] sm:$0xff]
        %v3022 = vld [vmem:[#allocation8 + $0x50] sm:$0xff]
        %v3023 = vld [vmem:[#allocation8 + $0x58] sm:$0xff]
        %v3024 = vld [vmem:[#allocation8 + $0x60] sm:$0xff]
        %v3025 = vld [vmem:[#allocation8 + $0x68] sm:$0xff]
        %v3026 = vld [vmem:[#allocation8 + $0x70] sm:$0xff]
        %v3027 = vld [vmem:[#allocation8 + $0x78] sm:$0xff]
        %v3028 = vld [vmem:[#allocation8 + $0x80] sm:$0xff]
        %v3029 = vld [vmem:[#allocation8 + $0x88] sm:$0xff]
        %v3030 = vld [vmem:[#allocation8 + $0x90] sm:$0xff]
        %v3031 = vld [vmem:[#allocation8 + $0x98] sm:$0xff]
        %v3032 = vld [vmem:[#allocation8 + $0xa0] sm:$0xff]
        %v3033 = vld [vmem:[#allocation8 + $0xa8] sm:$0xff]
        %v3034 = vld [vmem:[#allocation8 + $0xb0] sm:$0xff]
        %v3035 = vld [vmem:[#allocation8 + $0xb8] sm:$0xff]
        %v3036 = vld [vmem:[#allocation8 + $0xc0] sm:$0xff]
        %v3037 = vld [vmem:[#allocation8 + $0xc8] sm:$0xff]
        %v3038 = vld [vmem:[#allocation8 + $0xd0] sm:$0xff]
        %v3039 = vld [vmem:[#allocation8 + $0xd8] sm:$0xff]
        %v3040 = vld [vmem:[#allocation8 + $0xe0] sm:$0xff]
        %v3041 = vld [vmem:[#allocation8 + $0xe8] sm:$0xff]
        %v3042 = vld [vmem:[#allocation8 + $0xf0] sm:$0xff]
        %v3043 = vld [vmem:[#allocation8 + $0xf8] sm:$0xff]
        %v3044 = vld [vmem:[#allocation8 + $0x100] sm:$0xff]
        %v3045 = vld [vmem:[#allocation8 + $0x108] sm:$0xff]
        %v3046 = vld [vmem:[#allocation8 + $0x110] sm:$0xff]
        %v3047 = vld [vmem:[#allocation8 + $0x118] sm:$0xff]
        %v3048 = vld [vmem:[#allocation8 + $0x120] sm:$0xff]
        %v3049 = vld [vmem:[#allocation8 + $0x128] sm:$0xff]
        %v3050 = vld [vmem:[#allocation8 + $0x130] sm:$0xff]
        %v3051 = vld [vmem:[#allocation8 + $0x138] sm:$0xff]
        %v3052 = vld [vmem:[#allocation8 + $0x140] sm:$0xff]
        %v3053 = vld [vmem:[#allocation8 + $0x148] sm:$0xff]
        %v3054 = vld [vmem:[#allocation8 + $0x150] sm:$0xff]
        %v3055 = vld [vmem:[#allocation8 + $0x158] sm:$0xff]
        %v3056 = vld [vmem:[#allocation8 + $0x160] sm:$0xff]
        %v3057 = vld [vmem:[#allocation8 + $0x168] sm:$0xff]
        %v3058 = vld [vmem:[#allocation8 + $0x170] sm:$0xff]
        %v3059 = vld [vmem:[#allocation8 + $0x178] sm:$0xff]
        %v3060 = vld [vmem:[#allocation8 + $0x180] sm:$0xff]
        %v3061 = vld [vmem:[#allocation8 + $0x188] sm:$0xff]
        %v3062 = vld [vmem:[#allocation8 + $0x190] sm:$0xff]
        %v3063 = vld [vmem:[#allocation8 + $0x198] sm:$0xff]
        %v3064 = vld [vmem:[#allocation8 + $0x1a0] sm:$0xff]
        %v3065 = vld [vmem:[#allocation8 + $0x1a8] sm:$0xff]
        %v3066 = vld [vmem:[#allocation8 + $0x1b0] sm:$0xff]
        %v3067 = vld [vmem:[#allocation8 + $0x1b8] sm:$0xff]
        %v3068 = vld [vmem:[#allocation8 + $0x1c0] sm:$0xff]
        %v3069 = vld [vmem:[#allocation8 + $0x1c8] sm:$0xff]
        %v3070 = vld [vmem:[#allocation8 + $0x1d0] sm:$0xff]
        %v3071 = vld [vmem:[#allocation8 + $0x1d8] sm:$0xff]
        %v3072 = vld [vmem:[#allocation8 + $0x1e0] sm:$0xff]
        %v3073 = vld [vmem:[#allocation8 + $0x1e8] sm:$0xff]
        %v3074 = vld [vmem:[#allocation8 + $0x1f0] sm:$0xff]
        %v3075 = vld [vmem:[#allocation8 + $0x1f8] sm:$0xff]
        %v3076 = vld [vmem:[#allocation8 + $0x200] sm:$0xff]
        %v3077 = vld [vmem:[#allocation8 + $0x208] sm:$0xff]
        %v3078 = vld [vmem:[#allocation8 + $0x210] sm:$0xff]
        %v3079 = vld [vmem:[#allocation8 + $0x218] sm:$0xff]
        %v3080 = vld [vmem:[#allocation8 + $0x220] sm:$0xff]
        %v3081 = vld [vmem:[#allocation8 + $0x228] sm:$0xff]
        %v3082 = vld [vmem:[#allocation8 + $0x230] sm:$0xff]
        %v3083 = vld [vmem:[#allocation8 + $0x238] sm:$0xff]
        %v3084 = vld [vmem:[#allocation8 + $0x240] sm:$0xff]
        %v3085 = vld [vmem:[#allocation8 + $0x248] sm:$0xff]
        %v3086 = vld [vmem:[#allocation8 + $0x250] sm:$0xff]
        %v3087 = vld [vmem:[#allocation8 + $0x258] sm:$0xff]
        %v3088 = vld [vmem:[#allocation8 + $0x260] sm:$0xff]
        %v3089 = vld [vmem:[#allocation8 + $0x268] sm:$0xff]
        %v3090 = vld [vmem:[#allocation8 + $0x270] sm:$0xff]
        %v3091 = vld [vmem:[#allocation8 + $0x278] sm:$0xff]
        %v3092 = vld [vmem:[#allocation8 + $0x280] sm:$0xff]
        %v3093 = vld [vmem:[#allocation8 + $0x288] sm:$0xff]
        %v3094 = vld [vmem:[#allocation8 + $0x290] sm:$0xff]
        %v3095 = vld [vmem:[#allocation8 + $0x298] sm:$0xff]
        %v3096 = vld [vmem:[#allocation8 + $0x2a0] sm:$0xff]
        %v3097 = vld [vmem:[#allocation8 + $0x2a8] sm:$0xff]
        %v3098 = vld [vmem:[#allocation8 + $0x2b0] sm:$0xff]
        %v3099 = vld [vmem:[#allocation8 + $0x2b8] sm:$0xff]
        %v3100 = vld [vmem:[#allocation8 + $0x2c0] sm:$0xff]
        %v3101 = vld [vmem:[#allocation8 + $0x2c8] sm:$0xff]
        %v3102 = vld [vmem:[#allocation8 + $0x2d0] sm:$0xff]
        %v3103 = vld [vmem:[#allocation8 + $0x2d8] sm:$0xff]
        %v3104 = vld [vmem:[#allocation8 + $0x2e0] sm:$0xff]
        %v3105 = vld [vmem:[#allocation8 + $0x2e8] sm:$0xff]
        %v3106 = vld [vmem:[#allocation8 + $0x2f0] sm:$0xff]
        %v3107 = vld [vmem:[#allocation8 + $0x2f8] sm:$0xff]
        %v3108 = vld [vmem:[#allocation8 + $0x300] sm:$0xff]
        %v3109 = vld [vmem:[#allocation8 + $0x308] sm:$0xff]
        %v3110 = vld [vmem:[#allocation8 + $0x310] sm:$0xff]
        %v3111 = vld [vmem:[#allocation8 + $0x318] sm:$0xff]
        %v3112 = vld [vmem:[#allocation8 + $0x320] sm:$0xff]
        %v3113 = vld [vmem:[#allocation8 + $0x328] sm:$0xff]
        %v3114 = vld [vmem:[#allocation8 + $0x330] sm:$0xff]
        %v3115 = vld [vmem:[#allocation8 + $0x338] sm:$0xff]
        %v3116 = vld [vmem:[#allocation8 + $0x340] sm:$0xff]
        %v3117 = vld [vmem:[#allocation8 + $0x348] sm:$0xff]
        %v3118 = vld [vmem:[#allocation8 + $0x350] sm:$0xff]
        %v3119 = vld [vmem:[#allocation8 + $0x358] sm:$0xff]
        %v3120 = vld [vmem:[#allocation8 + $0x360] sm:$0xff]
        %v3121 = vld [vmem:[#allocation8 + $0x368] sm:$0xff]
        %v3122 = vld [vmem:[#allocation8 + $0x370] sm:$0xff]
        %v3123 = vld [vmem:[#allocation8 + $0x378] sm:$0xff]
        %v3124 = vld [vmem:[#allocation8 + $0x380] sm:$0xff]
        %v3125 = vld [vmem:[#allocation8 + $0x388] sm:$0xff]
        %v3126 = vld [vmem:[#allocation8 + $0x390] sm:$0xff]
        %v3127 = vld [vmem:[#allocation8 + $0x398] sm:$0xff]
        %v3128 = vld [vmem:[#allocation8 + $0x3a0] sm:$0xff]
        %v3129 = vld [vmem:[#allocation8 + $0x3a8] sm:$0xff]
        %v3130 = vld [vmem:[#allocation8 + $0x3b0] sm:$0xff]
        %v3131 = vld [vmem:[#allocation8 + $0x3b8] sm:$0xff]
        %v3132 = vld [vmem:[#allocation8 + $0x3c0] sm:$0xff]
        %v3133 = vld [vmem:[#allocation8 + $0x3c8] sm:$0xff]
        %v3134 = vld [vmem:[#allocation8 + $0x3d0] sm:$0xff]
        %v3135 = vld [vmem:[#allocation8 + $0x3d8] sm:$0xff]
        %v3136 = vld [vmem:[#allocation8 + $0x3e0] sm:$0xff]
        %v3137 = vld [vmem:[#allocation8 + $0x3e8] sm:$0xff]
        %v3138 = vld [vmem:[#allocation8 + $0x3f0] sm:$0xff]
        %v3139 = vld [vmem:[#allocation8 + $0x3f8] sm:$0xff]
        %v3140 = vld [vmem:[%s10] sm:$0xff]
        %v3141 = vld [vmem:[%s10 + $0x8] sm:$0xff]
        %v3144 = vlaneseq
        %v3145 = vshrl.u32 %v3144, 7
        %v3146 = vsub.s32 0, %v3145
        %v3147 = vrot.slane %v3140, %v3146
        %v3148 = vlaneseq
        %v3149 = vshrl.u32 %v3148, 7
        %v3150 = vsub.s32 1, %v3149
        %v3151 = vrot.slane %v3140, %v3150
        %v3152 = vlaneseq
        %v3153 = vshrl.u32 %v3152, 7
        %v3154 = vsub.s32 2, %v3153
        %v3155 = vrot.slane %v3140, %v3154
        %v3156 = vlaneseq
        %v3157 = vshrl.u32 %v3156, 7
        %v3158 = vsub.s32 3, %v3157
        %v3159 = vrot.slane %v3140, %v3158
        %v3160 = vlaneseq
        %v3161 = vshrl.u32 %v3160, 7
        %v3162 = vsub.s32 4, %v3161
        %v3163 = vrot.slane %v3140, %v3162
        %v3164 = vlaneseq
        %v3165 = vshrl.u32 %v3164, 7
        %v3166 = vsub.s32 5, %v3165
        %v3167 = vrot.slane %v3140, %v3166
        %v3168 = vlaneseq
        %v3169 = vshrl.u32 %v3168, 7
        %v3170 = vsub.s32 6, %v3169
        %v3171 = vrot.slane %v3140, %v3170
        %v3172 = vlaneseq
        %v3173 = vshrl.u32 %v3172, 7
        %v3174 = vsub.s32 7, %v3173
        %v3175 = vrot.slane %v3140, %v3174
        %v3176 = vlaneseq
        %v3177 = vshrl.u32 %v3176, 7
        %v3178 = vsub.s32 0, %v3177
        %v3179 = vrot.slane %v3141, %v3178
        %v3180 = vlaneseq
        %v3181 = vshrl.u32 %v3180, 7
        %v3182 = vsub.s32 1, %v3181
        %v3183 = vrot.slane %v3141, %v3182
        %v3184 = vlaneseq
        %v3185 = vshrl.u32 %v3184, 7
        %v3186 = vsub.s32 2, %v3185
        %v3187 = vrot.slane %v3141, %v3186
        %v3188 = vlaneseq
        %v3189 = vshrl.u32 %v3188, 7
        %v3190 = vsub.s32 3, %v3189
        %v3191 = vrot.slane %v3141, %v3190
        %v3192 = vlaneseq
        %v3193 = vshrl.u32 %v3192, 7
        %v3194 = vsub.s32 4, %v3193
        %v3195 = vrot.slane %v3141, %v3194
        %v3196 = vlaneseq
        %v3197 = vshrl.u32 %v3196, 7
        %v3198 = vsub.s32 5, %v3197
        %v3199 = vrot.slane %v3141, %v3198
        %v3200 = vlaneseq
        %v3201 = vshrl.u32 %v3200, 7
        %v3202 = vsub.s32 6, %v3201
        %v3203 = vrot.slane %v3141, %v3202
        %v3204 = vlaneseq
        %v3205 = vshrl.u32 %v3204, 7
        %v3206 = vsub.s32 7, %v3205
        %v3207 = vrot.slane %v3141, %v3206
        %v3352 = vunpack.c.l.b16 %v3012
        %v3353 = vunpack.c.h.b16 %v3012
        %v3354 = vunpack.c.l.b16 %v3013
        %v3355 = vunpack.c.h.b16 %v3013
        %v3356 = vunpack.c.l.b16 %v3014
        %v3357 = vunpack.c.h.b16 %v3014
        %v3358 = vunpack.c.l.b16 %v3015
        %v3359 = vunpack.c.h.b16 %v3015
        %v3360 = vunpack.c.l.b16 %v3016
        %v3361 = vunpack.c.h.b16 %v3016
        %v3362 = vunpack.c.l.b16 %v3017
        %v3363 = vunpack.c.h.b16 %v3017
        %v3364 = vunpack.c.l.b16 %v3018
        %v3365 = vunpack.c.h.b16 %v3018
        %v3366 = vunpack.c.l.b16 %v3019
        %v3367 = vunpack.c.h.b16 %v3019
        %v3368 = vunpack.c.l.b16 %v3020
        %v3369 = vunpack.c.h.b16 %v3020
        %v3370 = vunpack.c.l.b16 %v3021
        %v3371 = vunpack.c.h.b16 %v3021
        %v3372 = vunpack.c.l.b16 %v3022
        %v3373 = vunpack.c.h.b16 %v3022
        %v3374 = vunpack.c.l.b16 %v3023
        %v3375 = vunpack.c.h.b16 %v3023
        %v3376 = vunpack.c.l.b16 %v3024
        %v3377 = vunpack.c.h.b16 %v3024
        %v3378 = vunpack.c.l.b16 %v3025
        %v3379 = vunpack.c.h.b16 %v3025
        %v3380 = vunpack.c.l.b16 %v3026
        %v3381 = vunpack.c.h.b16 %v3026
        %v3382 = vunpack.c.l.b16 %v3027
        %v3383 = vunpack.c.h.b16 %v3027
        %v3384 = vunpack.c.l.b16 %v3028
        %v3385 = vunpack.c.h.b16 %v3028
        %v3386 = vunpack.c.l.b16 %v3029
        %v3387 = vunpack.c.h.b16 %v3029
        %v3388 = vunpack.c.l.b16 %v3030
        %v3389 = vunpack.c.h.b16 %v3030
        %v3390 = vunpack.c.l.b16 %v3031
        %v3391 = vunpack.c.h.b16 %v3031
        %v3392 = vunpack.c.l.b16 %v3032
        %v3393 = vunpack.c.h.b16 %v3032
        %v3394 = vunpack.c.l.b16 %v3033
        %v3395 = vunpack.c.h.b16 %v3033
        %v3396 = vunpack.c.l.b16 %v3034
        %v3397 = vunpack.c.h.b16 %v3034
        %v3398 = vunpack.c.l.b16 %v3035
        %v3399 = vunpack.c.h.b16 %v3035
        %v3400 = vunpack.c.l.b16 %v3036
        %v3401 = vunpack.c.h.b16 %v3036
        %v3402 = vunpack.c.l.b16 %v3037
        %v3403 = vunpack.c.h.b16 %v3037
        %v3404 = vunpack.c.l.b16 %v3038
        %v3405 = vunpack.c.h.b16 %v3038
        %v3406 = vunpack.c.l.b16 %v3039
        %v3407 = vunpack.c.h.b16 %v3039
        %v3408 = vunpack.c.l.b16 %v3040
        %v3409 = vunpack.c.h.b16 %v3040
        %v3410 = vunpack.c.l.b16 %v3041
        %v3411 = vunpack.c.h.b16 %v3041
        %v3412 = vunpack.c.l.b16 %v3042
        %v3413 = vunpack.c.h.b16 %v3042
        %v3414 = vunpack.c.l.b16 %v3043
        %v3415 = vunpack.c.h.b16 %v3043
        %v3416 = vunpack.c.l.b16 %v3044
        %v3417 = vunpack.c.h.b16 %v3044
        %v3418 = vunpack.c.l.b16 %v3045
        %v3419 = vunpack.c.h.b16 %v3045
        %v3420 = vunpack.c.l.b16 %v3046
        %v3421 = vunpack.c.h.b16 %v3046
        %v3422 = vunpack.c.l.b16 %v3047
        %v3423 = vunpack.c.h.b16 %v3047
        %v3424 = vunpack.c.l.b16 %v3048
        %v3425 = vunpack.c.h.b16 %v3048
        %v3426 = vunpack.c.l.b16 %v3049
        %v3427 = vunpack.c.h.b16 %v3049
        %v3428 = vunpack.c.l.b16 %v3050
        %v3429 = vunpack.c.h.b16 %v3050
        %v3430 = vunpack.c.l.b16 %v3051
        %v3431 = vunpack.c.h.b16 %v3051
        %v3432 = vunpack.c.l.b16 %v3052
        %v3433 = vunpack.c.h.b16 %v3052
        %v3434 = vunpack.c.l.b16 %v3053
        %v3435 = vunpack.c.h.b16 %v3053
        %v3436 = vunpack.c.l.b16 %v3054
        %v3437 = vunpack.c.h.b16 %v3054
        %v3438 = vunpack.c.l.b16 %v3055
        %v3439 = vunpack.c.h.b16 %v3055
        %v3440 = vunpack.c.l.b16 %v3056
        %v3441 = vunpack.c.h.b16 %v3056
        %v3442 = vunpack.c.l.b16 %v3057
        %v3443 = vunpack.c.h.b16 %v3057
        %v3444 = vunpack.c.l.b16 %v3058
        %v3445 = vunpack.c.h.b16 %v3058
        %v3446 = vunpack.c.l.b16 %v3059
        %v3447 = vunpack.c.h.b16 %v3059
        %v3448 = vunpack.c.l.b16 %v3060
        %v3449 = vunpack.c.h.b16 %v3060
        %v3450 = vunpack.c.l.b16 %v3061
        %v3451 = vunpack.c.h.b16 %v3061
        %v3452 = vunpack.c.l.b16 %v3062
        %v3453 = vunpack.c.h.b16 %v3062
        %v3454 = vunpack.c.l.b16 %v3063
        %v3455 = vunpack.c.h.b16 %v3063
        %v3456 = vunpack.c.l.b16 %v3064
        %v3457 = vunpack.c.h.b16 %v3064
        %v3458 = vunpack.c.l.b16 %v3065
        %v3459 = vunpack.c.h.b16 %v3065
        %v3460 = vunpack.c.l.b16 %v3066
        %v3461 = vunpack.c.h.b16 %v3066
        %v3462 = vunpack.c.l.b16 %v3067
        %v3463 = vunpack.c.h.b16 %v3067
        %v3464 = vunpack.c.l.b16 %v3068
        %v3465 = vunpack.c.h.b16 %v3068
        %v3466 = vunpack.c.l.b16 %v3069
        %v3467 = vunpack.c.h.b16 %v3069
        %v3468 = vunpack.c.l.b16 %v3070
        %v3469 = vunpack.c.h.b16 %v3070
        %v3470 = vunpack.c.l.b16 %v3071
        %v3471 = vunpack.c.h.b16 %v3071
        %v3472 = vunpack.c.l.b16 %v3072
        %v3473 = vunpack.c.h.b16 %v3072
        %v3474 = vunpack.c.l.b16 %v3073
        %v3475 = vunpack.c.h.b16 %v3073
        %v3476 = vunpack.c.l.b16 %v3074
        %v3477 = vunpack.c.h.b16 %v3074
        %v3478 = vunpack.c.l.b16 %v3075
        %v3479 = vunpack.c.h.b16 %v3075
        %v3480 = vunpack.c.l.b16 %v3076
        %v3481 = vunpack.c.h.b16 %v3076
        %v3482 = vunpack.c.l.b16 %v3077
        %v3483 = vunpack.c.h.b16 %v3077
        %v3484 = vunpack.c.l.b16 %v3078
        %v3485 = vunpack.c.h.b16 %v3078
        %v3486 = vunpack.c.l.b16 %v3079
        %v3487 = vunpack.c.h.b16 %v3079
        %v3488 = vunpack.c.l.b16 %v3080
        %v3489 = vunpack.c.h.b16 %v3080
        %v3490 = vunpack.c.l.b16 %v3081
        %v3491 = vunpack.c.h.b16 %v3081
        %v3492 = vunpack.c.l.b16 %v3082
        %v3493 = vunpack.c.h.b16 %v3082
        %v3494 = vunpack.c.l.b16 %v3083
        %v3495 = vunpack.c.h.b16 %v3083
        %v3496 = vunpack.c.l.b16 %v3084
        %v3497 = vunpack.c.h.b16 %v3084
        %v3498 = vunpack.c.l.b16 %v3085
        %v3499 = vunpack.c.h.b16 %v3085
        %v3500 = vunpack.c.l.b16 %v3086
        %v3501 = vunpack.c.h.b16 %v3086
        %v3502 = vunpack.c.l.b16 %v3087
        %v3503 = vunpack.c.h.b16 %v3087
        %v3504 = vunpack.c.l.b16 %v3088
        %v3505 = vunpack.c.h.b16 %v3088
        %v3506 = vunpack.c.l.b16 %v3089
        %v3507 = vunpack.c.h.b16 %v3089
        %v3508 = vunpack.c.l.b16 %v3090
        %v3509 = vunpack.c.h.b16 %v3090
        %v3510 = vunpack.c.l.b16 %v3091
        %v3511 = vunpack.c.h.b16 %v3091
        %v3512 = vunpack.c.l.b16 %v3092
        %v3513 = vunpack.c.h.b16 %v3092
        %v3514 = vunpack.c.l.b16 %v3093
        %v3515 = vunpack.c.h.b16 %v3093
        %v3516 = vunpack.c.l.b16 %v3094
        %v3517 = vunpack.c.h.b16 %v3094
        %v3518 = vunpack.c.l.b16 %v3095
        %v3519 = vunpack.c.h.b16 %v3095
        %v3520 = vunpack.c.l.b16 %v3096
        %v3521 = vunpack.c.h.b16 %v3096
        %v3522 = vunpack.c.l.b16 %v3097
        %v3523 = vunpack.c.h.b16 %v3097
        %v3524 = vunpack.c.l.b16 %v3098
        %v3525 = vunpack.c.h.b16 %v3098
        %v3526 = vunpack.c.l.b16 %v3099
        %v3527 = vunpack.c.h.b16 %v3099
        %v3528 = vunpack.c.l.b16 %v3100
        %v3529 = vunpack.c.h.b16 %v3100
        %v3530 = vunpack.c.l.b16 %v3101
        %v3531 = vunpack.c.h.b16 %v3101
        %v3532 = vunpack.c.l.b16 %v3102
        %v3533 = vunpack.c.h.b16 %v3102
        %v3534 = vunpack.c.l.b16 %v3103
        %v3535 = vunpack.c.h.b16 %v3103
        %v3536 = vunpack.c.l.b16 %v3104
        %v3537 = vunpack.c.h.b16 %v3104
        %v3538 = vunpack.c.l.b16 %v3105
        %v3539 = vunpack.c.h.b16 %v3105
        %v3540 = vunpack.c.l.b16 %v3106
        %v3541 = vunpack.c.h.b16 %v3106
        %v3542 = vunpack.c.l.b16 %v3107
        %v3543 = vunpack.c.h.b16 %v3107
        %v3544 = vunpack.c.l.b16 %v3108
        %v3545 = vunpack.c.h.b16 %v3108
        %v3546 = vunpack.c.l.b16 %v3109
        %v3547 = vunpack.c.h.b16 %v3109
        %v3548 = vunpack.c.l.b16 %v3110
        %v3549 = vunpack.c.h.b16 %v3110
        %v3550 = vunpack.c.l.b16 %v3111
        %v3551 = vunpack.c.h.b16 %v3111
        %v3552 = vunpack.c.l.b16 %v3112
        %v3553 = vunpack.c.h.b16 %v3112
        %v3554 = vunpack.c.l.b16 %v3113
        %v3555 = vunpack.c.h.b16 %v3113
        %v3556 = vunpack.c.l.b16 %v3114
        %v3557 = vunpack.c.h.b16 %v3114
        %v3558 = vunpack.c.l.b16 %v3115
        %v3559 = vunpack.c.h.b16 %v3115
        %v3560 = vunpack.c.l.b16 %v3116
        %v3561 = vunpack.c.h.b16 %v3116
        %v3562 = vunpack.c.l.b16 %v3117
        %v3563 = vunpack.c.h.b16 %v3117
        %v3564 = vunpack.c.l.b16 %v3118
        %v3565 = vunpack.c.h.b16 %v3118
        %v3566 = vunpack.c.l.b16 %v3119
        %v3567 = vunpack.c.h.b16 %v3119
        %v3568 = vunpack.c.l.b16 %v3120
        %v3569 = vunpack.c.h.b16 %v3120
        %v3570 = vunpack.c.l.b16 %v3121
        %v3571 = vunpack.c.h.b16 %v3121
        %v3572 = vunpack.c.l.b16 %v3122
        %v3573 = vunpack.c.h.b16 %v3122
        %v3574 = vunpack.c.l.b16 %v3123
        %v3575 = vunpack.c.h.b16 %v3123
        %v3576 = vunpack.c.l.b16 %v3124
        %v3577 = vunpack.c.h.b16 %v3124
        %v3578 = vunpack.c.l.b16 %v3125
        %v3579 = vunpack.c.h.b16 %v3125
        %v3580 = vunpack.c.l.b16 %v3126
        %v3581 = vunpack.c.h.b16 %v3126
        %v3582 = vunpack.c.l.b16 %v3127
        %v3583 = vunpack.c.h.b16 %v3127
        %v3584 = vunpack.c.l.b16 %v3128
        %v3585 = vunpack.c.h.b16 %v3128
        %v3586 = vunpack.c.l.b16 %v3129
        %v3587 = vunpack.c.h.b16 %v3129
        %v3588 = vunpack.c.l.b16 %v3130
        %v3589 = vunpack.c.h.b16 %v3130
        %v3590 = vunpack.c.l.b16 %v3131
        %v3591 = vunpack.c.h.b16 %v3131
        %v3592 = vunpack.c.l.b16 %v3132
        %v3593 = vunpack.c.h.b16 %v3132
        %v3594 = vunpack.c.l.b16 %v3133
        %v3595 = vunpack.c.h.b16 %v3133
        %v3596 = vunpack.c.l.b16 %v3134
        %v3597 = vunpack.c.h.b16 %v3134
        %v3598 = vunpack.c.l.b16 %v3135
        %v3599 = vunpack.c.h.b16 %v3135
        %v3600 = vunpack.c.l.b16 %v3136
        %v3601 = vunpack.c.h.b16 %v3136
        %v3602 = vunpack.c.l.b16 %v3137
        %v3603 = vunpack.c.h.b16 %v3137
        %v3604 = vunpack.c.l.b16 %v3138
        %v3605 = vunpack.c.h.b16 %v3138
        %v3606 = vunpack.c.l.b16 %v3139
        %v3607 = vunpack.c.h.b16 %v3139
        %v3608 = vpack.c.b16 %v3368, %v3352
        %v3609 = vpack.c.b16 %v3369, %v3353
        %v3610 = vpack.c.b16 %v3370, %v3354
        %v3611 = vpack.c.b16 %v3371, %v3355
        %v3612 = vpack.c.b16 %v3372, %v3356
        %v3613 = vpack.c.b16 %v3373, %v3357
        %v3614 = vpack.c.b16 %v3374, %v3358
        %v3615 = vpack.c.b16 %v3375, %v3359
        %v3616 = vpack.c.b16 %v3376, %v3360
        %v3617 = vpack.c.b16 %v3377, %v3361
        %v3618 = vpack.c.b16 %v3378, %v3362
        %v3619 = vpack.c.b16 %v3379, %v3363
        %v3620 = vpack.c.b16 %v3380, %v3364
        %v3621 = vpack.c.b16 %v3381, %v3365
        %v3622 = vpack.c.b16 %v3382, %v3366
        %v3623 = vpack.c.b16 %v3383, %v3367
        %v3624 = vpack.c.b16 %v3400, %v3384
        %v3625 = vpack.c.b16 %v3401, %v3385
        %v3626 = vpack.c.b16 %v3402, %v3386
        %v3627 = vpack.c.b16 %v3403, %v3387
        %v3628 = vpack.c.b16 %v3404, %v3388
        %v3629 = vpack.c.b16 %v3405, %v3389
        %v3630 = vpack.c.b16 %v3406, %v3390
        %v3631 = vpack.c.b16 %v3407, %v3391
        %v3632 = vpack.c.b16 %v3408, %v3392
        %v3633 = vpack.c.b16 %v3409, %v3393
        %v3634 = vpack.c.b16 %v3410, %v3394
        %v3635 = vpack.c.b16 %v3411, %v3395
        %v3636 = vpack.c.b16 %v3412, %v3396
        %v3637 = vpack.c.b16 %v3413, %v3397
        %v3638 = vpack.c.b16 %v3414, %v3398
        %v3639 = vpack.c.b16 %v3415, %v3399
        %v3640 = vpack.c.b16 %v3432, %v3416
        %v3641 = vpack.c.b16 %v3433, %v3417
        %v3642 = vpack.c.b16 %v3434, %v3418
        %v3643 = vpack.c.b16 %v3435, %v3419
        %v3644 = vpack.c.b16 %v3436, %v3420
        %v3645 = vpack.c.b16 %v3437, %v3421
        %v3646 = vpack.c.b16 %v3438, %v3422
        %v3647 = vpack.c.b16 %v3439, %v3423
        %v3648 = vpack.c.b16 %v3440, %v3424
        %v3649 = vpack.c.b16 %v3441, %v3425
        %v3650 = vpack.c.b16 %v3442, %v3426
        %v3651 = vpack.c.b16 %v3443, %v3427
        %v3652 = vpack.c.b16 %v3444, %v3428
        %v3653 = vpack.c.b16 %v3445, %v3429
        %v3654 = vpack.c.b16 %v3446, %v3430
        %v3655 = vpack.c.b16 %v3447, %v3431
        %v3656 = vpack.c.b16 %v3464, %v3448
        %v3657 = vpack.c.b16 %v3465, %v3449
        %v3658 = vpack.c.b16 %v3466, %v3450
        %v3659 = vpack.c.b16 %v3467, %v3451
        %v3660 = vpack.c.b16 %v3468, %v3452
        %v3661 = vpack.c.b16 %v3469, %v3453
        %v3662 = vpack.c.b16 %v3470, %v3454
        %v3663 = vpack.c.b16 %v3471, %v3455
        %v3664 = vpack.c.b16 %v3472, %v3456
        %v3665 = vpack.c.b16 %v3473, %v3457
        %v3666 = vpack.c.b16 %v3474, %v3458
        %v3667 = vpack.c.b16 %v3475, %v3459
        %v3668 = vpack.c.b16 %v3476, %v3460
        %v3669 = vpack.c.b16 %v3477, %v3461
        %v3670 = vpack.c.b16 %v3478, %v3462
        %v3671 = vpack.c.b16 %v3479, %v3463
        %v3672 = vpack.c.b16 %v3496, %v3480
        %v3673 = vpack.c.b16 %v3497, %v3481
        %v3674 = vpack.c.b16 %v3498, %v3482
        %v3675 = vpack.c.b16 %v3499, %v3483
        %v3676 = vpack.c.b16 %v3500, %v3484
        %v3677 = vpack.c.b16 %v3501, %v3485
        %v3678 = vpack.c.b16 %v3502, %v3486
        %v3679 = vpack.c.b16 %v3503, %v3487
        %v3680 = vpack.c.b16 %v3504, %v3488
        %v3681 = vpack.c.b16 %v3505, %v3489
        %v3682 = vpack.c.b16 %v3506, %v3490
        %v3683 = vpack.c.b16 %v3507, %v3491
        %v3684 = vpack.c.b16 %v3508, %v3492
        %v3685 = vpack.c.b16 %v3509, %v3493
        %v3686 = vpack.c.b16 %v3510, %v3494
        %v3687 = vpack.c.b16 %v3511, %v3495
        %v3688 = vpack.c.b16 %v3528, %v3512
        %v3689 = vpack.c.b16 %v3529, %v3513
        %v3690 = vpack.c.b16 %v3530, %v3514
        %v3691 = vpack.c.b16 %v3531, %v3515
        %v3692 = vpack.c.b16 %v3532, %v3516
        %v3693 = vpack.c.b16 %v3533, %v3517
        %v3694 = vpack.c.b16 %v3534, %v3518
        %v3695 = vpack.c.b16 %v3535, %v3519
        %v3696 = vpack.c.b16 %v3536, %v3520
        %v3697 = vpack.c.b16 %v3537, %v3521
        %v3698 = vpack.c.b16 %v3538, %v3522
        %v3699 = vpack.c.b16 %v3539, %v3523
        %v3700 = vpack.c.b16 %v3540, %v3524
        %v3701 = vpack.c.b16 %v3541, %v3525
        %v3702 = vpack.c.b16 %v3542, %v3526
        %v3703 = vpack.c.b16 %v3543, %v3527
        %v3704 = vpack.c.b16 %v3560, %v3544
        %v3705 = vpack.c.b16 %v3561, %v3545
        %v3706 = vpack.c.b16 %v3562, %v3546
        %v3707 = vpack.c.b16 %v3563, %v3547
        %v3708 = vpack.c.b16 %v3564, %v3548
        %v3709 = vpack.c.b16 %v3565, %v3549
        %v3710 = vpack.c.b16 %v3566, %v3550
        %v3711 = vpack.c.b16 %v3567, %v3551
        %v3712 = vpack.c.b16 %v3568, %v3552
        %v3713 = vpack.c.b16 %v3569, %v3553
        %v3714 = vpack.c.b16 %v3570, %v3554
        %v3715 = vpack.c.b16 %v3571, %v3555
        %v3716 = vpack.c.b16 %v3572, %v3556
        %v3717 = vpack.c.b16 %v3573, %v3557
        %v3718 = vpack.c.b16 %v3574, %v3558
        %v3719 = vpack.c.b16 %v3575, %v3559
        %v3720 = vpack.c.b16 %v3592, %v3576
        %v3721 = vpack.c.b16 %v3593, %v3577
        %v3722 = vpack.c.b16 %v3594, %v3578
        %v3723 = vpack.c.b16 %v3595, %v3579
        %v3724 = vpack.c.b16 %v3596, %v3580
        %v3725 = vpack.c.b16 %v3597, %v3581
        %v3726 = vpack.c.b16 %v3598, %v3582
        %v3727 = vpack.c.b16 %v3599, %v3583
        %v3728 = vpack.c.b16 %v3600, %v3584
        %v3729 = vpack.c.b16 %v3601, %v3585
        %v3730 = vpack.c.b16 %v3602, %v3586
        %v3731 = vpack.c.b16 %v3603, %v3587
        %v3732 = vpack.c.b16 %v3604, %v3588
        %v3733 = vpack.c.b16 %v3605, %v3589
        %v3734 = vpack.c.b16 %v3606, %v3590
        %v3735 = vpack.c.b16 %v3607, %v3591
        %3864 = vmatprep.subr.bf16.mxu0 %v3609
        %3865 = vmatpush1.bf16.msra.mxu0 %v3608
        %3866 = vmatprep.subr.bf16.mxu0 %v3625
        %3867 = vmatpush1.bf16.msra.mxu0 %v3624
        %3868 = vmatprep.subr.bf16.mxu0 %v3641
        %3869 = vmatpush1.bf16.msra.mxu0 %v3640
        %3870 = vmatprep.subr.bf16.mxu0 %v3657
        %3871 = vmatpush1.bf16.msra.mxu0 %v3656
        %3872 = vmatprep.subr.bf16.mxu0 %v3673
        %3873 = vmatpush1.bf16.msra.mxu0 %v3672
        %3874 = vmatprep.subr.bf16.mxu0 %v3689
        %3875 = vmatpush1.bf16.msra.mxu0 %v3688
        %3876 = vmatprep.subr.bf16.mxu0 %v3705
        %3877 = vmatpush1.bf16.msra.mxu0 %v3704
        %3878 = vmatprep.subr.bf16.mxu0 %v3721
        %3879 = vmatpush1.bf16.msra.mxu0 %v3720
        %3880 = vmatprep.subr.bf16.mxu0 0
        %3881 = vmatpush1.bf16.msra.mxu0 0
        %3882 = vmatprep.subr.bf16.mxu0 0
        %3883 = vmatpush1.bf16.msra.mxu0 0
        %3884 = vmatprep.subr.bf16.mxu0 0
        %3885 = vmatpush1.bf16.msra.mxu0 0
        %3886 = vmatprep.subr.bf16.mxu0 0
        %3887 = vmatpush1.bf16.msra.mxu0 0
        %3888 = vmatprep.subr.bf16.mxu0 0
        %3889 = vmatpush1.bf16.msra.mxu0 0
        %3890 = vmatprep.subr.bf16.mxu0 0
        %3891 = vmatpush1.bf16.msra.mxu0 0
        %3892 = vmatprep.subr.bf16.mxu0 0
        %3893 = vmatpush1.bf16.msra.mxu0 0
        %3894 = vmatprep.subr.bf16.mxu0 0
        %3895 = vmatpush1.bf16.msra.mxu0 0
        %3896 = vmatprep.mubr.bf16.mxu0 0
        %3897 = vmatmul.mubr.bf16.gmra.mrb[0].mxu0 %v3011
        %v3898 = vpop.f32.mrb[0].mxu0
        %v3899 = vadd.f32 %v3147, %v3898
        %v3900 = vpop.f32.mrb[0].mxu0
        %v3901 = vadd.f32 %v3151, %v3900
        %v3902 = vpop.f32.mrb[0].mxu0
        %v3903 = vadd.f32 %v3147, %v3902
        %v3904 = vpop.f32.mrb[0].mxu0
        %v3905 = vadd.f32 %v3151, %v3904
        %3906 = vdwg.mxu0
        %3907 = vmatprep.subr.bf16.mxu0 %v3611
        %3908 = vmatpush1.bf16.msra.mxu0 %v3610
        %3909 = vmatprep.subr.bf16.mxu0 %v3627
        %3910 = vmatpush1.bf16.msra.mxu0 %v3626
        %3911 = vmatprep.subr.bf16.mxu0 %v3643
        %3912 = vmatpush1.bf16.msra.mxu0 %v3642
        %3913 = vmatprep.subr.bf16.mxu0 %v3659
        %3914 = vmatpush1.bf16.msra.mxu0 %v3658
        %3915 = vmatprep.subr.bf16.mxu0 %v3675
        %3916 = vmatpush1.bf16.msra.mxu0 %v3674
        %3917 = vmatprep.subr.bf16.mxu0 %v3691
        %3918 = vmatpush1.bf16.msra.mxu0 %v3690
        %3919 = vmatprep.subr.bf16.mxu0 %v3707
        %3920 = vmatpush1.bf16.msra.mxu0 %v3706
        %3921 = vmatprep.subr.bf16.mxu0 %v3723
        %3922 = vmatpush1.bf16.msra.mxu0 %v3722
        %3923 = vmatprep.subr.bf16.mxu0 0
        %3924 = vmatpush1.bf16.msra.mxu0 0
        %3925 = vmatprep.subr.bf16.mxu0 0
        %3926 = vmatpush1.bf16.msra.mxu0 0
        %3927 = vmatprep.subr.bf16.mxu0 0
        %3928 = vmatpush1.bf16.msra.mxu0 0
        %3929 = vmatprep.subr.bf16.mxu0 0
        %3930 = vmatpush1.bf16.msra.mxu0 0
        %3931 = vmatprep.subr.bf16.mxu0 0
        %3932 = vmatpush1.bf16.msra.mxu0 0
        %3933 = vmatprep.subr.bf16.mxu0 0
        %3934 = vmatpush1.bf16.msra.mxu0 0
        %3935 = vmatprep.subr.bf16.mxu0 0
        %3936 = vmatpush1.bf16.msra.mxu0 0
        %3937 = vmatprep.subr.bf16.mxu0 0
        %3938 = vmatpush1.bf16.msra.mxu0 0
        %3939 = vmatprep.mubr.bf16.mxu0 0
        %3940 = vmatmul.mubr.bf16.gmra.mrb[0].mxu0 %v3011
        %v3941 = vpop.f32.mrb[0].mxu0
        %v3942 = vadd.f32 %v3155, %v3941
        %v3943 = vpop.f32.mrb[0].mxu0
        %v3944 = vadd.f32 %v3159, %v3943
        %v3945 = vpop.f32.mrb[0].mxu0
        %v3946 = vadd.f32 %v3155, %v3945
        %v3947 = vpop.f32.mrb[0].mxu0
        %v3948 = vadd.f32 %v3159, %v3947
        %3949 = vdwg.mxu0
        %3950 = vmatprep.subr.bf16.mxu0 %v3613
        %3951 = vmatpush1.bf16.msra.mxu0 %v3612
        %3952 = vmatprep.subr.bf16.mxu0 %v3629
        %3953 = vmatpush1.bf16.msra.mxu0 %v3628
        %3954 = vmatprep.subr.bf16.mxu0 %v3645
        %3955 = vmatpush1.bf16.msra.mxu0 %v3644
        %3956 = vmatprep.subr.bf16.mxu0 %v3661
        %3957 = vmatpush1.bf16.msra.mxu0 %v3660
        %3958 = vmatprep.subr.bf16.mxu0 %v3677
        %3959 = vmatpush1.bf16.msra.mxu0 %v3676
        %3960 = vmatprep.subr.bf16.mxu0 %v3693
        %3961 = vmatpush1.bf16.msra.mxu0 %v3692
        %3962 = vmatprep.subr.bf16.mxu0 %v3709
        %3963 = vmatpush1.bf16.msra.mxu0 %v3708
        %3964 = vmatprep.subr.bf16.mxu0 %v3725
        %3965 = vmatpush1.bf16.msra.mxu0 %v3724
        %3966 = vmatprep.subr.bf16.mxu0 0
        %3967 = vmatpush1.bf16.msra.mxu0 0
        %3968 = vmatprep.subr.bf16.mxu0 0
        %3969 = vmatpush1.bf16.msra.mxu0 0
        %3970 = vmatprep.subr.bf16.mxu0 0
        %3971 = vmatpush1.bf16.msra.mxu0 0
        %3972 = vmatprep.subr.bf16.mxu0 0
        %3973 = vmatpush1.bf16.msra.mxu0 0
        %3974 = vmatprep.subr.bf16.mxu0 0
        %3975 = vmatpush1.bf16.msra.mxu0 0
        %3976 = vmatprep.subr.bf16.mxu0 0
        %3977 = vmatpush1.bf16.msra.mxu0 0
        %3978 = vmatprep.subr.bf16.mxu0 0
        %3979 = vmatpush1.bf16.msra.mxu0 0
        %3980 = vmatprep.subr.bf16.mxu0 0
        %3981 = vmatpush1.bf16.msra.mxu0 0
        %3982 = vmatprep.mubr.bf16.mxu0 0
        %3983 = vmatmul.mubr.bf16.gmra.mrb[0].mxu0 %v3011
        %v3984 = vpop.f32.mrb[0].mxu0
        %v3985 = vadd.f32 %v3163, %v3984
        %v3986 = vpop.f32.mrb[0].mxu0
        %v3987 = vadd.f32 %v3167, %v3986
        %v3988 = vpop.f32.mrb[0].mxu0
        %v3989 = vadd.f32 %v3163, %v3988
        %v3990 = vpop.f32.mrb[0].mxu0
        %v3991 = vadd.f32 %v3167, %v3990
        %3992 = vdwg.mxu0
        %3993 = vmatprep.subr.bf16.mxu0 %v3615
        %3994 = vmatpush1.bf16.msra.mxu0 %v3614
        %3995 = vmatprep.subr.bf16.mxu0 %v3631
        %3996 = vmatpush1.bf16.msra.mxu0 %v3630
        %3997 = vmatprep.subr.bf16.mxu0 %v3647
        %3998 = vmatpush1.bf16.msra.mxu0 %v3646
        %3999 = vmatprep.subr.bf16.mxu0 %v3663
        %4000 = vmatpush1.bf16.msra.mxu0 %v3662
        %4001 = vmatprep.subr.bf16.mxu0 %v3679
        %4002 = vmatpush1.bf16.msra.mxu0 %v3678
        %4003 = vmatprep.subr.bf16.mxu0 %v3695
        %4004 = vmatpush1.bf16.msra.mxu0 %v3694
        %4005 = vmatprep.subr.bf16.mxu0 %v3711
        %4006 = vmatpush1.bf16.msra.mxu0 %v3710
        %4007 = vmatprep.subr.bf16.mxu0 %v3727
        %4008 = vmatpush1.bf16.msra.mxu0 %v3726
        %4009 = vmatprep.subr.bf16.mxu0 0
        %4010 = vmatpush1.bf16.msra.mxu0 0
        %4011 = vmatprep.subr.bf16.mxu0 0
        %4012 = vmatpush1.bf16.msra.mxu0 0
        %4013 = vmatprep.subr.bf16.mxu0 0
        %4014 = vmatpush1.bf16.msra.mxu0 0
        %4015 = vmatprep.subr.bf16.mxu0 0
        %4016 = vmatpush1.bf16.msra.mxu0 0
        %4017 = vmatprep.subr.bf16.mxu0 0
        %4018 = vmatpush1.bf16.msra.mxu0 0
        %4019 = vmatprep.subr.bf16.mxu0 0
        %4020 = vmatpush1.bf16.msra.mxu0 0
        %4021 = vmatprep.subr.bf16.mxu0 0
        %4022 = vmatpush1.bf16.msra.mxu0 0
        %4023 = vmatprep.subr.bf16.mxu0 0
        %4024 = vmatpush1.bf16.msra.mxu0 0
        %4025 = vmatprep.mubr.bf16.mxu0 0
        %4026 = vmatmul.mubr.bf16.gmra.mrb[0].mxu0 %v3011
        %v4027 = vpop.f32.mrb[0].mxu0
        %v4028 = vadd.f32 %v3171, %v4027
        %v4029 = vpop.f32.mrb[0].mxu0
        %v4030 = vadd.f32 %v3175, %v4029
        %v4031 = vpop.f32.mrb[0].mxu0
        %v4032 = vadd.f32 %v3171, %v4031
        %v4033 = vpop.f32.mrb[0].mxu0
        %v4034 = vadd.f32 %v3175, %v4033
        %4035 = vdwg.mxu0
        %4036 = vmatprep.subr.bf16.mxu0 %v3617
        %4037 = vmatpush1.bf16.msra.mxu0 %v3616
        %4038 = vmatprep.subr.bf16.mxu0 %v3633
        %4039 = vmatpush1.bf16.msra.mxu0 %v3632
        %4040 = vmatprep.subr.bf16.mxu0 %v3649
        %4041 = vmatpush1.bf16.msra.mxu0 %v3648
        %4042 = vmatprep.subr.bf16.mxu0 %v3665
        %4043 = vmatpush1.bf16.msra.mxu0 %v3664
        %4044 = vmatprep.subr.bf16.mxu0 %v3681
        %4045 = vmatpush1.bf16.msra.mxu0 %v3680
        %4046 = vmatprep.subr.bf16.mxu0 %v3697
        %4047 = vmatpush1.bf16.msra.mxu0 %v3696
        %4048 = vmatprep.subr.bf16.mxu0 %v3713
        %4049 = vmatpush1.bf16.msra.mxu0 %v3712
        %4050 = vmatprep.subr.bf16.mxu0 %v3729
        %4051 = vmatpush1.bf16.msra.mxu0 %v3728
        %4052 = vmatprep.subr.bf16.mxu0 0
        %4053 = vmatpush1.bf16.msra.mxu0 0
        %4054 = vmatprep.subr.bf16.mxu0 0
        %4055 = vmatpush1.bf16.msra.mxu0 0
        %4056 = vmatprep.subr.bf16.mxu0 0
        %4057 = vmatpush1.bf16.msra.mxu0 0
        %4058 = vmatprep.subr.bf16.mxu0 0
        %4059 = vmatpush1.bf16.msra.mxu0 0
        %4060 = vmatprep.subr.bf16.mxu0 0
        %4061 = vmatpush1.bf16.msra.mxu0 0
        %4062 = vmatprep.subr.bf16.mxu0 0
        %4063 = vmatpush1.bf16.msra.mxu0 0
        %4064 = vmatprep.subr.bf16.mxu0 0
        %4065 = vmatpush1.bf16.msra.mxu0 0
        %4066 = vmatprep.subr.bf16.mxu0 0
        %4067 = vmatpush1.bf16.msra.mxu0 0
        %4068 = vmatprep.mubr.bf16.mxu0 0
        %4069 = vmatmul.mubr.bf16.gmra.mrb[0].mxu0 %v3011
        %v4070 = vpop.f32.mrb[0].mxu0
        %v4071 = vadd.f32 %v3179, %v4070
        %v4072 = vpop.f32.mrb[0].mxu0
        %v4073 = vadd.f32 %v3183, %v4072
        %v4074 = vpop.f32.mrb[0].mxu0
        %v4075 = vadd.f32 %v3179, %v4074
        %v4076 = vpop.f32.mrb[0].mxu0
        %v4077 = vadd.f32 %v3183, %v4076
        %4078 = vdwg.mxu0
        %4079 = vmatprep.subr.bf16.mxu0 %v3619
        %4080 = vmatpush1.bf16.msra.mxu0 %v3618
        %4081 = vmatprep.subr.bf16.mxu0 %v3635
        %4082 = vmatpush1.bf16.msra.mxu0 %v3634
        %4083 = vmatprep.subr.bf16.mxu0 %v3651
        %4084 = vmatpush1.bf16.msra.mxu0 %v3650
        %4085 = vmatprep.subr.bf16.mxu0 %v3667
        %4086 = vmatpush1.bf16.msra.mxu0 %v3666
        %4087 = vmatprep.subr.bf16.mxu0 %v3683
        %4088 = vmatpush1.bf16.msra.mxu0 %v3682
        %4089 = vmatprep.subr.bf16.mxu0 %v3699
        %4090 = vmatpush1.bf16.msra.mxu0 %v3698
        %4091 = vmatprep.subr.bf16.mxu0 %v3715
        %4092 = vmatpush1.bf16.msra.mxu0 %v3714
        %4093 = vmatprep.subr.bf16.mxu0 %v3731
        %4094 = vmatpush1.bf16.msra.mxu0 %v3730
        %4095 = vmatprep.subr.bf16.mxu0 0
        %4096 = vmatpush1.bf16.msra.mxu0 0
        %4097 = vmatprep.subr.bf16.mxu0 0
        %4098 = vmatpush1.bf16.msra.mxu0 0
        %4099 = vmatprep.subr.bf16.mxu0 0
        %4100 = vmatpush1.bf16.msra.mxu0 0
        %4101 = vmatprep.subr.bf16.mxu0 0
        %4102 = vmatpush1.bf16.msra.mxu0 0
        %4103 = vmatprep.subr.bf16.mxu0 0
        %4104 = vmatpush1.bf16.msra.mxu0 0
        %4105 = vmatprep.subr.bf16.mxu0 0
        %4106 = vmatpush1.bf16.msra.mxu0 0
        %4107 = vmatprep.subr.bf16.mxu0 0
        %4108 = vmatpush1.bf16.msra.mxu0 0
        %4109 = vmatprep.subr.bf16.mxu0 0
        %4110 = vmatpush1.bf16.msra.mxu0 0
        %4111 = vmatprep.mubr.bf16.mxu0 0
        %4112 = vmatmul.mubr.bf16.gmra.mrb[0].mxu0 %v3011
        %v4113 = vpop.f32.mrb[0].mxu0
        %v4114 = vadd.f32 %v3187, %v4113
        %v4115 = vpop.f32.mrb[0].mxu0
        %v4116 = vadd.f32 %v3191, %v4115
        %v4117 = vpop.f32.mrb[0].mxu0
        %v4118 = vadd.f32 %v3187, %v4117
        %v4119 = vpop.f32.mrb[0].mxu0
        %v4120 = vadd.f32 %v3191, %v4119
        %4121 = vdwg.mxu0
        %4122 = vmatprep.subr.bf16.mxu0 %v3621
        %4123 = vmatpush1.bf16.msra.mxu0 %v3620
        %4124 = vmatprep.subr.bf16.mxu0 %v3637
        %4125 = vmatpush1.bf16.msra.mxu0 %v3636
        %4126 = vmatprep.subr.bf16.mxu0 %v3653
        %4127 = vmatpush1.bf16.msra.mxu0 %v3652
        %4128 = vmatprep.subr.bf16.mxu0 %v3669
        %4129 = vmatpush1.bf16.msra.mxu0 %v3668
        %4130 = vmatprep.subr.bf16.mxu0 %v3685
        %4131 = vmatpush1.bf16.msra.mxu0 %v3684
        %4132 = vmatprep.subr.bf16.mxu0 %v3701
        %4133 = vmatpush1.bf16.msra.mxu0 %v3700
        %4134 = vmatprep.subr.bf16.mxu0 %v3717
        %4135 = vmatpush1.bf16.msra.mxu0 %v3716
        %4136 = vmatprep.subr.bf16.mxu0 %v3733
        %4137 = vmatpush1.bf16.msra.mxu0 %v3732
        %4138 = vmatprep.subr.bf16.mxu0 0
        %4139 = vmatpush1.bf16.msra.mxu0 0
        %4140 = vmatprep.subr.bf16.mxu0 0
        %4141 = vmatpush1.bf16.msra.mxu0 0
        %4142 = vmatprep.subr.bf16.mxu0 0
        %4143 = vmatpush1.bf16.msra.mxu0 0
        %4144 = vmatprep.subr.bf16.mxu0 0
        %4145 = vmatpush1.bf16.msra.mxu0 0
        %4146 = vmatprep.subr.bf16.mxu0 0
        %4147 = vmatpush1.bf16.msra.mxu0 0
        %4148 = vmatprep.subr.bf16.mxu0 0
        %4149 = vmatpush1.bf16.msra.mxu0 0
        %4150 = vmatprep.subr.bf16.mxu0 0
        %4151 = vmatpush1.bf16.msra.mxu0 0
        %4152 = vmatprep.subr.bf16.mxu0 0
        %4153 = vmatpush1.bf16.msra.mxu0 0
        %4154 = vmatprep.mubr.bf16.mxu0 0
        %4155 = vmatmul.mubr.bf16.gmra.mrb[0].mxu0 %v3011
        %v4156 = vpop.f32.mrb[0].mxu0
        %v4157 = vadd.f32 %v3195, %v4156
        %v4158 = vpop.f32.mrb[0].mxu0
        %v4159 = vadd.f32 %v3199, %v4158
        %v4160 = vpop.f32.mrb[0].mxu0
        %v4161 = vadd.f32 %v3195, %v4160
        %v4162 = vpop.f32.mrb[0].mxu0
        %v4163 = vadd.f32 %v3199, %v4162
        %4164 = vdwg.mxu0
        %4165 = vmatprep.subr.bf16.mxu0 %v3623
        %4166 = vmatpush1.bf16.msra.mxu0 %v3622
        %4167 = vmatprep.subr.bf16.mxu0 %v3639
        %4168 = vmatpush1.bf16.msra.mxu0 %v3638
        %4169 = vmatprep.subr.bf16.mxu0 %v3655
        %4170 = vmatpush1.bf16.msra.mxu0 %v3654
        %4171 = vmatprep.subr.bf16.mxu0 %v3671
        %4172 = vmatpush1.bf16.msra.mxu0 %v3670
        %4173 = vmatprep.subr.bf16.mxu0 %v3687
        %4174 = vmatpush1.bf16.msra.mxu0 %v3686
        %4175 = vmatprep.subr.bf16.mxu0 %v3703
        %4176 = vmatpush1.bf16.msra.mxu0 %v3702
        %4177 = vmatprep.subr.bf16.mxu0 %v3719
        %4178 = vmatpush1.bf16.msra.mxu0 %v3718
        %4179 = vmatprep.subr.bf16.mxu0 %v3735
        %4180 = vmatpush1.bf16.msra.mxu0 %v3734
        %4181 = vmatprep.subr.bf16.mxu0 0
        %4182 = vmatpush1.bf16.msra.mxu0 0
        %4183 = vmatprep.subr.bf16.mxu0 0
        %4184 = vmatpush1.bf16.msra.mxu0 0
        %4185 = vmatprep.subr.bf16.mxu0 0
        %4186 = vmatpush1.bf16.msra.mxu0 0
        %4187 = vmatprep.subr.bf16.mxu0 0
        %4188 = vmatpush1.bf16.msra.mxu0 0
        %4189 = vmatprep.subr.bf16.mxu0 0
        %4190 = vmatpush1.bf16.msra.mxu0 0
        %4191 = vmatprep.subr.bf16.mxu0 0
        %4192 = vmatpush1.bf16.msra.mxu0 0
        %4193 = vmatprep.subr.bf16.mxu0 0
        %4194 = vmatpush1.bf16.msra.mxu0 0
        %4195 = vmatprep.subr.bf16.mxu0 0
        %4196 = vmatpush1.bf16.msra.mxu0 0
        %4197 = vmatprep.mubr.bf16.mxu0 0
        %4198 = vmatmul.mubr.bf16.gmra.mrb[0].mxu0 %v3011
        %v4199 = vpop.f32.mrb[0].mxu0
        %v4200 = vadd.f32 %v3203, %v4199
        %v4201 = vpop.f32.mrb[0].mxu0
        %v4202 = vadd.f32 %v3207, %v4201
        %v4203 = vpop.f32.mrb[0].mxu0
        %v4204 = vadd.f32 %v3203, %v4203
        %v4205 = vpop.f32.mrb[0].mxu0
        %v4206 = vadd.f32 %v3207, %v4205
        %4207 = vdwg.mxu0
        %v4208 = vmax.f32 %v3899, 0.0
        %v4209 = vmax.f32 %v3901, 0.0
        %v4210 = vmax.f32 %v3942, 0.0
        %v4211 = vmax.f32 %v3944, 0.0
        %v4212 = vmax.f32 %v3985, 0.0
        %v4213 = vmax.f32 %v3987, 0.0
        %v4214 = vmax.f32 %v4028, 0.0
        %v4215 = vmax.f32 %v4030, 0.0
        %v4216 = vmax.f32 %v4071, 0.0
        %v4217 = vmax.f32 %v4073, 0.0
        %v4218 = vmax.f32 %v4114, 0.0
        %v4219 = vmax.f32 %v4116, 0.0
        %v4220 = vmax.f32 %v4157, 0.0
        %v4221 = vmax.f32 %v4159, 0.0
        %v4222 = vmax.f32 %v4200, 0.0
        %v4223 = vmax.f32 %v4202, 0.0
        %v4224 = vmax.f32 %v3903, 0.0
        %v4225 = vmax.f32 %v3905, 0.0
        %v4226 = vmax.f32 %v3946, 0.0
        %v4227 = vmax.f32 %v3948, 0.0
        %v4228 = vmax.f32 %v3989, 0.0
        %v4229 = vmax.f32 %v3991, 0.0
        %v4230 = vmax.f32 %v4032, 0.0
        %v4231 = vmax.f32 %v4034, 0.0
        %v4232 = vmax.f32 %v4075, 0.0
        %v4233 = vmax.f32 %v4077, 0.0
        %v4234 = vmax.f32 %v4118, 0.0
        %v4235 = vmax.f32 %v4120, 0.0
        %v4236 = vmax.f32 %v4161, 0.0
        %v4237 = vmax.f32 %v4163, 0.0
        %v4238 = vmax.f32 %v4204, 0.0
        %v4239 = vmax.f32 %v4206, 0.0
        %v4240 = vpack.c.bf16 %v4224, %v4208
        %v4241 = vpack.c.bf16 %v4225, %v4209
        %v4242 = vpack.c.bf16 %v4226, %v4210
        %v4243 = vpack.c.bf16 %v4227, %v4211
        %v4244 = vpack.c.bf16 %v4228, %v4212
        %v4245 = vpack.c.bf16 %v4229, %v4213
        %v4246 = vpack.c.bf16 %v4230, %v4214
        %v4247 = vpack.c.bf16 %v4231, %v4215
        %v4248 = vpack.c.bf16 %v4232, %v4216
        %v4249 = vpack.c.bf16 %v4233, %v4217
        %v4250 = vpack.c.bf16 %v4234, %v4218
        %v4251 = vpack.c.bf16 %v4235, %v4219
        %v4252 = vpack.c.bf16 %v4236, %v4220
        %v4253 = vpack.c.bf16 %v4237, %v4221
        %v4254 = vpack.c.bf16 %v4238, %v4222
        %v4255 = vpack.c.bf16 %v4239, %v4223
        %v4256 = vld [vmem:[#allocation10] sm:$0xf]
        %v4257 = vld [vmem:[#allocation10 + $0x4] sm:$0xf]
        %v4258 = vld [vmem:[#allocation10 + $0x8] sm:$0xf]
        %v4259 = vld [vmem:[#allocation10 + $0xc] sm:$0xf]
        %v4260 = vld [vmem:[#allocation10 + $0x10] sm:$0xf]
        %v4261 = vld [vmem:[#allocation10 + $0x14] sm:$0xf]
        %v4262 = vld [vmem:[#allocation10 + $0x18] sm:$0xf]
        %v4263 = vld [vmem:[#allocation10 + $0x1c] sm:$0xf]
        %v4264 = vld [vmem:[#allocation10 + $0x20] sm:$0xf]
        %v4265 = vld [vmem:[#allocation10 + $0x24] sm:$0xf]
        %v4266 = vld [vmem:[#allocation10 + $0x28] sm:$0xf]
        %v4267 = vld [vmem:[#allocation10 + $0x2c] sm:$0xf]
        %v4268 = vld [vmem:[#allocation10 + $0x30] sm:$0xf]
        %v4269 = vld [vmem:[#allocation10 + $0x34] sm:$0xf]
        %v4270 = vld [vmem:[#allocation10 + $0x38] sm:$0xf]
        %v4271 = vld [vmem:[#allocation10 + $0x3c] sm:$0xf]
        %v4272 = vld [vmem:[#allocation10 + $0x40] sm:$0xf]
        %v4273 = vld [vmem:[#allocation10 + $0x44] sm:$0xf]
        %v4274 = vld [vmem:[#allocation10 + $0x48] sm:$0xf]
        %v4275 = vld [vmem:[#allocation10 + $0x4c] sm:$0xf]
        %v4276 = vld [vmem:[#allocation10 + $0x50] sm:$0xf]
        %v4277 = vld [vmem:[#allocation10 + $0x54] sm:$0xf]
        %v4278 = vld [vmem:[#allocation10 + $0x58] sm:$0xf]
        %v4279 = vld [vmem:[#allocation10 + $0x5c] sm:$0xf]
        %v4280 = vld [vmem:[#allocation10 + $0x60] sm:$0xf]
        %v4281 = vld [vmem:[#allocation10 + $0x64] sm:$0xf]
        %v4282 = vld [vmem:[#allocation10 + $0x68] sm:$0xf]
        %v4283 = vld [vmem:[#allocation10 + $0x6c] sm:$0xf]
        %v4284 = vld [vmem:[#allocation10 + $0x70] sm:$0xf]
        %v4285 = vld [vmem:[#allocation10 + $0x74] sm:$0xf]
        %v4286 = vld [vmem:[#allocation10 + $0x78] sm:$0xf]
        %v4287 = vld [vmem:[#allocation10 + $0x7c] sm:$0xf]
        %v4288 = vld [vmem:[#allocation10 + $0x80] sm:$0xf]
        %v4289 = vld [vmem:[#allocation10 + $0x84] sm:$0xf]
        %v4290 = vld [vmem:[#allocation10 + $0x88] sm:$0xf]
        %v4291 = vld [vmem:[#allocation10 + $0x8c] sm:$0xf]
        %v4292 = vld [vmem:[#allocation10 + $0x90] sm:$0xf]
        %v4293 = vld [vmem:[#allocation10 + $0x94] sm:$0xf]
        %v4294 = vld [vmem:[#allocation10 + $0x98] sm:$0xf]
        %v4295 = vld [vmem:[#allocation10 + $0x9c] sm:$0xf]
        %v4296 = vld [vmem:[#allocation10 + $0xa0] sm:$0xf]
        %v4297 = vld [vmem:[#allocation10 + $0xa4] sm:$0xf]
        %v4298 = vld [vmem:[#allocation10 + $0xa8] sm:$0xf]
        %v4299 = vld [vmem:[#allocation10 + $0xac] sm:$0xf]
        %v4300 = vld [vmem:[#allocation10 + $0xb0] sm:$0xf]
        %v4301 = vld [vmem:[#allocation10 + $0xb4] sm:$0xf]
        %v4302 = vld [vmem:[#allocation10 + $0xb8] sm:$0xf]
        %v4303 = vld [vmem:[#allocation10 + $0xbc] sm:$0xf]
        %v4304 = vld [vmem:[#allocation10 + $0xc0] sm:$0xf]
        %v4305 = vld [vmem:[#allocation10 + $0xc4] sm:$0xf]
        %v4306 = vld [vmem:[#allocation10 + $0xc8] sm:$0xf]
        %v4307 = vld [vmem:[#allocation10 + $0xcc] sm:$0xf]
        %v4308 = vld [vmem:[#allocation10 + $0xd0] sm:$0xf]
        %v4309 = vld [vmem:[#allocation10 + $0xd4] sm:$0xf]
        %v4310 = vld [vmem:[#allocation10 + $0xd8] sm:$0xf]
        %v4311 = vld [vmem:[#allocation10 + $0xdc] sm:$0xf]
        %v4312 = vld [vmem:[#allocation10 + $0xe0] sm:$0xf]
        %v4313 = vld [vmem:[#allocation10 + $0xe4] sm:$0xf]
        %v4314 = vld [vmem:[#allocation10 + $0xe8] sm:$0xf]
        %v4315 = vld [vmem:[#allocation10 + $0xec] sm:$0xf]
        %v4316 = vld [vmem:[#allocation10 + $0xf0] sm:$0xf]
        %v4317 = vld [vmem:[#allocation10 + $0xf4] sm:$0xf]
        %v4318 = vld [vmem:[#allocation10 + $0xf8] sm:$0xf]
        %v4319 = vld [vmem:[#allocation10 + $0xfc] sm:$0xf]
        %v4320 = vld [vmem:[#allocation10 + $0x100] sm:$0xf]
        %v4321 = vld [vmem:[#allocation10 + $0x104] sm:$0xf]
        %v4322 = vld [vmem:[#allocation10 + $0x108] sm:$0xf]
        %v4323 = vld [vmem:[#allocation10 + $0x10c] sm:$0xf]
        %v4324 = vld [vmem:[#allocation10 + $0x110] sm:$0xf]
        %v4325 = vld [vmem:[#allocation10 + $0x114] sm:$0xf]
        %v4326 = vld [vmem:[#allocation10 + $0x118] sm:$0xf]
        %v4327 = vld [vmem:[#allocation10 + $0x11c] sm:$0xf]
        %v4328 = vld [vmem:[#allocation10 + $0x120] sm:$0xf]
        %v4329 = vld [vmem:[#allocation10 + $0x124] sm:$0xf]
        %v4330 = vld [vmem:[#allocation10 + $0x128] sm:$0xf]
        %v4331 = vld [vmem:[#allocation10 + $0x12c] sm:$0xf]
        %v4332 = vld [vmem:[#allocation10 + $0x130] sm:$0xf]
        %v4333 = vld [vmem:[#allocation10 + $0x134] sm:$0xf]
        %v4334 = vld [vmem:[#allocation10 + $0x138] sm:$0xf]
        %v4335 = vld [vmem:[#allocation10 + $0x13c] sm:$0xf]
        %v4336 = vld [vmem:[#allocation10 + $0x140] sm:$0xf]
        %v4337 = vld [vmem:[#allocation10 + $0x144] sm:$0xf]
        %v4338 = vld [vmem:[#allocation10 + $0x148] sm:$0xf]
        %v4339 = vld [vmem:[#allocation10 + $0x14c] sm:$0xf]
        %v4340 = vld [vmem:[#allocation10 + $0x150] sm:$0xf]
        %v4341 = vld [vmem:[#allocation10 + $0x154] sm:$0xf]
        %v4342 = vld [vmem:[#allocation10 + $0x158] sm:$0xf]
        %v4343 = vld [vmem:[#allocation10 + $0x15c] sm:$0xf]
        %v4344 = vld [vmem:[#allocation10 + $0x160] sm:$0xf]
        %v4345 = vld [vmem:[#allocation10 + $0x164] sm:$0xf]
        %v4346 = vld [vmem:[#allocation10 + $0x168] sm:$0xf]
        %v4347 = vld [vmem:[#allocation10 + $0x16c] sm:$0xf]
        %v4348 = vld [vmem:[#allocation10 + $0x170] sm:$0xf]
        %v4349 = vld [vmem:[#allocation10 + $0x174] sm:$0xf]
        %v4350 = vld [vmem:[#allocation10 + $0x178] sm:$0xf]
        %v4351 = vld [vmem:[#allocation10 + $0x17c] sm:$0xf]
        %v4352 = vld [vmem:[#allocation10 + $0x180] sm:$0xf]
        %v4353 = vld [vmem:[#allocation10 + $0x184] sm:$0xf]
        %v4354 = vld [vmem:[#allocation10 + $0x188] sm:$0xf]
        %v4355 = vld [vmem:[#allocation10 + $0x18c] sm:$0xf]
        %v4356 = vld [vmem:[#allocation10 + $0x190] sm:$0xf]
        %v4357 = vld [vmem:[#allocation10 + $0x194] sm:$0xf]
        %v4358 = vld [vmem:[#allocation10 + $0x198] sm:$0xf]
        %v4359 = vld [vmem:[#allocation10 + $0x19c] sm:$0xf]
        %v4360 = vld [vmem:[#allocation10 + $0x1a0] sm:$0xf]
        %v4361 = vld [vmem:[#allocation10 + $0x1a4] sm:$0xf]
        %v4362 = vld [vmem:[#allocation10 + $0x1a8] sm:$0xf]
        %v4363 = vld [vmem:[#allocation10 + $0x1ac] sm:$0xf]
        %v4364 = vld [vmem:[#allocation10 + $0x1b0] sm:$0xf]
        %v4365 = vld [vmem:[#allocation10 + $0x1b4] sm:$0xf]
        %v4366 = vld [vmem:[#allocation10 + $0x1b8] sm:$0xf]
        %v4367 = vld [vmem:[#allocation10 + $0x1bc] sm:$0xf]
        %v4368 = vld [vmem:[#allocation10 + $0x1c0] sm:$0xf]
        %v4369 = vld [vmem:[#allocation10 + $0x1c4] sm:$0xf]
        %v4370 = vld [vmem:[#allocation10 + $0x1c8] sm:$0xf]
        %v4371 = vld [vmem:[#allocation10 + $0x1cc] sm:$0xf]
        %v4372 = vld [vmem:[#allocation10 + $0x1d0] sm:$0xf]
        %v4373 = vld [vmem:[#allocation10 + $0x1d4] sm:$0xf]
        %v4374 = vld [vmem:[#allocation10 + $0x1d8] sm:$0xf]
        %v4375 = vld [vmem:[#allocation10 + $0x1dc] sm:$0xf]
        %v4376 = vld [vmem:[#allocation10 + $0x1e0] sm:$0xf]
        %v4377 = vld [vmem:[#allocation10 + $0x1e4] sm:$0xf]
        %v4378 = vld [vmem:[#allocation10 + $0x1e8] sm:$0xf]
        %v4379 = vld [vmem:[#allocation10 + $0x1ec] sm:$0xf]
        %v4380 = vld [vmem:[#allocation10 + $0x1f0] sm:$0xf]
        %v4381 = vld [vmem:[#allocation10 + $0x1f4] sm:$0xf]
        %v4382 = vld [vmem:[#allocation10 + $0x1f8] sm:$0xf]
        %v4383 = vld [vmem:[#allocation10 + $0x1fc] sm:$0xf]
        %v4384 = vld [vmem:[#allocation10 + $0x200] sm:$0xf]
        %v4385 = vld [vmem:[#allocation10 + $0x204] sm:$0xf]
        %v4386 = vld [vmem:[#allocation10 + $0x208] sm:$0xf]
        %v4387 = vld [vmem:[#allocation10 + $0x20c] sm:$0xf]
        %v4388 = vld [vmem:[#allocation10 + $0x210] sm:$0xf]
        %v4389 = vld [vmem:[#allocation10 + $0x214] sm:$0xf]
        %v4390 = vld [vmem:[#allocation10 + $0x218] sm:$0xf]
        %v4391 = vld [vmem:[#allocation10 + $0x21c] sm:$0xf]
        %v4392 = vld [vmem:[#allocation10 + $0x220] sm:$0xf]
        %v4393 = vld [vmem:[#allocation10 + $0x224] sm:$0xf]
        %v4394 = vld [vmem:[#allocation10 + $0x228] sm:$0xf]
        %v4395 = vld [vmem:[#allocation10 + $0x22c] sm:$0xf]
        %v4396 = vld [vmem:[#allocation10 + $0x230] sm:$0xf]
        %v4397 = vld [vmem:[#allocation10 + $0x234] sm:$0xf]
        %v4398 = vld [vmem:[#allocation10 + $0x238] sm:$0xf]
        %v4399 = vld [vmem:[#allocation10 + $0x23c] sm:$0xf]
        %v4400 = vld [vmem:[#allocation10 + $0x240] sm:$0xf]
        %v4401 = vld [vmem:[#allocation10 + $0x244] sm:$0xf]
        %v4402 = vld [vmem:[#allocation10 + $0x248] sm:$0xf]
        %v4403 = vld [vmem:[#allocation10 + $0x24c] sm:$0xf]
        %v4404 = vld [vmem:[#allocation10 + $0x250] sm:$0xf]
        %v4405 = vld [vmem:[#allocation10 + $0x254] sm:$0xf]
        %v4406 = vld [vmem:[#allocation10 + $0x258] sm:$0xf]
        %v4407 = vld [vmem:[#allocation10 + $0x25c] sm:$0xf]
        %v4408 = vld [vmem:[#allocation10 + $0x260] sm:$0xf]
        %v4409 = vld [vmem:[#allocation10 + $0x264] sm:$0xf]
        %v4410 = vld [vmem:[#allocation10 + $0x268] sm:$0xf]
        %v4411 = vld [vmem:[#allocation10 + $0x26c] sm:$0xf]
        %v4412 = vld [vmem:[#allocation10 + $0x270] sm:$0xf]
        %v4413 = vld [vmem:[#allocation10 + $0x274] sm:$0xf]
        %v4414 = vld [vmem:[#allocation10 + $0x278] sm:$0xf]
        %v4415 = vld [vmem:[#allocation10 + $0x27c] sm:$0xf]
        %v4416 = vld [vmem:[#allocation10 + $0x280] sm:$0xf]
        %v4417 = vld [vmem:[#allocation10 + $0x284] sm:$0xf]
        %v4418 = vld [vmem:[#allocation10 + $0x288] sm:$0xf]
        %v4419 = vld [vmem:[#allocation10 + $0x28c] sm:$0xf]
        %v4420 = vld [vmem:[#allocation10 + $0x290] sm:$0xf]
        %v4421 = vld [vmem:[#allocation10 + $0x294] sm:$0xf]
        %v4422 = vld [vmem:[#allocation10 + $0x298] sm:$0xf]
        %v4423 = vld [vmem:[#allocation10 + $0x29c] sm:$0xf]
        %v4424 = vld [vmem:[#allocation10 + $0x2a0] sm:$0xf]
        %v4425 = vld [vmem:[#allocation10 + $0x2a4] sm:$0xf]
        %v4426 = vld [vmem:[#allocation10 + $0x2a8] sm:$0xf]
        %v4427 = vld [vmem:[#allocation10 + $0x2ac] sm:$0xf]
        %v4428 = vld [vmem:[#allocation10 + $0x2b0] sm:$0xf]
        %v4429 = vld [vmem:[#allocation10 + $0x2b4] sm:$0xf]
        %v4430 = vld [vmem:[#allocation10 + $0x2b8] sm:$0xf]
        %v4431 = vld [vmem:[#allocation10 + $0x2bc] sm:$0xf]
        %v4432 = vld [vmem:[#allocation10 + $0x2c0] sm:$0xf]
        %v4433 = vld [vmem:[#allocation10 + $0x2c4] sm:$0xf]
        %v4434 = vld [vmem:[#allocation10 + $0x2c8] sm:$0xf]
        %v4435 = vld [vmem:[#allocation10 + $0x2cc] sm:$0xf]
        %v4436 = vld [vmem:[#allocation10 + $0x2d0] sm:$0xf]
        %v4437 = vld [vmem:[#allocation10 + $0x2d4] sm:$0xf]
        %v4438 = vld [vmem:[#allocation10 + $0x2d8] sm:$0xf]
        %v4439 = vld [vmem:[#allocation10 + $0x2dc] sm:$0xf]
        %v4440 = vld [vmem:[#allocation10 + $0x2e0] sm:$0xf]
        %v4441 = vld [vmem:[#allocation10 + $0x2e4] sm:$0xf]
        %v4442 = vld [vmem:[#allocation10 + $0x2e8] sm:$0xf]
        %v4443 = vld [vmem:[#allocation10 + $0x2ec] sm:$0xf]
        %v4444 = vld [vmem:[#allocation10 + $0x2f0] sm:$0xf]
        %v4445 = vld [vmem:[#allocation10 + $0x2f4] sm:$0xf]
        %v4446 = vld [vmem:[#allocation10 + $0x2f8] sm:$0xf]
        %v4447 = vld [vmem:[#allocation10 + $0x2fc] sm:$0xf]
        %v4448 = vld [vmem:[#allocation10 + $0x300] sm:$0xf]
        %v4449 = vld [vmem:[#allocation10 + $0x304] sm:$0xf]
        %v4450 = vld [vmem:[#allocation10 + $0x308] sm:$0xf]
        %v4451 = vld [vmem:[#allocation10 + $0x30c] sm:$0xf]
        %v4452 = vld [vmem:[#allocation10 + $0x310] sm:$0xf]
        %v4453 = vld [vmem:[#allocation10 + $0x314] sm:$0xf]
        %v4454 = vld [vmem:[#allocation10 + $0x318] sm:$0xf]
        %v4455 = vld [vmem:[#allocation10 + $0x31c] sm:$0xf]
        %v4456 = vld [vmem:[#allocation10 + $0x320] sm:$0xf]
        %v4457 = vld [vmem:[#allocation10 + $0x324] sm:$0xf]
        %v4458 = vld [vmem:[#allocation10 + $0x328] sm:$0xf]
        %v4459 = vld [vmem:[#allocation10 + $0x32c] sm:$0xf]
        %v4460 = vld [vmem:[#allocation10 + $0x330] sm:$0xf]
        %v4461 = vld [vmem:[#allocation10 + $0x334] sm:$0xf]
        %v4462 = vld [vmem:[#allocation10 + $0x338] sm:$0xf]
        %v4463 = vld [vmem:[#allocation10 + $0x33c] sm:$0xf]
        %v4464 = vld [vmem:[#allocation10 + $0x340] sm:$0xf]
        %v4465 = vld [vmem:[#allocation10 + $0x344] sm:$0xf]
        %v4466 = vld [vmem:[#allocation10 + $0x348] sm:$0xf]
        %v4467 = vld [vmem:[#allocation10 + $0x34c] sm:$0xf]
        %v4468 = vld [vmem:[#allocation10 + $0x350] sm:$0xf]
        %v4469 = vld [vmem:[#allocation10 + $0x354] sm:$0xf]
        %v4470 = vld [vmem:[#allocation10 + $0x358] sm:$0xf]
        %v4471 = vld [vmem:[#allocation10 + $0x35c] sm:$0xf]
        %v4472 = vld [vmem:[#allocation10 + $0x360] sm:$0xf]
        %v4473 = vld [vmem:[#allocation10 + $0x364] sm:$0xf]
        %v4474 = vld [vmem:[#allocation10 + $0x368] sm:$0xf]
        %v4475 = vld [vmem:[#allocation10 + $0x36c] sm:$0xf]
        %v4476 = vld [vmem:[#allocation10 + $0x370] sm:$0xf]
        %v4477 = vld [vmem:[#allocation10 + $0x374] sm:$0xf]
        %v4478 = vld [vmem:[#allocation10 + $0x378] sm:$0xf]
        %v4479 = vld [vmem:[#allocation10 + $0x37c] sm:$0xf]
        %v4480 = vld [vmem:[#allocation10 + $0x380] sm:$0xf]
        %v4481 = vld [vmem:[#allocation10 + $0x384] sm:$0xf]
        %v4482 = vld [vmem:[#allocation10 + $0x388] sm:$0xf]
        %v4483 = vld [vmem:[#allocation10 + $0x38c] sm:$0xf]
        %v4484 = vld [vmem:[#allocation10 + $0x390] sm:$0xf]
        %v4485 = vld [vmem:[#allocation10 + $0x394] sm:$0xf]
        %v4486 = vld [vmem:[#allocation10 + $0x398] sm:$0xf]
        %v4487 = vld [vmem:[#allocation10 + $0x39c] sm:$0xf]
        %v4488 = vld [vmem:[#allocation10 + $0x3a0] sm:$0xf]
        %v4489 = vld [vmem:[#allocation10 + $0x3a4] sm:$0xf]
        %v4490 = vld [vmem:[#allocation10 + $0x3a8] sm:$0xf]
        %v4491 = vld [vmem:[#allocation10 + $0x3ac] sm:$0xf]
        %v4492 = vld [vmem:[#allocation10 + $0x3b0] sm:$0xf]
        %v4493 = vld [vmem:[#allocation10 + $0x3b4] sm:$0xf]
        %v4494 = vld [vmem:[#allocation10 + $0x3b8] sm:$0xf]
        %v4495 = vld [vmem:[#allocation10 + $0x3bc] sm:$0xf]
        %v4496 = vld [vmem:[#allocation10 + $0x3c0] sm:$0xf]
        %v4497 = vld [vmem:[#allocation10 + $0x3c4] sm:$0xf]
        %v4498 = vld [vmem:[#allocation10 + $0x3c8] sm:$0xf]
        %v4499 = vld [vmem:[#allocation10 + $0x3cc] sm:$0xf]
        %v4500 = vld [vmem:[#allocation10 + $0x3d0] sm:$0xf]
        %v4501 = vld [vmem:[#allocation10 + $0x3d4] sm:$0xf]
        %v4502 = vld [vmem:[#allocation10 + $0x3d8] sm:$0xf]
        %v4503 = vld [vmem:[#allocation10 + $0x3dc] sm:$0xf]
        %v4504 = vld [vmem:[#allocation10 + $0x3e0] sm:$0xf]
        %v4505 = vld [vmem:[#allocation10 + $0x3e4] sm:$0xf]
        %v4506 = vld [vmem:[#allocation10 + $0x3e8] sm:$0xf]
        %v4507 = vld [vmem:[#allocation10 + $0x3ec] sm:$0xf]
        %v4508 = vld [vmem:[#allocation10 + $0x3f0] sm:$0xf]
        %v4509 = vld [vmem:[#allocation10 + $0x3f4] sm:$0xf]
        %v4510 = vld [vmem:[#allocation10 + $0x3f8] sm:$0xf]
        %v4511 = vld [vmem:[#allocation10 + $0x3fc] sm:$0xf]
        %v4512 = vld [vmem:[%s12] sm:$0x1]
        %v4514 = vlaneseq
        %v4515 = vshrl.u32 %v4514, 7
        %v4516 = vsub.s32 0, %v4515
        %v4517 = vrot.slane %v4512, %v4516
        %v4775 = vunpack.c.l.b16 %v4256
        %v4776 = vunpack.c.l.b16 %v4257
        %v4777 = vunpack.c.l.b16 %v4258
        %v4778 = vunpack.c.l.b16 %v4259
        %v4779 = vunpack.c.l.b16 %v4260
        %v4780 = vunpack.c.l.b16 %v4261
        %v4781 = vunpack.c.l.b16 %v4262
        %v4782 = vunpack.c.l.b16 %v4263
        %v4783 = vunpack.c.l.b16 %v4264
        %v4784 = vunpack.c.l.b16 %v4265
        %v4785 = vunpack.c.l.b16 %v4266
        %v4786 = vunpack.c.l.b16 %v4267
        %v4787 = vunpack.c.l.b16 %v4268
        %v4788 = vunpack.c.l.b16 %v4269
        %v4789 = vunpack.c.l.b16 %v4270
        %v4790 = vunpack.c.l.b16 %v4271
        %v4791 = vunpack.c.l.b16 %v4272
        %v4792 = vunpack.c.l.b16 %v4273
        %v4793 = vunpack.c.l.b16 %v4274
        %v4794 = vunpack.c.l.b16 %v4275
        %v4795 = vunpack.c.l.b16 %v4276
        %v4796 = vunpack.c.l.b16 %v4277
        %v4797 = vunpack.c.l.b16 %v4278
        %v4798 = vunpack.c.l.b16 %v4279
        %v4799 = vunpack.c.l.b16 %v4280
        %v4800 = vunpack.c.l.b16 %v4281
        %v4801 = vunpack.c.l.b16 %v4282
        %v4802 = vunpack.c.l.b16 %v4283
        %v4803 = vunpack.c.l.b16 %v4284
        %v4804 = vunpack.c.l.b16 %v4285
        %v4805 = vunpack.c.l.b16 %v4286
        %v4806 = vunpack.c.l.b16 %v4287
        %v4807 = vunpack.c.l.b16 %v4288
        %v4808 = vunpack.c.l.b16 %v4289
        %v4809 = vunpack.c.l.b16 %v4290
        %v4810 = vunpack.c.l.b16 %v4291
        %v4811 = vunpack.c.l.b16 %v4292
        %v4812 = vunpack.c.l.b16 %v4293
        %v4813 = vunpack.c.l.b16 %v4294
        %v4814 = vunpack.c.l.b16 %v4295
        %v4815 = vunpack.c.l.b16 %v4296
        %v4816 = vunpack.c.l.b16 %v4297
        %v4817 = vunpack.c.l.b16 %v4298
        %v4818 = vunpack.c.l.b16 %v4299
        %v4819 = vunpack.c.l.b16 %v4300
        %v4820 = vunpack.c.l.b16 %v4301
        %v4821 = vunpack.c.l.b16 %v4302
        %v4822 = vunpack.c.l.b16 %v4303
        %v4823 = vunpack.c.l.b16 %v4304
        %v4824 = vunpack.c.l.b16 %v4305
        %v4825 = vunpack.c.l.b16 %v4306
        %v4826 = vunpack.c.l.b16 %v4307
        %v4827 = vunpack.c.l.b16 %v4308
        %v4828 = vunpack.c.l.b16 %v4309
        %v4829 = vunpack.c.l.b16 %v4310
        %v4830 = vunpack.c.l.b16 %v4311
        %v4831 = vunpack.c.l.b16 %v4312
        %v4832 = vunpack.c.l.b16 %v4313
        %v4833 = vunpack.c.l.b16 %v4314
        %v4834 = vunpack.c.l.b16 %v4315
        %v4835 = vunpack.c.l.b16 %v4316
        %v4836 = vunpack.c.l.b16 %v4317
        %v4837 = vunpack.c.l.b16 %v4318
        %v4838 = vunpack.c.l.b16 %v4319
        %v4839 = vunpack.c.l.b16 %v4320
        %v4840 = vunpack.c.l.b16 %v4321
        %v4841 = vunpack.c.l.b16 %v4322
        %v4842 = vunpack.c.l.b16 %v4323
        %v4843 = vunpack.c.l.b16 %v4324
        %v4844 = vunpack.c.l.b16 %v4325
        %v4845 = vunpack.c.l.b16 %v4326
        %v4846 = vunpack.c.l.b16 %v4327
        %v4847 = vunpack.c.l.b16 %v4328
        %v4848 = vunpack.c.l.b16 %v4329
        %v4849 = vunpack.c.l.b16 %v4330
        %v4850 = vunpack.c.l.b16 %v4331
        %v4851 = vunpack.c.l.b16 %v4332
        %v4852 = vunpack.c.l.b16 %v4333
        %v4853 = vunpack.c.l.b16 %v4334
        %v4854 = vunpack.c.l.b16 %v4335
        %v4855 = vunpack.c.l.b16 %v4336
        %v4856 = vunpack.c.l.b16 %v4337
        %v4857 = vunpack.c.l.b16 %v4338
        %v4858 = vunpack.c.l.b16 %v4339
        %v4859 = vunpack.c.l.b16 %v4340
        %v4860 = vunpack.c.l.b16 %v4341
        %v4861 = vunpack.c.l.b16 %v4342
        %v4862 = vunpack.c.l.b16 %v4343
        %v4863 = vunpack.c.l.b16 %v4344
        %v4864 = vunpack.c.l.b16 %v4345
        %v4865 = vunpack.c.l.b16 %v4346
        %v4866 = vunpack.c.l.b16 %v4347
        %v4867 = vunpack.c.l.b16 %v4348
        %v4868 = vunpack.c.l.b16 %v4349
        %v4869 = vunpack.c.l.b16 %v4350
        %v4870 = vunpack.c.l.b16 %v4351
        %v4871 = vunpack.c.l.b16 %v4352
        %v4872 = vunpack.c.l.b16 %v4353
        %v4873 = vunpack.c.l.b16 %v4354
        %v4874 = vunpack.c.l.b16 %v4355
        %v4875 = vunpack.c.l.b16 %v4356
        %v4876 = vunpack.c.l.b16 %v4357
        %v4877 = vunpack.c.l.b16 %v4358
        %v4878 = vunpack.c.l.b16 %v4359
        %v4879 = vunpack.c.l.b16 %v4360
        %v4880 = vunpack.c.l.b16 %v4361
        %v4881 = vunpack.c.l.b16 %v4362
        %v4882 = vunpack.c.l.b16 %v4363
        %v4883 = vunpack.c.l.b16 %v4364
        %v4884 = vunpack.c.l.b16 %v4365
        %v4885 = vunpack.c.l.b16 %v4366
        %v4886 = vunpack.c.l.b16 %v4367
        %v4887 = vunpack.c.l.b16 %v4368
        %v4888 = vunpack.c.l.b16 %v4369
        %v4889 = vunpack.c.l.b16 %v4370
        %v4890 = vunpack.c.l.b16 %v4371
        %v4891 = vunpack.c.l.b16 %v4372
        %v4892 = vunpack.c.l.b16 %v4373
        %v4893 = vunpack.c.l.b16 %v4374
        %v4894 = vunpack.c.l.b16 %v4375
        %v4895 = vunpack.c.l.b16 %v4376
        %v4896 = vunpack.c.l.b16 %v4377
        %v4897 = vunpack.c.l.b16 %v4378
        %v4898 = vunpack.c.l.b16 %v4379
        %v4899 = vunpack.c.l.b16 %v4380
        %v4900 = vunpack.c.l.b16 %v4381
        %v4901 = vunpack.c.l.b16 %v4382
        %v4902 = vunpack.c.l.b16 %v4383
        %v4903 = vunpack.c.l.b16 %v4384
        %v4904 = vunpack.c.l.b16 %v4385
        %v4905 = vunpack.c.l.b16 %v4386
        %v4906 = vunpack.c.l.b16 %v4387
        %v4907 = vunpack.c.l.b16 %v4388
        %v4908 = vunpack.c.l.b16 %v4389
        %v4909 = vunpack.c.l.b16 %v4390
        %v4910 = vunpack.c.l.b16 %v4391
        %v4911 = vunpack.c.l.b16 %v4392
        %v4912 = vunpack.c.l.b16 %v4393
        %v4913 = vunpack.c.l.b16 %v4394
        %v4914 = vunpack.c.l.b16 %v4395
        %v4915 = vunpack.c.l.b16 %v4396
        %v4916 = vunpack.c.l.b16 %v4397
        %v4917 = vunpack.c.l.b16 %v4398
        %v4918 = vunpack.c.l.b16 %v4399
        %v4919 = vunpack.c.l.b16 %v4400
        %v4920 = vunpack.c.l.b16 %v4401
        %v4921 = vunpack.c.l.b16 %v4402
        %v4922 = vunpack.c.l.b16 %v4403
        %v4923 = vunpack.c.l.b16 %v4404
        %v4924 = vunpack.c.l.b16 %v4405
        %v4925 = vunpack.c.l.b16 %v4406
        %v4926 = vunpack.c.l.b16 %v4407
        %v4927 = vunpack.c.l.b16 %v4408
        %v4928 = vunpack.c.l.b16 %v4409
        %v4929 = vunpack.c.l.b16 %v4410
        %v4930 = vunpack.c.l.b16 %v4411
        %v4931 = vunpack.c.l.b16 %v4412
        %v4932 = vunpack.c.l.b16 %v4413
        %v4933 = vunpack.c.l.b16 %v4414
        %v4934 = vunpack.c.l.b16 %v4415
        %v4935 = vunpack.c.l.b16 %v4416
        %v4936 = vunpack.c.l.b16 %v4417
        %v4937 = vunpack.c.l.b16 %v4418
        %v4938 = vunpack.c.l.b16 %v4419
        %v4939 = vunpack.c.l.b16 %v4420
        %v4940 = vunpack.c.l.b16 %v4421
        %v4941 = vunpack.c.l.b16 %v4422
        %v4942 = vunpack.c.l.b16 %v4423
        %v4943 = vunpack.c.l.b16 %v4424
        %v4944 = vunpack.c.l.b16 %v4425
        %v4945 = vunpack.c.l.b16 %v4426
        %v4946 = vunpack.c.l.b16 %v4427
        %v4947 = vunpack.c.l.b16 %v4428
        %v4948 = vunpack.c.l.b16 %v4429
        %v4949 = vunpack.c.l.b16 %v4430
        %v4950 = vunpack.c.l.b16 %v4431
        %v4951 = vunpack.c.l.b16 %v4432
        %v4952 = vunpack.c.l.b16 %v4433
        %v4953 = vunpack.c.l.b16 %v4434
        %v4954 = vunpack.c.l.b16 %v4435
        %v4955 = vunpack.c.l.b16 %v4436
        %v4956 = vunpack.c.l.b16 %v4437
        %v4957 = vunpack.c.l.b16 %v4438
        %v4958 = vunpack.c.l.b16 %v4439
        %v4959 = vunpack.c.l.b16 %v4440
        %v4960 = vunpack.c.l.b16 %v4441
        %v4961 = vunpack.c.l.b16 %v4442
        %v4962 = vunpack.c.l.b16 %v4443
        %v4963 = vunpack.c.l.b16 %v4444
        %v4964 = vunpack.c.l.b16 %v4445
        %v4965 = vunpack.c.l.b16 %v4446
        %v4966 = vunpack.c.l.b16 %v4447
        %v4967 = vunpack.c.l.b16 %v4448
        %v4968 = vunpack.c.l.b16 %v4449
        %v4969 = vunpack.c.l.b16 %v4450
        %v4970 = vunpack.c.l.b16 %v4451
        %v4971 = vunpack.c.l.b16 %v4452
        %v4972 = vunpack.c.l.b16 %v4453
        %v4973 = vunpack.c.l.b16 %v4454
        %v4974 = vunpack.c.l.b16 %v4455
        %v4975 = vunpack.c.l.b16 %v4456
        %v4976 = vunpack.c.l.b16 %v4457
        %v4977 = vunpack.c.l.b16 %v4458
        %v4978 = vunpack.c.l.b16 %v4459
        %v4979 = vunpack.c.l.b16 %v4460
        %v4980 = vunpack.c.l.b16 %v4461
        %v4981 = vunpack.c.l.b16 %v4462
        %v4982 = vunpack.c.l.b16 %v4463
        %v4983 = vunpack.c.l.b16 %v4464
        %v4984 = vunpack.c.l.b16 %v4465
        %v4985 = vunpack.c.l.b16 %v4466
        %v4986 = vunpack.c.l.b16 %v4467
        %v4987 = vunpack.c.l.b16 %v4468
        %v4988 = vunpack.c.l.b16 %v4469
        %v4989 = vunpack.c.l.b16 %v4470
        %v4990 = vunpack.c.l.b16 %v4471
        %v4991 = vunpack.c.l.b16 %v4472
        %v4992 = vunpack.c.l.b16 %v4473
        %v4993 = vunpack.c.l.b16 %v4474
        %v4994 = vunpack.c.l.b16 %v4475
        %v4995 = vunpack.c.l.b16 %v4476
        %v4996 = vunpack.c.l.b16 %v4477
        %v4997 = vunpack.c.l.b16 %v4478
        %v4998 = vunpack.c.l.b16 %v4479
        %v4999 = vunpack.c.l.b16 %v4480
        %v5000 = vunpack.c.l.b16 %v4481
        %v5001 = vunpack.c.l.b16 %v4482
        %v5002 = vunpack.c.l.b16 %v4483
        %v5003 = vunpack.c.l.b16 %v4484
        %v5004 = vunpack.c.l.b16 %v4485
        %v5005 = vunpack.c.l.b16 %v4486
        %v5006 = vunpack.c.l.b16 %v4487
        %v5007 = vunpack.c.l.b16 %v4488
        %v5008 = vunpack.c.l.b16 %v4489
        %v5009 = vunpack.c.l.b16 %v4490
        %v5010 = vunpack.c.l.b16 %v4491
        %v5011 = vunpack.c.l.b16 %v4492
        %v5012 = vunpack.c.l.b16 %v4493
        %v5013 = vunpack.c.l.b16 %v4494
        %v5014 = vunpack.c.l.b16 %v4495
        %v5015 = vunpack.c.l.b16 %v4496
        %v5016 = vunpack.c.l.b16 %v4497
        %v5017 = vunpack.c.l.b16 %v4498
        %v5018 = vunpack.c.l.b16 %v4499
        %v5019 = vunpack.c.l.b16 %v4500
        %v5020 = vunpack.c.l.b16 %v4501
        %v5021 = vunpack.c.l.b16 %v4502
        %v5022 = vunpack.c.l.b16 %v4503
        %v5023 = vunpack.c.l.b16 %v4504
        %v5024 = vunpack.c.l.b16 %v4505
        %v5025 = vunpack.c.l.b16 %v4506
        %v5026 = vunpack.c.l.b16 %v4507
        %v5027 = vunpack.c.l.b16 %v4508
        %v5028 = vunpack.c.l.b16 %v4509
        %v5029 = vunpack.c.l.b16 %v4510
        %v5030 = vunpack.c.l.b16 %v4511
        %v5031 = vpack.c.b16 %v4776, %v4775
        %v5032 = vpack.c.b16 %v4778, %v4777
        %v5033 = vpack.c.b16 %v4780, %v4779
        %v5034 = vpack.c.b16 %v4782, %v4781
        %v5035 = vpack.c.b16 %v4784, %v4783
        %v5036 = vpack.c.b16 %v4786, %v4785
        %v5037 = vpack.c.b16 %v4788, %v4787
        %v5038 = vpack.c.b16 %v4790, %v4789
        %v5039 = vpack.c.b16 %v4792, %v4791
        %v5040 = vpack.c.b16 %v4794, %v4793
        %v5041 = vpack.c.b16 %v4796, %v4795
        %v5042 = vpack.c.b16 %v4798, %v4797
        %v5043 = vpack.c.b16 %v4800, %v4799
        %v5044 = vpack.c.b16 %v4802, %v4801
        %v5045 = vpack.c.b16 %v4804, %v4803
        %v5046 = vpack.c.b16 %v4806, %v4805
        %v5047 = vpack.c.b16 %v4808, %v4807
        %v5048 = vpack.c.b16 %v4810, %v4809
        %v5049 = vpack.c.b16 %v4812, %v4811
        %v5050 = vpack.c.b16 %v4814, %v4813
        %v5051 = vpack.c.b16 %v4816, %v4815
        %v5052 = vpack.c.b16 %v4818, %v4817
        %v5053 = vpack.c.b16 %v4820, %v4819
        %v5054 = vpack.c.b16 %v4822, %v4821
        %v5055 = vpack.c.b16 %v4824, %v4823
        %v5056 = vpack.c.b16 %v4826, %v4825
        %v5057 = vpack.c.b16 %v4828, %v4827
        %v5058 = vpack.c.b16 %v4830, %v4829
        %v5059 = vpack.c.b16 %v4832, %v4831
        %v5060 = vpack.c.b16 %v4834, %v4833
        %v5061 = vpack.c.b16 %v4836, %v4835
        %v5062 = vpack.c.b16 %v4838, %v4837
        %v5063 = vpack.c.b16 %v4840, %v4839
        %v5064 = vpack.c.b16 %v4842, %v4841
        %v5065 = vpack.c.b16 %v4844, %v4843
        %v5066 = vpack.c.b16 %v4846, %v4845
        %v5067 = vpack.c.b16 %v4848, %v4847
        %v5068 = vpack.c.b16 %v4850, %v4849
        %v5069 = vpack.c.b16 %v4852, %v4851
        %v5070 = vpack.c.b16 %v4854, %v4853
        %v5071 = vpack.c.b16 %v4856, %v4855
        %v5072 = vpack.c.b16 %v4858, %v4857
        %v5073 = vpack.c.b16 %v4860, %v4859
        %v5074 = vpack.c.b16 %v4862, %v4861
        %v5075 = vpack.c.b16 %v4864, %v4863
        %v5076 = vpack.c.b16 %v4866, %v4865
        %v5077 = vpack.c.b16 %v4868, %v4867
        %v5078 = vpack.c.b16 %v4870, %v4869
        %v5079 = vpack.c.b16 %v4872, %v4871
        %v5080 = vpack.c.b16 %v4874, %v4873
        %v5081 = vpack.c.b16 %v4876, %v4875
        %v5082 = vpack.c.b16 %v4878, %v4877
        %v5083 = vpack.c.b16 %v4880, %v4879
        %v5084 = vpack.c.b16 %v4882, %v4881
        %v5085 = vpack.c.b16 %v4884, %v4883
        %v5086 = vpack.c.b16 %v4886, %v4885
        %v5087 = vpack.c.b16 %v4888, %v4887
        %v5088 = vpack.c.b16 %v4890, %v4889
        %v5089 = vpack.c.b16 %v4892, %v4891
        %v5090 = vpack.c.b16 %v4894, %v4893
        %v5091 = vpack.c.b16 %v4896, %v4895
        %v5092 = vpack.c.b16 %v4898, %v4897
        %v5093 = vpack.c.b16 %v4900, %v4899
        %v5094 = vpack.c.b16 %v4902, %v4901
        %v5095 = vpack.c.b16 %v4904, %v4903
        %v5096 = vpack.c.b16 %v4906, %v4905
        %v5097 = vpack.c.b16 %v4908, %v4907
        %v5098 = vpack.c.b16 %v4910, %v4909
        %v5099 = vpack.c.b16 %v4912, %v4911
        %v5100 = vpack.c.b16 %v4914, %v4913
        %v5101 = vpack.c.b16 %v4916, %v4915
        %v5102 = vpack.c.b16 %v4918, %v4917
        %v5103 = vpack.c.b16 %v4920, %v4919
        %v5104 = vpack.c.b16 %v4922, %v4921
        %v5105 = vpack.c.b16 %v4924, %v4923
        %v5106 = vpack.c.b16 %v4926, %v4925
        %v5107 = vpack.c.b16 %v4928, %v4927
        %v5108 = vpack.c.b16 %v4930, %v4929
        %v5109 = vpack.c.b16 %v4932, %v4931
        %v5110 = vpack.c.b16 %v4934, %v4933
        %v5111 = vpack.c.b16 %v4936, %v4935
        %v5112 = vpack.c.b16 %v4938, %v4937
        %v5113 = vpack.c.b16 %v4940, %v4939
        %v5114 = vpack.c.b16 %v4942, %v4941
        %v5115 = vpack.c.b16 %v4944, %v4943
        %v5116 = vpack.c.b16 %v4946, %v4945
        %v5117 = vpack.c.b16 %v4948, %v4947
        %v5118 = vpack.c.b16 %v4950, %v4949
        %v5119 = vpack.c.b16 %v4952, %v4951
        %v5120 = vpack.c.b16 %v4954, %v4953
        %v5121 = vpack.c.b16 %v4956, %v4955
        %v5122 = vpack.c.b16 %v4958, %v4957
        %v5123 = vpack.c.b16 %v4960, %v4959
        %v5124 = vpack.c.b16 %v4962, %v4961
        %v5125 = vpack.c.b16 %v4964, %v4963
        %v5126 = vpack.c.b16 %v4966, %v4965
        %v5127 = vpack.c.b16 %v4968, %v4967
        %v5128 = vpack.c.b16 %v4970, %v4969
        %v5129 = vpack.c.b16 %v4972, %v4971
        %v5130 = vpack.c.b16 %v4974, %v4973
        %v5131 = vpack.c.b16 %v4976, %v4975
        %v5132 = vpack.c.b16 %v4978, %v4977
        %v5133 = vpack.c.b16 %v4980, %v4979
        %v5134 = vpack.c.b16 %v4982, %v4981
        %v5135 = vpack.c.b16 %v4984, %v4983
        %v5136 = vpack.c.b16 %v4986, %v4985
        %v5137 = vpack.c.b16 %v4988, %v4987
        %v5138 = vpack.c.b16 %v4990, %v4989
        %v5139 = vpack.c.b16 %v4992, %v4991
        %v5140 = vpack.c.b16 %v4994, %v4993
        %v5141 = vpack.c.b16 %v4996, %v4995
        %v5142 = vpack.c.b16 %v4998, %v4997
        %v5143 = vpack.c.b16 %v5000, %v4999
        %v5144 = vpack.c.b16 %v5002, %v5001
        %v5145 = vpack.c.b16 %v5004, %v5003
        %v5146 = vpack.c.b16 %v5006, %v5005
        %v5147 = vpack.c.b16 %v5008, %v5007
        %v5148 = vpack.c.b16 %v5010, %v5009
        %v5149 = vpack.c.b16 %v5012, %v5011
        %v5150 = vpack.c.b16 %v5014, %v5013
        %v5151 = vpack.c.b16 %v5016, %v5015
        %v5152 = vpack.c.b16 %v5018, %v5017
        %v5153 = vpack.c.b16 %v5020, %v5019
        %v5154 = vpack.c.b16 %v5022, %v5021
        %v5155 = vpack.c.b16 %v5024, %v5023
        %v5156 = vpack.c.b16 %v5026, %v5025
        %v5157 = vpack.c.b16 %v5028, %v5027
        %v5158 = vpack.c.b16 %v5030, %v5029
        %5287 = vmatprep.subr.bf16.mxu0 0
        %5288 = vmatpush1.bf16.msra.mxu0 %v5031
        %5289 = vmatprep.subr.bf16.mxu0 0
        %5290 = vmatpush1.bf16.msra.mxu0 %v5032
        %5291 = vmatprep.subr.bf16.mxu0 0
        %5292 = vmatpush1.bf16.msra.mxu0 %v5033
        %5293 = vmatprep.subr.bf16.mxu0 0
        %5294 = vmatpush1.bf16.msra.mxu0 %v5034
        %5295 = vmatprep.subr.bf16.mxu0 0
        %5296 = vmatpush1.bf16.msra.mxu0 %v5035
        %5297 = vmatprep.subr.bf16.mxu0 0
        %5298 = vmatpush1.bf16.msra.mxu0 %v5036
        %5299 = vmatprep.subr.bf16.mxu0 0
        %5300 = vmatpush1.bf16.msra.mxu0 %v5037
        %5301 = vmatprep.subr.bf16.mxu0 0
        %5302 = vmatpush1.bf16.msra.mxu0 %v5038
        %5303 = vmatprep.subr.bf16.mxu0 0
        %5304 = vmatpush1.bf16.msra.mxu0 %v5039
        %5305 = vmatprep.subr.bf16.mxu0 0
        %5306 = vmatpush1.bf16.msra.mxu0 %v5040
        %5307 = vmatprep.subr.bf16.mxu0 0
        %5308 = vmatpush1.bf16.msra.mxu0 %v5041
        %5309 = vmatprep.subr.bf16.mxu0 0
        %5310 = vmatpush1.bf16.msra.mxu0 %v5042
        %5311 = vmatprep.subr.bf16.mxu0 0
        %5312 = vmatpush1.bf16.msra.mxu0 %v5043
        %5313 = vmatprep.subr.bf16.mxu0 0
        %5314 = vmatpush1.bf16.msra.mxu0 %v5044
        %5315 = vmatprep.subr.bf16.mxu0 0
        %5316 = vmatpush1.bf16.msra.mxu0 %v5045
        %5317 = vmatprep.subr.bf16.mxu0 0
        %5318 = vmatpush1.bf16.msra.mxu0 %v5046
        %5319 = vmatprep.mubr.bf16.mxu0 %v4241
        %5320 = vmatmul.mubr.bf16.gmra.mrb[0].mxu0 %v4240
        %v5321 = vpop.f32.mrb[0].mxu0
        %v5322 = vadd.f32 %v4517, %v5321
        %v5323 = vpop.f32.mrb[0].mxu0
        %v5324 = vpop.f32.mrb[0].mxu0
        %v5325 = vadd.f32 %v4517, %v5324
        %v5326 = vpop.f32.mrb[0].mxu0
        %5327 = vdwg.mxu0
        %5328 = vmatprep.subr.bf16.mxu0 0
        %5329 = vmatpush1.bf16.msra.mxu0 %v5047
        %5330 = vmatprep.subr.bf16.mxu0 0
        %5331 = vmatpush1.bf16.msra.mxu0 %v5048
        %5332 = vmatprep.subr.bf16.mxu0 0
        %5333 = vmatpush1.bf16.msra.mxu0 %v5049
        %5334 = vmatprep.subr.bf16.mxu0 0
        %5335 = vmatpush1.bf16.msra.mxu0 %v5050
        %5336 = vmatprep.subr.bf16.mxu0 0
        %5337 = vmatpush1.bf16.msra.mxu0 %v5051
        %5338 = vmatprep.subr.bf16.mxu0 0
        %5339 = vmatpush1.bf16.msra.mxu0 %v5052
        %5340 = vmatprep.subr.bf16.mxu0 0
        %5341 = vmatpush1.bf16.msra.mxu0 %v5053
        %5342 = vmatprep.subr.bf16.mxu0 0
        %5343 = vmatpush1.bf16.msra.mxu0 %v5054
        %5344 = vmatprep.subr.bf16.mxu0 0
        %5345 = vmatpush1.bf16.msra.mxu0 %v5055
        %5346 = vmatprep.subr.bf16.mxu0 0
        %5347 = vmatpush1.bf16.msra.mxu0 %v5056
        %5348 = vmatprep.subr.bf16.mxu0 0
        %5349 = vmatpush1.bf16.msra.mxu0 %v5057
        %5350 = vmatprep.subr.bf16.mxu0 0
        %5351 = vmatpush1.bf16.msra.mxu0 %v5058
        %5352 = vmatprep.subr.bf16.mxu0 0
        %5353 = vmatpush1.bf16.msra.mxu0 %v5059
        %5354 = vmatprep.subr.bf16.mxu0 0
        %5355 = vmatpush1.bf16.msra.mxu0 %v5060
        %5356 = vmatprep.subr.bf16.mxu0 0
        %5357 = vmatpush1.bf16.msra.mxu0 %v5061
        %5358 = vmatprep.subr.bf16.mxu0 0
        %5359 = vmatpush1.bf16.msra.mxu0 %v5062
        %5360 = vmatprep.mubr.bf16.mxu0 %v4243
        %5361 = vmatmul.mubr.bf16.gmra.mrb[0].mxu0 %v4242
        %v5362 = vpop.f32.mrb[0].mxu0
        %v5363 = vadd.f32 %v5322, %v5362
        %v5364 = vpop.f32.mrb[0].mxu0
        %v5365 = vpop.f32.mrb[0].mxu0
        %v5366 = vadd.f32 %v5325, %v5365
        %v5367 = vpop.f32.mrb[0].mxu0
        %5368 = vdwg.mxu0
        %5369 = vmatprep.subr.bf16.mxu0 0
        %5370 = vmatpush1.bf16.msra.mxu0 %v5063
        %5371 = vmatprep.subr.bf16.mxu0 0
        %5372 = vmatpush1.bf16.msra.mxu0 %v5064
        %5373 = vmatprep.subr.bf16.mxu0 0
        %5374 = vmatpush1.bf16.msra.mxu0 %v5065
        %5375 = vmatprep.subr.bf16.mxu0 0
        %5376 = vmatpush1.bf16.msra.mxu0 %v5066
        %5377 = vmatprep.subr.bf16.mxu0 0
        %5378 = vmatpush1.bf16.msra.mxu0 %v5067
        %5379 = vmatprep.subr.bf16.mxu0 0
        %5380 = vmatpush1.bf16.msra.mxu0 %v5068
        %5381 = vmatprep.subr.bf16.mxu0 0
        %5382 = vmatpush1.bf16.msra.mxu0 %v5069
        %5383 = vmatprep.subr.bf16.mxu0 0
        %5384 = vmatpush1.bf16.msra.mxu0 %v5070
        %5385 = vmatprep.subr.bf16.mxu0 0
        %5386 = vmatpush1.bf16.msra.mxu0 %v5071
        %5387 = vmatprep.subr.bf16.mxu0 0
        %5388 = vmatpush1.bf16.msra.mxu0 %v5072
        %5389 = vmatprep.subr.bf16.mxu0 0
        %5390 = vmatpush1.bf16.msra.mxu0 %v5073
        %5391 = vmatprep.subr.bf16.mxu0 0
        %5392 = vmatpush1.bf16.msra.mxu0 %v5074
        %5393 = vmatprep.subr.bf16.mxu0 0
        %5394 = vmatpush1.bf16.msra.mxu0 %v5075
        %5395 = vmatprep.subr.bf16.mxu0 0
        %5396 = vmatpush1.bf16.msra.mxu0 %v5076
        %5397 = vmatprep.subr.bf16.mxu0 0
        %5398 = vmatpush1.bf16.msra.mxu0 %v5077
        %5399 = vmatprep.subr.bf16.mxu0 0
        %5400 = vmatpush1.bf16.msra.mxu0 %v5078
        %5401 = vmatprep.mubr.bf16.mxu0 %v4245
        %5402 = vmatmul.mubr.bf16.gmra.mrb[0].mxu0 %v4244
        %v5403 = vpop.f32.mrb[0].mxu0
        %v5404 = vadd.f32 %v5363, %v5403
        %v5405 = vpop.f32.mrb[0].mxu0
        %v5406 = vpop.f32.mrb[0].mxu0
        %v5407 = vadd.f32 %v5366, %v5406
        %v5408 = vpop.f32.mrb[0].mxu0
        %5409 = vdwg.mxu0
        %5410 = vmatprep.subr.bf16.mxu0 0
        %5411 = vmatpush1.bf16.msra.mxu0 %v5079
        %5412 = vmatprep.subr.bf16.mxu0 0
        %5413 = vmatpush1.bf16.msra.mxu0 %v5080
        %5414 = vmatprep.subr.bf16.mxu0 0
        %5415 = vmatpush1.bf16.msra.mxu0 %v5081
        %5416 = vmatprep.subr.bf16.mxu0 0
        %5417 = vmatpush1.bf16.msra.mxu0 %v5082
        %5418 = vmatprep.subr.bf16.mxu0 0
        %5419 = vmatpush1.bf16.msra.mxu0 %v5083
        %5420 = vmatprep.subr.bf16.mxu0 0
        %5421 = vmatpush1.bf16.msra.mxu0 %v5084
        %5422 = vmatprep.subr.bf16.mxu0 0
        %5423 = vmatpush1.bf16.msra.mxu0 %v5085
        %5424 = vmatprep.subr.bf16.mxu0 0
        %5425 = vmatpush1.bf16.msra.mxu0 %v5086
        %5426 = vmatprep.subr.bf16.mxu0 0
        %5427 = vmatpush1.bf16.msra.mxu0 %v5087
        %5428 = vmatprep.subr.bf16.mxu0 0
        %5429 = vmatpush1.bf16.msra.mxu0 %v5088
        %5430 = vmatprep.subr.bf16.mxu0 0
        %5431 = vmatpush1.bf16.msra.mxu0 %v5089
        %5432 = vmatprep.subr.bf16.mxu0 0
        %5433 = vmatpush1.bf16.msra.mxu0 %v5090
        %5434 = vmatprep.subr.bf16.mxu0 0
        %5435 = vmatpush1.bf16.msra.mxu0 %v5091
        %5436 = vmatprep.subr.bf16.mxu0 0
        %5437 = vmatpush1.bf16.msra.mxu0 %v5092
        %5438 = vmatprep.subr.bf16.mxu0 0
        %5439 = vmatpush1.bf16.msra.mxu0 %v5093
        %5440 = vmatprep.subr.bf16.mxu0 0
        %5441 = vmatpush1.bf16.msra.mxu0 %v5094
        %5442 = vmatprep.mubr.bf16.mxu0 %v4247
        %5443 = vmatmul.mubr.bf16.gmra.mrb[0].mxu0 %v4246
        %v5444 = vpop.f32.mrb[0].mxu0
        %v5445 = vadd.f32 %v5404, %v5444
        %v5446 = vpop.f32.mrb[0].mxu0
        %v5447 = vpop.f32.mrb[0].mxu0
        %v5448 = vadd.f32 %v5407, %v5447
        %v5449 = vpop.f32.mrb[0].mxu0
        %5450 = vdwg.mxu0
        %5451 = vmatprep.subr.bf16.mxu0 0
        %5452 = vmatpush1.bf16.msra.mxu0 %v5095
        %5453 = vmatprep.subr.bf16.mxu0 0
        %5454 = vmatpush1.bf16.msra.mxu0 %v5096
        %5455 = vmatprep.subr.bf16.mxu0 0
        %5456 = vmatpush1.bf16.msra.mxu0 %v5097
        %5457 = vmatprep.subr.bf16.mxu0 0
        %5458 = vmatpush1.bf16.msra.mxu0 %v5098
        %5459 = vmatprep.subr.bf16.mxu0 0
        %5460 = vmatpush1.bf16.msra.mxu0 %v5099
        %5461 = vmatprep.subr.bf16.mxu0 0
        %5462 = vmatpush1.bf16.msra.mxu0 %v5100
        %5463 = vmatprep.subr.bf16.mxu0 0
        %5464 = vmatpush1.bf16.msra.mxu0 %v5101
        %5465 = vmatprep.subr.bf16.mxu0 0
        %5466 = vmatpush1.bf16.msra.mxu0 %v5102
        %5467 = vmatprep.subr.bf16.mxu0 0
        %5468 = vmatpush1.bf16.msra.mxu0 %v5103
        %5469 = vmatprep.subr.bf16.mxu0 0
        %5470 = vmatpush1.bf16.msra.mxu0 %v5104
        %5471 = vmatprep.subr.bf16.mxu0 0
        %5472 = vmatpush1.bf16.msra.mxu0 %v5105
        %5473 = vmatprep.subr.bf16.mxu0 0
        %5474 = vmatpush1.bf16.msra.mxu0 %v5106
        %5475 = vmatprep.subr.bf16.mxu0 0
        %5476 = vmatpush1.bf16.msra.mxu0 %v5107
        %5477 = vmatprep.subr.bf16.mxu0 0
        %5478 = vmatpush1.bf16.msra.mxu0 %v5108
        %5479 = vmatprep.subr.bf16.mxu0 0
        %5480 = vmatpush1.bf16.msra.mxu0 %v5109
        %5481 = vmatprep.subr.bf16.mxu0 0
        %5482 = vmatpush1.bf16.msra.mxu0 %v5110
        %5483 = vmatprep.mubr.bf16.mxu0 %v4249
        %5484 = vmatmul.mubr.bf16.gmra.mrb[0].mxu0 %v4248
        %v5485 = vpop.f32.mrb[0].mxu0
        %v5486 = vadd.f32 %v5445, %v5485
        %v5487 = vpop.f32.mrb[0].mxu0
        %v5488 = vpop.f32.mrb[0].mxu0
        %v5489 = vadd.f32 %v5448, %v5488
        %v5490 = vpop.f32.mrb[0].mxu0
        %5491 = vdwg.mxu0
        %5492 = vmatprep.subr.bf16.mxu0 0
        %5493 = vmatpush1.bf16.msra.mxu0 %v5111
        %5494 = vmatprep.subr.bf16.mxu0 0
        %5495 = vmatpush1.bf16.msra.mxu0 %v5112
        %5496 = vmatprep.subr.bf16.mxu0 0
        %5497 = vmatpush1.bf16.msra.mxu0 %v5113
        %5498 = vmatprep.subr.bf16.mxu0 0
        %5499 = vmatpush1.bf16.msra.mxu0 %v5114
        %5500 = vmatprep.subr.bf16.mxu0 0
        %5501 = vmatpush1.bf16.msra.mxu0 %v5115
        %5502 = vmatprep.subr.bf16.mxu0 0
        %5503 = vmatpush1.bf16.msra.mxu0 %v5116
        %5504 = vmatprep.subr.bf16.mxu0 0
        %5505 = vmatpush1.bf16.msra.mxu0 %v5117
        %5506 = vmatprep.subr.bf16.mxu0 0
        %5507 = vmatpush1.bf16.msra.mxu0 %v5118
        %5508 = vmatprep.subr.bf16.mxu0 0
        %5509 = vmatpush1.bf16.msra.mxu0 %v5119
        %5510 = vmatprep.subr.bf16.mxu0 0
        %5511 = vmatpush1.bf16.msra.mxu0 %v5120
        %5512 = vmatprep.subr.bf16.mxu0 0
        %5513 = vmatpush1.bf16.msra.mxu0 %v5121
        %5514 = vmatprep.subr.bf16.mxu0 0
        %5515 = vmatpush1.bf16.msra.mxu0 %v5122
        %5516 = vmatprep.subr.bf16.mxu0 0
        %5517 = vmatpush1.bf16.msra.mxu0 %v5123
        %5518 = vmatprep.subr.bf16.mxu0 0
        %5519 = vmatpush1.bf16.msra.mxu0 %v5124
        %5520 = vmatprep.subr.bf16.mxu0 0
        %5521 = vmatpush1.bf16.msra.mxu0 %v5125
        %5522 = vmatprep.subr.bf16.mxu0 0
        %5523 = vmatpush1.bf16.msra.mxu0 %v5126
        %5524 = vmatprep.mubr.bf16.mxu0 %v4251
        %5525 = vmatmul.mubr.bf16.gmra.mrb[0].mxu0 %v4250
        %v5526 = vpop.f32.mrb[0].mxu0
        %v5527 = vadd.f32 %v5486, %v5526
        %v5528 = vpop.f32.mrb[0].mxu0
        %v5529 = vpop.f32.mrb[0].mxu0
        %v5530 = vadd.f32 %v5489, %v5529
        %v5531 = vpop.f32.mrb[0].mxu0
        %5532 = vdwg.mxu0
        %5533 = vmatprep.subr.bf16.mxu0 0
        %5534 = vmatpush1.bf16.msra.mxu0 %v5127
        %5535 = vmatprep.subr.bf16.mxu0 0
        %5536 = vmatpush1.bf16.msra.mxu0 %v5128
        %5537 = vmatprep.subr.bf16.mxu0 0
        %5538 = vmatpush1.bf16.msra.mxu0 %v5129
        %5539 = vmatprep.subr.bf16.mxu0 0
        %5540 = vmatpush1.bf16.msra.mxu0 %v5130
        %5541 = vmatprep.subr.bf16.mxu0 0
        %5542 = vmatpush1.bf16.msra.mxu0 %v5131
        %5543 = vmatprep.subr.bf16.mxu0 0
        %5544 = vmatpush1.bf16.msra.mxu0 %v5132
        %5545 = vmatprep.subr.bf16.mxu0 0
        %5546 = vmatpush1.bf16.msra.mxu0 %v5133
        %5547 = vmatprep.subr.bf16.mxu0 0
        %5548 = vmatpush1.bf16.msra.mxu0 %v5134
        %5549 = vmatprep.subr.bf16.mxu0 0
        %5550 = vmatpush1.bf16.msra.mxu0 %v5135
        %5551 = vmatprep.subr.bf16.mxu0 0
        %5552 = vmatpush1.bf16.msra.mxu0 %v5136
        %5553 = vmatprep.subr.bf16.mxu0 0
        %5554 = vmatpush1.bf16.msra.mxu0 %v5137
        %5555 = vmatprep.subr.bf16.mxu0 0
        %5556 = vmatpush1.bf16.msra.mxu0 %v5138
        %5557 = vmatprep.subr.bf16.mxu0 0
        %5558 = vmatpush1.bf16.msra.mxu0 %v5139
        %5559 = vmatprep.subr.bf16.mxu0 0
        %5560 = vmatpush1.bf16.msra.mxu0 %v5140
        %5561 = vmatprep.subr.bf16.mxu0 0
        %5562 = vmatpush1.bf16.msra.mxu0 %v5141
        %5563 = vmatprep.subr.bf16.mxu0 0
        %5564 = vmatpush1.bf16.msra.mxu0 %v5142
        %5565 = vmatprep.mubr.bf16.mxu0 %v4253
        %5566 = vmatmul.mubr.bf16.gmra.mrb[0].mxu0 %v4252
        %v5567 = vpop.f32.mrb[0].mxu0
        %v5568 = vadd.f32 %v5527, %v5567
        %v5569 = vpop.f32.mrb[0].mxu0
        %v5570 = vpop.f32.mrb[0].mxu0
        %v5571 = vadd.f32 %v5530, %v5570
        %v5572 = vpop.f32.mrb[0].mxu0
        %5573 = vdwg.mxu0
        %5574 = vmatprep.subr.bf16.mxu0 0
        %5575 = vmatpush1.bf16.msra.mxu0 %v5143
        %5576 = vmatprep.subr.bf16.mxu0 0
        %5577 = vmatpush1.bf16.msra.mxu0 %v5144
        %5578 = vmatprep.subr.bf16.mxu0 0
        %5579 = vmatpush1.bf16.msra.mxu0 %v5145
        %5580 = vmatprep.subr.bf16.mxu0 0
        %5581 = vmatpush1.bf16.msra.mxu0 %v5146
        %5582 = vmatprep.subr.bf16.mxu0 0
        %5583 = vmatpush1.bf16.msra.mxu0 %v5147
        %5584 = vmatprep.subr.bf16.mxu0 0
        %5585 = vmatpush1.bf16.msra.mxu0 %v5148
        %5586 = vmatprep.subr.bf16.mxu0 0
        %5587 = vmatpush1.bf16.msra.mxu0 %v5149
        %5588 = vmatprep.subr.bf16.mxu0 0
        %5589 = vmatpush1.bf16.msra.mxu0 %v5150
        %5590 = vmatprep.subr.bf16.mxu0 0
        %5591 = vmatpush1.bf16.msra.mxu0 %v5151
        %5592 = vmatprep.subr.bf16.mxu0 0
        %5593 = vmatpush1.bf16.msra.mxu0 %v5152
        %5594 = vmatprep.subr.bf16.mxu0 0
        %5595 = vmatpush1.bf16.msra.mxu0 %v5153
        %5596 = vmatprep.subr.bf16.mxu0 0
        %5597 = vmatpush1.bf16.msra.mxu0 %v5154
        %5598 = vmatprep.subr.bf16.mxu0 0
        %5599 = vmatpush1.bf16.msra.mxu0 %v5155
        %5600 = vmatprep.subr.bf16.mxu0 0
        %5601 = vmatpush1.bf16.msra.mxu0 %v5156
        %5602 = vmatprep.subr.bf16.mxu0 0
        %5603 = vmatpush1.bf16.msra.mxu0 %v5157
        %5604 = vmatprep.subr.bf16.mxu0 0
        %5605 = vmatpush1.bf16.msra.mxu0 %v5158
        %5606 = vmatprep.mubr.bf16.mxu0 %v4255
        %5607 = vmatmul.mubr.bf16.gmra.mrb[0].mxu0 %v4254
        %v5608 = vpop.f32.mrb[0].mxu0
        %v5609 = vadd.f32 %v5568, %v5608
        %v5610 = vpop.f32.mrb[0].mxu0
        %v5611 = vpop.f32.mrb[0].mxu0
        %v5612 = vadd.f32 %v5571, %v5611
        %v5613 = vpop.f32.mrb[0].mxu0
        %5614 = vdwg.mxu0
        %v5615 = vadd.f32 %v3009, %v5609
        %v5616 = vadd.f32 %v3010, %v5612
        %v5617 = vld [vmem:[%s13] sm:$0x1]
        %v5618 = vld [vmem:[%s14] sm:$0x1]
        %5619 = vadd.xlane.f32.xlu0 %v5615
        %v5620 = vpop.xlane.xlu0 %5619
        %5621 = vadd.xlane.f32.xlu0 %v5616
        %v5622 = vpop.xlane.xlu0 %5621
        %v5623 = vmul.f32 %v5620, %v2976
        %v5624 = vmul.f32 %v5622, %v2976
        %v5625 = vsub.f32 %v5615, %v5623
        %v5626 = vsub.f32 %v5616, %v5624
        %v5627 = vmul.f32 %v5625, %v5625
        %v5628 = vmul.f32 %v5626, %v5626
        %5629 = vadd.xlane.f32.xlu0 %v5627
        %v5630 = vpop.xlane.xlu0 %5629
        %5631 = vadd.xlane.f32.xlu0 %v5628
        %v5632 = vpop.xlane.xlu0 %5631
        %v5633 = vmul.f32 %v5630, %v2976
        %v5634 = vmul.f32 %v5632, %v2976
        %v5635 = vadd.f32 %v5633, 1e-05
        %v5636 = vadd.f32 %v5634, 1e-05
        %v5637 = vrsqrt.pop %v5635
        %v5638 = vrsqrt.pop %v5636
        %v5639 = vmul.f32 %v5625, %v5637
        %v5640 = vmul.f32 %v5626, %v5638
        %v5642 = vlaneseq
        %v5643 = vshrl.u32 %v5642, 7
        %v5644 = vsub.s32 0, %v5643
        %v5645 = vrot.slane %v5617, %v5644
        %v5647 = vmul.f32 %v5639, %v5645
        %v5648 = vmul.f32 %v5640, %v5645
        %v5650 = vlaneseq
        %v5651 = vshrl.u32 %v5650, 7
        %v5652 = vsub.s32 0, %v5651
        %v5653 = vrot.slane %v5618, %v5652
        %v5655 = vadd.f32 %v5647, %v5653
        %v5656 = vadd.f32 %v5648, %v5653
        %v5657 = vsel %vm714, %v710, 4294967295
        %v5658 = vsel %vm715, %v710, 4294967295
        %v5659 = vrot.slane %v5657, 4
        %vm5660 = vcmp.gt.s32.totalorder %v5657, %v5659
        %v5661 = vsel %vm5660, %v5657, %v5659
        %v5662 = vrot.slane %v5661, 2
        %vm5663 = vcmp.gt.s32.totalorder %v5661, %v5662
        %v5664 = vsel %vm5663, %v5661, %v5662
        %v5665 = vrot.slane %v5664, 1
        %vm5666 = vcmp.gt.s32.totalorder %v5664, %v5665
        %v5667 = vsel %vm5666, %v5664, %v5665
        %v5668 = vrot.slane %v5658, 4
        %vm5669 = vcmp.gt.s32.totalorder %v5658, %v5668
        %v5670 = vsel %vm5669, %v5658, %v5668
        %v5671 = vrot.slane %v5670, 2
        %vm5672 = vcmp.gt.s32.totalorder %v5670, %v5671
        %v5673 = vsel %vm5672, %v5670, %v5671
        %v5674 = vrot.slane %v5673, 1
        %vm5675 = vcmp.gt.s32.totalorder %v5673, %v5674
        %v5676 = vsel %vm5675, %v5673, %v5674
        %vm5677 = vcmp.eq.s32.totalorder %v710, %v5667
        %vm5678 = vcmp.eq.s32.totalorder %v710, %v5676
        %v5679 = vsel %vm5677, 1, 0
        %v5680 = vsel %vm5678, 1, 0
        %v5681 = vcvt.s32.f32 %v5679
        %v5682 = vcvt.s32.f32 %v5680
        %v5683 = vmul.f32 %v5655, %v5681
        %v5684 = vmul.f32 %v5656, %v5682
        %v5685 = vrot.slane %v5683, 4
        %v5686 = vadd.f32 %v5683, %v5685
        %v5687 = vrot.slane %v5686, 2
        %v5688 = vadd.f32 %v5686, %v5687
        %v5689 = vrot.slane %v5688, 1
        %v5690 = vadd.f32 %v5688, %v5689
        %v5691 = vrot.slane %v5684, 4
        %v5692 = vadd.f32 %v5684, %v5691
        %v5693 = vrot.slane %v5692, 2
        %v5694 = vadd.f32 %v5692, %v5693
        %v5695 = vrot.slane %v5694, 1
        %v5696 = vadd.f32 %v5694, %v5695
        %v5697 = vpack.c.bf16 %v5690, %v5690
        %v5698 = vpack.c.bf16 %v5696, %v5696
        %v5699 = vld [vmem:[%s15] sm:$0xf]
        %v5700 = vld [vmem:[%s15 + $0x4] sm:$0xf]
        %v5701 = vld [vmem:[%s15 + $0x8] sm:$0xf]
        %v5702 = vld [vmem:[%s15 + $0xc] sm:$0xf]
        %v5703 = vld [vmem:[%s15 + $0x10] sm:$0xf]
        %v5704 = vld [vmem:[%s15 + $0x14] sm:$0xf]
        %v5705 = vld [vmem:[%s15 + $0x18] sm:$0xf]
        %v5706 = vld [vmem:[%s15 + $0x1c] sm:$0xf]
        %v5707 = vld [vmem:[%s15 + $0x20] sm:$0xf]
        %v5708 = vld [vmem:[%s15 + $0x24] sm:$0xf]
        %v5709 = vld [vmem:[%s15 + $0x28] sm:$0xf]
        %v5710 = vld [vmem:[%s15 + $0x2c] sm:$0xf]
        %v5711 = vld [vmem:[%s15 + $0x30] sm:$0xf]
        %v5712 = vld [vmem:[%s15 + $0x34] sm:$0xf]
        %v5713 = vld [vmem:[%s15 + $0x38] sm:$0xf]
        %v5714 = vld [vmem:[%s15 + $0x3c] sm:$0xf]
        %v5715 = vld [vmem:[%s16] sm:$0x1]
        %v5717 = vlaneseq
        %v5718 = vshrl.u32 %v5717, 7
        %v5719 = vsub.s32 0, %v5718
        %v5720 = vrot.slane %v5715, %v5719
        %v5724 = vunpack.c.l.b16 %v5697
        %v5725 = vunpack.c.l.b16 %v5698
        %v5726 = vsel %vm994, %v5725, %v5724
        %v5727 = vpack.c.b16 %v5726, %v5726
        %v5745 = vunpack.c.l.b16 %v5699
        %v5746 = vunpack.c.l.b16 %v5700
        %v5747 = vunpack.c.l.b16 %v5701
        %v5748 = vunpack.c.l.b16 %v5702
        %v5749 = vunpack.c.l.b16 %v5703
        %v5750 = vunpack.c.l.b16 %v5704
        %v5751 = vunpack.c.l.b16 %v5705
        %v5752 = vunpack.c.l.b16 %v5706
        %v5753 = vunpack.c.l.b16 %v5707
        %v5754 = vunpack.c.l.b16 %v5708
        %v5755 = vunpack.c.l.b16 %v5709
        %v5756 = vunpack.c.l.b16 %v5710
        %v5757 = vunpack.c.l.b16 %v5711
        %v5758 = vunpack.c.l.b16 %v5712
        %v5759 = vunpack.c.l.b16 %v5713
        %v5760 = vunpack.c.l.b16 %v5714
        %v5761 = vpack.c.b16 %v5746, %v5745
        %v5762 = vpack.c.b16 %v5748, %v5747
        %v5763 = vpack.c.b16 %v5750, %v5749
        %v5764 = vpack.c.b16 %v5752, %v5751
        %v5765 = vpack.c.b16 %v5754, %v5753
        %v5766 = vpack.c.b16 %v5756, %v5755
        %v5767 = vpack.c.b16 %v5758, %v5757
        %v5768 = vpack.c.b16 %v5760, %v5759
        %5777 = vmatprep.subr.bf16.mxu0 0
        %5778 = vmatpush1.bf16.msra.mxu0 %v5761
        %5779 = vmatprep.subr.bf16.mxu0 0
        %5780 = vmatpush1.bf16.msra.mxu0 %v5762
        %5781 = vmatprep.subr.bf16.mxu0 0
        %5782 = vmatpush1.bf16.msra.mxu0 %v5763
        %5783 = vmatprep.subr.bf16.mxu0 0
        %5784 = vmatpush1.bf16.msra.mxu0 %v5764
        %5785 = vmatprep.subr.bf16.mxu0 0
        %5786 = vmatpush1.bf16.msra.mxu0 %v5765
        %5787 = vmatprep.subr.bf16.mxu0 0
        %5788 = vmatpush1.bf16.msra.mxu0 %v5766
        %5789 = vmatprep.subr.bf16.mxu0 0
        %5790 = vmatpush1.bf16.msra.mxu0 %v5767
        %5791 = vmatprep.subr.bf16.mxu0 0
        %5792 = vmatpush1.bf16.msra.mxu0 %v5768
        %5793 = vmatprep.subr.bf16.mxu0 0
        %5794 = vmatpush1.bf16.msra.mxu0 0
        %5795 = vmatprep.subr.bf16.mxu0 0
        %5796 = vmatpush1.bf16.msra.mxu0 0
        %5797 = vmatprep.subr.bf16.mxu0 0
        %5798 = vmatpush1.bf16.msra.mxu0 0
        %5799 = vmatprep.subr.bf16.mxu0 0
        %5800 = vmatpush1.bf16.msra.mxu0 0
        %5801 = vmatprep.subr.bf16.mxu0 0
        %5802 = vmatpush1.bf16.msra.mxu0 0
        %5803 = vmatprep.subr.bf16.mxu0 0
        %5804 = vmatpush1.bf16.msra.mxu0 0
        %5805 = vmatprep.subr.bf16.mxu0 0
        %5806 = vmatpush1.bf16.msra.mxu0 0
        %5807 = vmatprep.subr.bf16.mxu0 0
        %5808 = vmatpush1.bf16.msra.mxu0 0
        %5809 = vmatprep.mubr.bf16.mxu0 0
        %5810 = vmatmul.mubr.bf16.gmra.mrb[0].mxu0 %v5727
        %v5811 = vpop.f32.mrb[0].mxu0
        %v5812 = vadd.f32 %v5720, %v5811
        %v5813 = vpop.f32.mrb[0].mxu0
        %v5814 = vpop.f32.mrb[0].mxu0
        %v5815 = vpop.f32.mrb[0].mxu0
        %5816 = vdwg.mxu0
        %v5819 = vunpack.c.l.s4 1966171168
        %v5820 = vunpack.c.0.s8 %v5819
        %v5821 = vlaneseq
        %v5822 = vshrl.u32 %v5821, 7
        %v5823 = vsub.s32 %v5820, %v5822
        %v5824 = vrot.slane %v5812, %v5823
        %v5825 = vcombine.high %v5824, %v5824
        %v5827 = vunpack.c.l.s4 1966171168
        %v5828 = vunpack.c.0.s8 %v5827
        %v5829 = vlaneseq
        %v5830 = vshrl.u32 %v5829, 7
        %v5831 = vsub.s32 %v5828, %v5830
        %v5832 = vrot.slane %v5824, %v5831
        %v5834 = vunpack.c.l.s4 1966171168
        %v5835 = vunpack.c.0.s8 %v5834
        %v5836 = vlaneseq
        %v5837 = vshrl.u32 %v5836, 7
        %v5838 = vsub.s32 %v5835, %v5837
        %v5839 = vrot.slane %v5825, %v5838
        %vm5842 = vcmask 57344
        %5843 = vst.msk [vmem:[%s624] sm:$0x1] %vm5842, %v5832
        %5844 = vst.msk [vmem:[%s624 + $0x1] sm:$0x1] %vm5842, %v5839
        %s5845 = sand.u32 %s406, 1
        %s5846 = scalar_lea.sflag [#allocation4], %s5845
        %s5847 = sand.u32 %s406, 1
        %s5848 = smul.addr %s5847, 2
        %s5849 = scalar_lea.vmem [#allocation11], %s5848
        // Predicated region
        $region109: #{tpu_custom_call.1} parent=87 // pred_check
          %p5850 = pneg %p416
        $region110: #{tpu_custom_call.1} parent=87 // pred_check_branch
          %5852 = sbr.rel (%p5850) target = $region112
        $region111: #{tpu_custom_call.1} parent=87 // pred_region
          %s5853 = smul.u32 2, %s36
          %s5855 = ssub.s32 32, 32
          %5856 = vsyncadd %s5846, %s5855
          %s5857 = smul.addr %s5853, 16
          %s5858 = scalar_lea.hbm %s17, %s5857
          %s5859 = sshll.u32 %s5849, 4
          %s5860 = int_to_ptr.vmem [resolvable:$true] %s5859
          %5865 = dma.vmem_to_hbm [thread:$0]  %s5860, 32, %s5858, %s5846, 16, 16, 1
        $region112: #{tpu_custom_call.1} parent=87 // pred_fallthru
          _
      $region88: #{tpu_custom_call.1} parent=5 // pred_fallthru
        _
      %p5866 = scmp.le.s32.totalorder 2, %s31
      // Predicated region
      $region113: #{tpu_custom_call.1} parent=5 // pred_check
        %p5867 = pneg %p5866
      $region114: #{tpu_custom_call.1} parent=5 // pred_check_branch
        %5869 = sbr.rel (%p5867) target = $region116
      $region115: #{tpu_custom_call.1} parent=5 // pred_region
        %s5870 = ssub.s32 %s31, 2
        // Predicated region
        $region117: #{tpu_custom_call.1} parent=115 // pred_check
          %p5871 = pneg %p422
        $region118: #{tpu_custom_call.1} parent=115 // pred_check_branch
          %5873 = sbr.rel (%p5871) target = $region120
        $region119: #{tpu_custom_call.1} parent=115 // pred_region
          %s5874 = sand.u32 %s407, 1
          %s5875 = scalar_lea.sflag [#allocation4], %s5874
          %s5876 = sand.u32 %s407, 1
          %s5877 = smul.addr %s5876, 2
          %s5878 = scalar_lea.vmem [#allocation11], %s5877
          %5879 = dma.done %s5875, 32
        $region120: #{tpu_custom_call.1} parent=115 // pred_fallthru
          _
      $region116: #{tpu_custom_call.1} parent=5 // pred_fallthru
        _
    $region6: #{tpu_custom_call.1} parent=1 // loop_footer
      %s35 = sadd.s32 1, %s31
    $region7: #{tpu_custom_call.1} parent=1 // loop_footer_branch
      %30 = sbr.rel target = $region3
    $region8: #{tpu_custom_call.1} parent=1 // loop_exit
      _
    %5880 = vsyncpa [#allocation3], 1
    %s5881 = scalar_lea.sflag [#allocation3], 1
    %5882 = vsyncpa %s5881, 1
    %5883 = vsyncpa [#allocation6], 1
    %5884 = vsyncpa [#allocation9], 1
    %5885 = vsyncpa [#allocation4], 1
    %s5886 = scalar_lea.sflag [#allocation4], 1
    %5887 = vsyncpa %s5886, 1

</llo_original>
